<compile_context>
chip_gen: v7x
topology: tpu7x:2x2x1
jax: 0.10.0
libtpu: 0.0.40
codegen_flags: <defaults>
</compile_context>

<pallas_src>
import functools

import jax
import jax.numpy as jnp
from jax.experimental import pallas as pl
from jax.experimental.pallas import tpu as pltpu

LN_EPS = 1e-5  # nn.LayerNorm default


# --------------------------------------------------------------------------
# small math helpers (run inside the kernel)
# --------------------------------------------------------------------------
def _layernorm(x, w, b):
    mu = jnp.mean(x, axis=-1, keepdims=True)
    var = jnp.mean((x - mu) ** 2, axis=-1, keepdims=True)
    return (x - mu) * jax.lax.rsqrt(var + LN_EPS) * w + b


def _gelu_tanh(x):
    # TODO(synk): OpenCLIP's nn.GELU is the exact erf form; the tanh
    # approximation is used here (erf lowering on Mosaic not relied upon).
    c = 0.7978845608028654  # sqrt(2/pi)
    return 0.5 * x * (1.0 + jnp.tanh(c * (x + 0.044715 * x * x * x)))


# --------------------------------------------------------------------------
# transformer stack kernel: one grid step = (batch tile, layer)
# --------------------------------------------------------------------------
def _stack_kernel(n_heads,
                  x_ref,
                  ln1w_ref, ln1b_ref,
                  wqkv_ref, bqkv_ref, wo_ref, bo_ref,
                  ln2w_ref, ln2b_ref,
                  w1_ref, b1_ref, w2_ref, b2_ref,
                  out_ref):
    """out_ref holds the resident (TB, S, D) activation across the layer axis."""
    layer = pl.program_id(1)

    # Layer 0: seed the resident activation block with the embedded input.
    # (x's index_map depends only on the batch-tile id, so it is DMA'd once
    #  per batch tile, not once per layer.)
    @pl.when(layer == 0)
    def _():
        out_ref[...] = x_ref[...]

    xt = out_ref[...]                      # (TB, S, D) f32, resident
    TB, S, D = xt.shape
    H = n_heads
    Dh = D // H
    x = xt.reshape(TB * S, D)              # flatten batch tile for the big matmuls

    # Causal mask built in-kernel (CLIP's attn_mask: -inf strictly above diag).
    rows = jax.lax.broadcasted_iota(jnp.int32, (S, S), 0)
    cols = jax.lax.broadcasted_iota(jnp.int32, (S, S), 1)
    mask = jnp.where(cols > rows, -1e9, 0.0).astype(jnp.float32)     # (S, S)

    # ---------------- multi-head self attention (pre-norm) ----------------
    h = _layernorm(x, ln1w_ref[...], ln1b_ref[...]).astype(jnp.bfloat16)
    qkv = jnp.dot(h, wqkv_ref[...],
                  preferred_element_type=jnp.float32) + bqkv_ref[...]   # (TB*S, 3D)

    def split_heads(col_off):
        # (TB*S, 3D) column range -> (H*TB, S, Dh), head-major along leading axis.
        parts = [qkv[:, col_off + i * Dh: col_off + (i + 1) * Dh].reshape(TB, S, Dh)
                 for i in range(H)]
        return jnp.stack(parts, axis=0).reshape(H * TB, S, Dh).astype(jnp.bfloat16)

    qh = split_heads(0)            # 1/sqrt(Dh) already folded into Q projection
    kh = split_heads(D)
    vh = split_heads(2 * D)

    s = jnp.einsum('hqd,hkd->hqk', qh, kh,
                   preferred_element_type=jnp.float32)        # (H*TB, S, S) f32
    s = s + mask[None, :, :]
    s = s - jnp.max(s, axis=-1, keepdims=True)
    p = jnp.exp(s)
    p = p * pl.reciprocal(jnp.sum(p, axis=-1, keepdims=True), approx=True)

    ctx = jnp.einsum('hqk,hkd->hqd', p.astype(jnp.bfloat16), vh,
                     preferred_element_type=jnp.float32)      # (H*TB, S, Dh)
    ctx = ctx.reshape(H, TB, S, Dh)
    ctx = jnp.concatenate([ctx[i] for i in range(H)], axis=-1)   # (TB, S, D)
    ctx = ctx.reshape(TB * S, D)

    attn = jnp.dot(ctx.astype(jnp.bfloat16), wo_ref[...],
                   preferred_element_type=jnp.float32) + bo_ref[...]
    x = x + attn

    # ------------------------------- MLP ----------------------------------
    h2 = _layernorm(x, ln2w_ref[...], ln2b_ref[...]).astype(jnp.bfloat16)
    m = jnp.dot(h2, w1_ref[...],
                preferred_element_type=jnp.float32) + b1_ref[...]
    m = _gelu_tanh(m)              # f32 (safe on v5e; bf16 only helps once compute-bound)
    m = jnp.dot(m.astype(jnp.bfloat16), w2_ref[...],
                preferred_element_type=jnp.float32) + b2_ref[...]

    out_ref[...] = (x + m).reshape(TB, S, D)


def _final_kernel(x_ref, lnw_ref, lnb_ref, proj_ref, out_ref):
    """ln_final on the gathered EOT rows followed by text_projection."""
    y = _layernorm(x_ref[...], lnw_ref[...], lnb_ref[...])
    out_ref[...] = jnp.dot(y.astype(proj_ref.dtype), proj_ref[...],
                           preferred_element_type=jnp.float32)


_VMEM_SPEC = pl.BlockSpec(memory_space=pltpu.MemorySpace.VMEM)


# --------------------------------------------------------------------------
# generation-aware sizing helpers
# --------------------------------------------------------------------------
def _vmem_limit_bytes():
    cap = 128 * 1024 * 1024
    try:
        cap = int(pltpu.get_tpu_info().vmem_capacity_bytes)
    except Exception:
        pass
    # ~25% headroom for compiler scratch; v7x (64 MiB) -> 48 MiB, v5e/v6e -> 96 MiB.
    return min(cap * 3 // 4, 96 * 1024 * 1024)


def _pick_batch_tile(B, target=None):
    """Largest divisor of B not exceeding the per-generation target tile."""
    if target is None:
        target = 8                     # v5e/v6e: plenty of VMEM, feed the MXU
        try:
            if int(pltpu.get_tpu_info().vmem_capacity_bytes) <= 64 * 1024 * 1024:
                target = 4             # v7x: 64 MiB VMEM, 2 TCs share HBM
        except Exception:
            pass
    tb = max(1, min(target, B))
    while B % tb:
        tb -= 1
    return tb


# --------------------------------------------------------------------------
# wrappers
# --------------------------------------------------------------------------
def transformer_stack(x, w, n_heads, batch_tile=None):
    """All L residual attention blocks in a single gridded pallas_call."""
    B, S, D = x.shape
    L = w["wqkv"].shape[0]
    F = w["w1"].shape[-1]
    TB = _pick_batch_tile(B) if batch_tile is None else batch_tile
    assert B % TB == 0, "batch tile must divide the batch size"

    def wspec(*dims):
        nd = len(dims)
        return pl.BlockSpec((None,) + dims,
                            lambda b, l, _n=nd: (l,) + (0,) * _n)

    act_spec = pl.BlockSpec((TB, S, D), lambda b, l: (b, 0, 0))

    return pl.pallas_call(
        functools.partial(_stack_kernel, n_heads),
        out_shape=jax.ShapeDtypeStruct((B, S, D), jnp.float32),
        grid=(B // TB, L),
        in_specs=[
            act_spec,                                  # embedded input (seed)
            wspec(1, D), wspec(1, D),                  # ln1 w/b
            wspec(D, 3 * D), wspec(1, 3 * D),          # fused qkv w/b
            wspec(D, D), wspec(1, D),                  # out proj w/b
            wspec(1, D), wspec(1, D),                  # ln2 w/b
            wspec(D, F), wspec(1, F),                  # mlp fc w/b
            wspec(F, D), wspec(1, D),                  # mlp proj w/b
        ],
        out_specs=act_spec,                            # resident across layers
        compiler_params=pltpu.CompilerParams(
            dimension_semantics=("parallel", "arbitrary"),
            vmem_limit_bytes=_vmem_limit_bytes(),
        ),
    )(x,
      w["ln1_w"], w["ln1_b"],
      w["wqkv"], w["bqkv"], w["wo"], w["bo"],
      w["ln2_w"], w["ln2_b"],
      w["w1"], w["b1"], w["w2"], w["b2"])


def final_projection(x_eot, ln_w, ln_b, proj):
    B = x_eot.shape[0]
    P = proj.shape[1]
    return pl.pallas_call(
        _final_kernel,
        out_shape=jax.ShapeDtypeStruct((B, P), jnp.float32),
        in_specs=[_VMEM_SPEC] * 4,
        out_specs=_VMEM_SPEC,
    )(x_eot, ln_w, ln_b, proj)


def prepare_weights(raw, n_heads):
    """Stack per-layer params into (L, ...) arrays, fuse QKV, fold the attention
    scale into the Q projection, and cast matmul weights to bf16."""
    D = raw["layers"][0]["wq"].shape[0]
    Dh = D // n_heads
    scale = 1.0 / float(Dh) ** 0.5

    def stack(key):
        return jnp.stack([l[key] for l in raw["layers"]], axis=0)

    wqkv = jnp.concatenate([stack("wq") * scale, stack("wk"), stack("wv")],
                           axis=-1)                                  # (L, D, 3D)
    bqkv = jnp.concatenate([stack("bq") * scale, stack("bk"), stack("bv")],
                           axis=-1)                                  # (L, 1, 3D)

    return dict(
        token_embedding=raw["token_embedding"],
        positional_embedding=raw["positional_embedding"],
        ln_final_w=raw["ln_final_w"], ln_final_b=raw["ln_final_b"],
        text_projection=raw["text_projection"].astype(jnp.bfloat16),
        wqkv=wqkv.astype(jnp.bfloat16), bqkv=bqkv,
        wo=stack("wo").astype(jnp.bfloat16), bo=stack("bo"),
        ln1_w=stack("ln1_w"), ln1_b=stack("ln1_b"),
        ln2_w=stack("ln2_w"), ln2_b=stack("ln2_b"),
        w1=stack("w1").astype(jnp.bfloat16), b1=stack("b1"),
        w2=stack("w2").astype(jnp.bfloat16), b2=stack("b2"),
    )


def open_clip_textual_forward(text, w, n_heads, batch_tile=None):
    """Mirrors OpenClip_Textual.forward (batch-first; the permute pair is a no-op).
    The causal attn_mask is generated inside the kernel (CLIP's mask is causal)."""
    # x = token_embedding(text) + positional_embedding
    x = (w["token_embedding"][text] + w["positional_embedding"][None]).astype(jnp.float32)

    # transformer(x, attn_mask) — one pallas_call over the whole layer stack
    x = transformer_stack(x, w, n_heads, batch_tile=batch_tile)

    # x = ln_final(x); x = x[arange(B), text.argmax(-1)] @ text_projection
    # (LayerNorm is row-wise, so applying it only to the gathered rows is exact.)
    eot = jnp.argmax(text.astype(jnp.float32), axis=-1)
    x_eot = x[jnp.arange(x.shape[0]), eot]
    return final_projection(x_eot, w["ln_final_w"], w["ln_final_b"],
                            w["text_projection"])


if __name__ == "__main__":
    # batch, ctx, width, heads, layers, vocab, proj — small but exercises TB>1
    B, S, D, H, L, V, P = 4, 8, 32, 4, 2, 64, 16

    key = jax.random.PRNGKey(0)
    keys = iter(jax.random.split(key, 64))

    def nrm(shape, scale=0.02):
        return scale * jax.random.normal(next(keys), shape, jnp.float32)

    layers = []
    for _ in range(L):
        layers.append(dict(
            ln1_w=jnp.ones((1, D), jnp.float32), ln1_b=jnp.zeros((1, D), jnp.float32),
            wq=nrm((D, D)), bq=jnp.zeros((1, D), jnp.float32),
            wk=nrm((D, D)), bk=jnp.zeros((1, D), jnp.float32),
            wv=nrm((D, D)), bv=jnp.zeros((1, D), jnp.float32),
            wo=nrm((D, D)), bo=jnp.zeros((1, D), jnp.float32),
            ln2_w=jnp.ones((1, D), jnp.float32), ln2_b=jnp.zeros((1, D), jnp.float32),
            w1=nrm((D, 4 * D)), b1=jnp.zeros((1, 4 * D), jnp.float32),
            w2=nrm((4 * D, D)), b2=jnp.zeros((1, D), jnp.float32),
        ))

    raw_weights = dict(
        token_embedding=nrm((V, D)),
        positional_embedding=nrm((S, D)),
        text_projection=nrm((D, P)),
        ln_final_w=jnp.ones((1, D), jnp.float32),
        ln_final_b=jnp.zeros((1, D), jnp.float32),
        layers=layers,
    )
    weights = prepare_weights(raw_weights, H)

    # deterministic "tokenized text": ids in [1, V-2], EOT (= V-1, the argmax) per row
    text = jax.random.randint(next(keys), (B, S), 1, V - 1, dtype=jnp.int32)
    eot_pos = jnp.array([5, S - 1, 3, 6], dtype=jnp.int32)
    text = text.at[jnp.arange(B), eot_pos].set(V - 1)

    out = open_clip_textual_forward(text, weights, H)
    jax.block_until_ready(out)
    assert out.shape == (B, P) and out.dtype == jnp.float32
    print("KERNEL_OK")
</pallas_src>

<mosaic_0001>
module attributes {stable_mosaic.version = 11 : i64} {
  func.func @_stack_kernel(%arg0: i32, %arg1: i32, %arg2: memref<4x8x32xf32, #tpu.memory_space<vmem>>, %arg3: memref<1x1x32xf32, #tpu.memory_space<vmem>>, %arg4: memref<1x1x32xf32, #tpu.memory_space<vmem>>, %arg5: memref<1x32x96xbf16, #tpu.memory_space<vmem>>, %arg6: memref<1x1x96xf32, #tpu.memory_space<vmem>>, %arg7: memref<1x32x32xbf16, #tpu.memory_space<vmem>>, %arg8: memref<1x1x32xf32, #tpu.memory_space<vmem>>, %arg9: memref<1x1x32xf32, #tpu.memory_space<vmem>>, %arg10: memref<1x1x32xf32, #tpu.memory_space<vmem>>, %arg11: memref<1x32x128xbf16, #tpu.memory_space<vmem>>, %arg12: memref<1x1x128xf32, #tpu.memory_space<vmem>>, %arg13: memref<1x128x32xbf16, #tpu.memory_space<vmem>>, %arg14: memref<1x1x32xf32, #tpu.memory_space<vmem>>, %arg15: memref<4x8x32xf32, #tpu.memory_space<vmem>>) attributes {dimension_semantics = [#tpu.dimension_semantics<parallel>, #tpu.dimension_semantics<arbitrary>], iteration_bounds = array<i64: 1, 2>, scalar_prefetch = 0 : i64, scratch_operands = 0 : i64, tpu.core_type = #tpu.core_type<tc>, window_params = [{transform_indices = @transform_0, window_bounds = array<i64: 4, 8, 32>}, {transform_indices = @transform_1, window_bounds = array<i64: 1, 1, 32>}, {transform_indices = @transform_2, window_bounds = array<i64: 1, 1, 32>}, {transform_indices = @transform_3, window_bounds = array<i64: 1, 32, 96>}, {transform_indices = @transform_4, window_bounds = array<i64: 1, 1, 96>}, {transform_indices = @transform_5, window_bounds = array<i64: 1, 32, 32>}, {transform_indices = @transform_6, window_bounds = array<i64: 1, 1, 32>}, {transform_indices = @transform_7, window_bounds = array<i64: 1, 1, 32>}, {transform_indices = @transform_8, window_bounds = array<i64: 1, 1, 32>}, {transform_indices = @transform_9, window_bounds = array<i64: 1, 32, 128>}, {transform_indices = @transform_10, window_bounds = array<i64: 1, 1, 128>}, {transform_indices = @transform_11, window_bounds = array<i64: 1, 128, 32>}, {transform_indices = @transform_12, window_bounds = array<i64: 1, 1, 32>}, {transform_indices = @transform_13, window_bounds = array<i64: 4, 8, 32>}]} {
    %c0_i32 = arith.constant 0 : i32
    %0 = arith.cmpi eq, %arg1, %c0_i32 : i32
    %1 = arith.extui %0 : i1 to i32
    %c0_i32_0 = arith.constant 0 : i32
    %2 = arith.cmpi ne, %1, %c0_i32_0 : i32
    scf.if %2 {
      %c0_65 = arith.constant 0 : index
      %c0_66 = arith.constant 0 : index
      %c0_67 = arith.constant 0 : index
      %184 = vector.load %arg2[%c0_65, %c0_66, %c0_67] : memref<4x8x32xf32, #tpu.memory_space<vmem>>, vector<4x8x32xf32>
      %c0_68 = arith.constant 0 : index
      %c0_69 = arith.constant 0 : index
      %c0_70 = arith.constant 0 : index
      %185 = vector.load %arg15[%c0_68, %c0_69, %c0_70] : memref<4x8x32xf32, #tpu.memory_space<vmem>>, vector<4x8x32xf32>
      tpu.vector_store %arg15[%c0_68, %c0_69, %c0_70], %184 {strides = array<i32>} : memref<4x8x32xf32, #tpu.memory_space<vmem>>, vector<4x8x32xf32>,
    } else {
    }
    %c0 = arith.constant 0 : index
    %c0_1 = arith.constant 0 : index
    %c0_2 = arith.constant 0 : index
    %3 = vector.load %arg15[%c0, %c0_1, %c0_2] : memref<4x8x32xf32, #tpu.memory_space<vmem>>, vector<4x8x32xf32>
    %4 = vector.shape_cast %3 : vector<4x8x32xf32> to vector<32x32xf32>
    %5 = tpu.iota {dimensions = array<i32: 0>} : vector<8x8xi32>
    %6 = tpu.iota {dimensions = array<i32: 1>} : vector<8x8xi32>
    %7 = arith.cmpi sgt, %6, %5 : vector<8x8xi32>
    %cst = arith.constant -1.000000e+09 : f32
    %cst_3 = arith.constant 0.000000e+00 : f32
    %8 = vector.broadcast %cst : f32 to vector<8x8xf32>
    %9 = vector.broadcast %cst_3 : f32 to vector<8x8xf32>
    %10 = arith.select %7, %8, %9 : vector<8x8xi1>, vector<8x8xf32>
    %c0_4 = arith.constant 0 : index
    %c0_5 = arith.constant 0 : index
    %c0_6 = arith.constant 0 : index
    %11 = vector.load %arg3[%c0_4, %c0_5, %c0_6] : memref<1x1x32xf32, #tpu.memory_space<vmem>>, vector<1x1x32xf32>
    %12 = vector.shape_cast %11 : vector<1x1x32xf32> to vector<1x32xf32>
    %c0_7 = arith.constant 0 : index
    %c0_8 = arith.constant 0 : index
    %c0_9 = arith.constant 0 : index
    %13 = vector.load %arg4[%c0_7, %c0_8, %c0_9] : memref<1x1x32xf32, #tpu.memory_space<vmem>>, vector<1x1x32xf32>
    %14 = vector.shape_cast %13 : vector<1x1x32xf32> to vector<1x32xf32>
    %cst_10 = arith.constant dense<0.000000e+00> : vector<32xf32>
    %15 = vector.multi_reduction <add>, %4, %cst_10 [1] : vector<32x32xf32> to vector<32xf32>
    %16 = vector.shape_cast %15 : vector<32xf32> to vector<32x1xf32>
    %cst_11 = arith.constant 3.200000e+01 : f32
    %17 = vector.broadcast %cst_11 : f32 to vector<32x1xf32>
    %18 = arith.divf %16, %17 : vector<32x1xf32>
    %19 = vector.broadcast %18 : vector<32x1xf32> to vector<32x32xf32>
    %20 = arith.subf %4, %19 : vector<32x32xf32>
    %21 = arith.mulf %20, %20 : vector<32x32xf32>
    %cst_12 = arith.constant dense<0.000000e+00> : vector<32xf32>
    %22 = vector.multi_reduction <add>, %21, %cst_12 [1] : vector<32x32xf32> to vector<32xf32>
    %23 = vector.shape_cast %22 : vector<32xf32> to vector<32x1xf32>
    %cst_13 = arith.constant 3.200000e+01 : f32
    %24 = vector.broadcast %cst_13 : f32 to vector<32x1xf32>
    %25 = arith.divf %23, %24 : vector<32x1xf32>
    %26 = vector.broadcast %18 : vector<32x1xf32> to vector<32x32xf32>
    %27 = arith.subf %4, %26 : vector<32x32xf32>
    %cst_14 = arith.constant 9.99999974E-6 : f32
    %28 = vector.broadcast %cst_14 : f32 to vector<32x1xf32>
    %29 = arith.addf %25, %28 : vector<32x1xf32>
    %30 = math.rsqrt %29 : vector<32x1xf32>
    %31 = vector.broadcast %30 : vector<32x1xf32> to vector<32x32xf32>
    %32 = arith.mulf %27, %31 : vector<32x32xf32>
    %33 = vector.broadcast %12 : vector<1x32xf32> to vector<32x32xf32>
    %34 = arith.mulf %32, %33 : vector<32x32xf32>
    %35 = vector.broadcast %14 : vector<1x32xf32> to vector<32x32xf32>
    %36 = arith.addf %34, %35 : vector<32x32xf32>
    %37 = arith.truncf %36 : vector<32x32xf32> to vector<32x32xbf16>
    %c0_15 = arith.constant 0 : index
    %c0_16 = arith.constant 0 : index
    %c0_17 = arith.constant 0 : index
    %38 = vector.load %arg5[%c0_15, %c0_16, %c0_17] : memref<1x32x96xbf16, #tpu.memory_space<vmem>>, vector<1x32x96xbf16>
    %39 = vector.shape_cast %38 : vector<1x32x96xbf16> to vector<32x96xbf16>
    %cst_18 = arith.constant dense<0.000000e+00> : vector<32x96xf32>
    %40 = tpu.matmul %37, %39, %cst_18 {dimension_numbers = #tpu.dot_dimension_numbers<[1], [0], [0], [1], [0, 0, 1, 1], [], []>} : vector<32x32xbf16>, vector<32x96xbf16>, vector<32x96xf32> -> vector<32x96xf32>
    %c0_19 = arith.constant 0 : index
    %c0_20 = arith.constant 0 : index
    %c0_21 = arith.constant 0 : index
    %41 = vector.load %arg6[%c0_19, %c0_20, %c0_21] : memref<1x1x96xf32, #tpu.memory_space<vmem>>, vector<1x1x96xf32>
    %42 = vector.shape_cast %41 : vector<1x1x96xf32> to vector<1x96xf32>
    %43 = vector.broadcast %42 : vector<1x96xf32> to vector<32x96xf32>
    %44 = arith.addf %40, %43 : vector<32x96xf32>
    %45 = vector.extract_strided_slice %44 {offsets = [0, 0], sizes = [32, 8], strides = [1, 1]} : vector<32x96xf32> to vector<32x8xf32>
    %46 = vector.shape_cast %45 : vector<32x8xf32> to vector<4x8x8xf32>
    %47 = vector.extract_strided_slice %44 {offsets = [0, 8], sizes = [32, 8], strides = [1, 1]} : vector<32x96xf32> to vector<32x8xf32>
    %48 = vector.shape_cast %47 : vector<32x8xf32> to vector<4x8x8xf32>
    %49 = vector.extract_strided_slice %44 {offsets = [0, 16], sizes = [32, 8], strides = [1, 1]} : vector<32x96xf32> to vector<32x8xf32>
    %50 = vector.shape_cast %49 : vector<32x8xf32> to vector<4x8x8xf32>
    %51 = vector.extract_strided_slice %44 {offsets = [0, 24], sizes = [32, 8], strides = [1, 1]} : vector<32x96xf32> to vector<32x8xf32>
    %52 = vector.shape_cast %51 : vector<32x8xf32> to vector<4x8x8xf32>
    %53 = vector.shape_cast %46 : vector<4x8x8xf32> to vector<1x4x8x8xf32>
    %54 = vector.shape_cast %48 : vector<4x8x8xf32> to vector<1x4x8x8xf32>
    %55 = vector.shape_cast %50 : vector<4x8x8xf32> to vector<1x4x8x8xf32>
    %56 = vector.shape_cast %52 : vector<4x8x8xf32> to vector<1x4x8x8xf32>
    %57 = tpu.concatenate %53, %54, %55, %56 in 0 : vector<1x4x8x8xf32>, vector<1x4x8x8xf32>, vector<1x4x8x8xf32>, vector<1x4x8x8xf32> -> vector<4x4x8x8xf32>
    %58 = vector.shape_cast %57 : vector<4x4x8x8xf32> to vector<16x8x8xf32>
    %59 = arith.truncf %58 : vector<16x8x8xf32> to vector<16x8x8xbf16>
    %60 = vector.extract_strided_slice %44 {offsets = [0, 32], sizes = [32, 8], strides = [1, 1]} : vector<32x96xf32> to vector<32x8xf32>
    %61 = vector.shape_cast %60 : vector<32x8xf32> to vector<4x8x8xf32>
    %62 = vector.extract_strided_slice %44 {offsets = [0, 40], sizes = [32, 8], strides = [1, 1]} : vector<32x96xf32> to vector<32x8xf32>
    %63 = vector.shape_cast %62 : vector<32x8xf32> to vector<4x8x8xf32>
    %64 = vector.extract_strided_slice %44 {offsets = [0, 48], sizes = [32, 8], strides = [1, 1]} : vector<32x96xf32> to vector<32x8xf32>
    %65 = vector.shape_cast %64 : vector<32x8xf32> to vector<4x8x8xf32>
    %66 = vector.extract_strided_slice %44 {offsets = [0, 56], sizes = [32, 8], strides = [1, 1]} : vector<32x96xf32> to vector<32x8xf32>
    %67 = vector.shape_cast %66 : vector<32x8xf32> to vector<4x8x8xf32>
    %68 = vector.shape_cast %61 : vector<4x8x8xf32> to vector<1x4x8x8xf32>
    %69 = vector.shape_cast %63 : vector<4x8x8xf32> to vector<1x4x8x8xf32>
    %70 = vector.shape_cast %65 : vector<4x8x8xf32> to vector<1x4x8x8xf32>
    %71 = vector.shape_cast %67 : vector<4x8x8xf32> to vector<1x4x8x8xf32>
    %72 = tpu.concatenate %68, %69, %70, %71 in 0 : vector<1x4x8x8xf32>, vector<1x4x8x8xf32>, vector<1x4x8x8xf32>, vector<1x4x8x8xf32> -> vector<4x4x8x8xf32>
    %73 = vector.shape_cast %72 : vector<4x4x8x8xf32> to vector<16x8x8xf32>
    %74 = arith.truncf %73 : vector<16x8x8xf32> to vector<16x8x8xbf16>
    %75 = vector.extract_strided_slice %44 {offsets = [0, 64], sizes = [32, 8], strides = [1, 1]} : vector<32x96xf32> to vector<32x8xf32>
    %76 = vector.shape_cast %75 : vector<32x8xf32> to vector<4x8x8xf32>
    %77 = vector.extract_strided_slice %44 {offsets = [0, 72], sizes = [32, 8], strides = [1, 1]} : vector<32x96xf32> to vector<32x8xf32>
    %78 = vector.shape_cast %77 : vector<32x8xf32> to vector<4x8x8xf32>
    %79 = vector.extract_strided_slice %44 {offsets = [0, 80], sizes = [32, 8], strides = [1, 1]} : vector<32x96xf32> to vector<32x8xf32>
    %80 = vector.shape_cast %79 : vector<32x8xf32> to vector<4x8x8xf32>
    %81 = vector.extract_strided_slice %44 {offsets = [0, 88], sizes = [32, 8], strides = [1, 1]} : vector<32x96xf32> to vector<32x8xf32>
    %82 = vector.shape_cast %81 : vector<32x8xf32> to vector<4x8x8xf32>
    %83 = vector.shape_cast %76 : vector<4x8x8xf32> to vector<1x4x8x8xf32>
    %84 = vector.shape_cast %78 : vector<4x8x8xf32> to vector<1x4x8x8xf32>
    %85 = vector.shape_cast %80 : vector<4x8x8xf32> to vector<1x4x8x8xf32>
    %86 = vector.shape_cast %82 : vector<4x8x8xf32> to vector<1x4x8x8xf32>
    %87 = tpu.concatenate %83, %84, %85, %86 in 0 : vector<1x4x8x8xf32>, vector<1x4x8x8xf32>, vector<1x4x8x8xf32>, vector<1x4x8x8xf32> -> vector<4x4x8x8xf32>
    %88 = vector.shape_cast %87 : vector<4x4x8x8xf32> to vector<16x8x8xf32>
    %89 = arith.truncf %88 : vector<16x8x8xf32> to vector<16x8x8xbf16>
    "tpu.trace_start"() <{level = 10 : i32, message = "hqd,hkd->hqk"}> : () -> ()
    %cst_22 = arith.constant dense<0.000000e+00> : vector<16x8x8xf32>
    %90 = tpu.matmul %59, %74, %cst_22 {dimension_numbers = #tpu.dot_dimension_numbers<[2], [2], [1], [1], [0, 0, 0, 1, 1, 1], [0], [0]>} : vector<16x8x8xbf16>, vector<16x8x8xbf16>, vector<16x8x8xf32> -> vector<16x8x8xf32>
    "tpu.trace_stop"() : () -> ()
    %91 = vector.shape_cast %10 : vector<8x8xf32> to vector<1x8x8xf32>
    %92 = vector.broadcast %91 : vector<1x8x8xf32> to vector<16x8x8xf32>
    %93 = arith.addf %90, %92 : vector<16x8x8xf32>
    %cst_23 = arith.constant dense<0xFF800000> : vector<16x8xf32>
    %94 = vector.multi_reduction <maximumf>, %93, %cst_23 [2] : vector<16x8x8xf32> to vector<16x8xf32>
    %95 = vector.shape_cast %94 : vector<16x8xf32> to vector<16x8x1xf32>
    %96 = vector.broadcast %95 : vector<16x8x1xf32> to vector<16x8x8xf32>
    %97 = arith.subf %93, %96 : vector<16x8x8xf32>
    %98 = math.exp %97 : vector<16x8x8xf32>
    %cst_24 = arith.constant dense<0.000000e+00> : vector<16x8xf32>
    %99 = vector.multi_reduction <add>, %98, %cst_24 [2] : vector<16x8x8xf32> to vector<16x8xf32>
    %100 = vector.shape_cast %99 : vector<16x8xf32> to vector<16x8x1xf32>
    %101 = tpu.reciprocal %100 {approx = true} : vector<16x8x1xf32> -> vector<16x8x1xf32>
    %102 = vector.broadcast %101 : vector<16x8x1xf32> to vector<16x8x8xf32>
    %103 = arith.mulf %98, %102 : vector<16x8x8xf32>
    %104 = arith.truncf %103 : vector<16x8x8xf32> to vector<16x8x8xbf16>
    "tpu.trace_start"() <{level = 10 : i32, message = "hqk,hkd->hqd"}> : () -> ()
    %cst_25 = arith.constant dense<0.000000e+00> : vector<16x8x8xf32>
    %105 = tpu.matmul %104, %89, %cst_25 {dimension_numbers = #tpu.dot_dimension_numbers<[2], [1], [1], [2], [0, 0, 0, 1, 1, 2], [0], [0]>} : vector<16x8x8xbf16>, vector<16x8x8xbf16>, vector<16x8x8xf32> -> vector<16x8x8xf32>
    "tpu.trace_stop"() : () -> ()
    %106 = vector.shape_cast %105 : vector<16x8x8xf32> to vector<4x4x8x8xf32>
    %107 = vector.extract_strided_slice %106 {offsets = [0, 0, 0, 0], sizes = [1, 4, 8, 8], strides = [1, 1, 1, 1]} : vector<4x4x8x8xf32> to vector<1x4x8x8xf32>
    %108 = vector.shape_cast %107 : vector<1x4x8x8xf32> to vector<4x8x8xf32>
    %109 = vector.extract_strided_slice %106 {offsets = [1, 0, 0, 0], sizes = [1, 4, 8, 8], strides = [1, 1, 1, 1]} : vector<4x4x8x8xf32> to vector<1x4x8x8xf32>
    %110 = vector.shape_cast %109 : vector<1x4x8x8xf32> to vector<4x8x8xf32>
    %111 = vector.extract_strided_slice %106 {offsets = [2, 0, 0, 0], sizes = [1, 4, 8, 8], strides = [1, 1, 1, 1]} : vector<4x4x8x8xf32> to vector<1x4x8x8xf32>
    %112 = vector.shape_cast %111 : vector<1x4x8x8xf32> to vector<4x8x8xf32>
    %113 = vector.extract_strided_slice %106 {offsets = [3, 0, 0, 0], sizes = [1, 4, 8, 8], strides = [1, 1, 1, 1]} : vector<4x4x8x8xf32> to vector<1x4x8x8xf32>
    %114 = vector.shape_cast %113 : vector<1x4x8x8xf32> to vector<4x8x8xf32>
    %115 = tpu.concatenate %108, %110, %112, %114 in 2 : vector<4x8x8xf32>, vector<4x8x8xf32>, vector<4x8x8xf32>, vector<4x8x8xf32> -> vector<4x8x32xf32>
    %116 = vector.shape_cast %115 : vector<4x8x32xf32> to vector<32x32xf32>
    %117 = arith.truncf %116 : vector<32x32xf32> to vector<32x32xbf16>
    %c0_26 = arith.constant 0 : index
    %c0_27 = arith.constant 0 : index
    %c0_28 = arith.constant 0 : index
    %118 = vector.load %arg7[%c0_26, %c0_27, %c0_28] : memref<1x32x32xbf16, #tpu.memory_space<vmem>>, vector<1x32x32xbf16>
    %119 = vector.shape_cast %118 : vector<1x32x32xbf16> to vector<32x32xbf16>
    %cst_29 = arith.constant dense<0.000000e+00> : vector<32x32xf32>
    %120 = tpu.matmul %117, %119, %cst_29 {dimension_numbers = #tpu.dot_dimension_numbers<[1], [0], [0], [1], [0, 0, 1, 1], [], []>} : vector<32x32xbf16>, vector<32x32xbf16>, vector<32x32xf32> -> vector<32x32xf32>
    %c0_30 = arith.constant 0 : index
    %c0_31 = arith.constant 0 : index
    %c0_32 = arith.constant 0 : index
    %121 = vector.load %arg8[%c0_30, %c0_31, %c0_32] : memref<1x1x32xf32, #tpu.memory_space<vmem>>, vector<1x1x32xf32>
    %122 = vector.shape_cast %121 : vector<1x1x32xf32> to vector<1x32xf32>
    %123 = vector.broadcast %122 : vector<1x32xf32> to vector<32x32xf32>
    %124 = arith.addf %120, %123 : vector<32x32xf32>
    %125 = arith.addf %4, %124 : vector<32x32xf32>
    %c0_33 = arith.constant 0 : index
    %c0_34 = arith.constant 0 : index
    %c0_35 = arith.constant 0 : index
    %126 = vector.load %arg9[%c0_33, %c0_34, %c0_35] : memref<1x1x32xf32, #tpu.memory_space<vmem>>, vector<1x1x32xf32>
    %127 = vector.shape_cast %126 : vector<1x1x32xf32> to vector<1x32xf32>
    %c0_36 = arith.constant 0 : index
    %c0_37 = arith.constant 0 : index
    %c0_38 = arith.constant 0 : index
    %128 = vector.load %arg10[%c0_36, %c0_37, %c0_38] : memref<1x1x32xf32, #tpu.memory_space<vmem>>, vector<1x1x32xf32>
    %129 = vector.shape_cast %128 : vector<1x1x32xf32> to vector<1x32xf32>
    %cst_39 = arith.constant dense<0.000000e+00> : vector<32xf32>
    %130 = vector.multi_reduction <add>, %125, %cst_39 [1] : vector<32x32xf32> to vector<32xf32>
    %131 = vector.shape_cast %130 : vector<32xf32> to vector<32x1xf32>
    %cst_40 = arith.constant 3.200000e+01 : f32
    %132 = vector.broadcast %cst_40 : f32 to vector<32x1xf32>
    %133 = arith.divf %131, %132 : vector<32x1xf32>
    %134 = vector.broadcast %133 : vector<32x1xf32> to vector<32x32xf32>
    %135 = arith.subf %125, %134 : vector<32x32xf32>
    %136 = arith.mulf %135, %135 : vector<32x32xf32>
    %cst_41 = arith.constant dense<0.000000e+00> : vector<32xf32>
    %137 = vector.multi_reduction <add>, %136, %cst_41 [1] : vector<32x32xf32> to vector<32xf32>
    %138 = vector.shape_cast %137 : vector<32xf32> to vector<32x1xf32>
    %cst_42 = arith.constant 3.200000e+01 : f32
    %139 = vector.broadcast %cst_42 : f32 to vector<32x1xf32>
    %140 = arith.divf %138, %139 : vector<32x1xf32>
    %141 = vector.broadcast %133 : vector<32x1xf32> to vector<32x32xf32>
    %142 = arith.subf %125, %141 : vector<32x32xf32>
    %cst_43 = arith.constant 9.99999974E-6 : f32
    %143 = vector.broadcast %cst_43 : f32 to vector<32x1xf32>
    %144 = arith.addf %140, %143 : vector<32x1xf32>
    %145 = math.rsqrt %144 : vector<32x1xf32>
    %146 = vector.broadcast %145 : vector<32x1xf32> to vector<32x32xf32>
    %147 = arith.mulf %142, %146 : vector<32x32xf32>
    %148 = vector.broadcast %127 : vector<1x32xf32> to vector<32x32xf32>
    %149 = arith.mulf %147, %148 : vector<32x32xf32>
    %150 = vector.broadcast %129 : vector<1x32xf32> to vector<32x32xf32>
    %151 = arith.addf %149, %150 : vector<32x32xf32>
    %152 = arith.truncf %151 : vector<32x32xf32> to vector<32x32xbf16>
    %c0_44 = arith.constant 0 : index
    %c0_45 = arith.constant 0 : index
    %c0_46 = arith.constant 0 : index
    %153 = vector.load %arg11[%c0_44, %c0_45, %c0_46] : memref<1x32x128xbf16, #tpu.memory_space<vmem>>, vector<1x32x128xbf16>
    %154 = vector.shape_cast %153 : vector<1x32x128xbf16> to vector<32x128xbf16>
    %cst_47 = arith.constant dense<0.000000e+00> : vector<32x128xf32>
    %155 = tpu.matmul %152, %154, %cst_47 {dimension_numbers = #tpu.dot_dimension_numbers<[1], [0], [0], [1], [0, 0, 1, 1], [], []>} : vector<32x32xbf16>, vector<32x128xbf16>, vector<32x128xf32> -> vector<32x128xf32>
    %c0_48 = arith.constant 0 : index
    %c0_49 = arith.constant 0 : index
    %c0_50 = arith.constant 0 : index
    %156 = vector.load %arg12[%c0_48, %c0_49, %c0_50] : memref<1x1x128xf32, #tpu.memory_space<vmem>>, vector<1x1x128xf32>
    %157 = vector.shape_cast %156 : vector<1x1x128xf32> to vector<1x128xf32>
    %158 = vector.broadcast %157 : vector<1x128xf32> to vector<32x128xf32>
    %159 = arith.addf %155, %158 : vector<32x128xf32>
    %cst_51 = arith.constant 5.000000e-01 : f32
    %160 = vector.broadcast %cst_51 : f32 to vector<32x128xf32>
    %161 = arith.mulf %160, %159 : vector<32x128xf32>
    %cst_52 = arith.constant 4.471500e-02 : f32
    %162 = vector.broadcast %cst_52 : f32 to vector<32x128xf32>
    %163 = arith.mulf %162, %159 : vector<32x128xf32>
    %164 = arith.mulf %163, %159 : vector<32x128xf32>
    %165 = arith.mulf %164, %159 : vector<32x128xf32>
    %166 = arith.addf %159, %165 : vector<32x128xf32>
    %cst_53 = arith.constant 0.797884583 : f32
    %167 = vector.broadcast %cst_53 : f32 to vector<32x128xf32>
    %168 = arith.mulf %167, %166 : vector<32x128xf32>
    %169 = math.tanh %168 : vector<32x128xf32>
    %cst_54 = arith.constant 1.000000e+00 : f32
    %170 = vector.broadcast %cst_54 : f32 to vector<32x128xf32>
    %171 = arith.addf %170, %169 : vector<32x128xf32>
    %172 = arith.mulf %161, %171 : vector<32x128xf32>
    %173 = arith.truncf %172 : vector<32x128xf32> to vector<32x128xbf16>
    %c0_55 = arith.constant 0 : index
    %c0_56 = arith.constant 0 : index
    %c0_57 = arith.constant 0 : index
    %174 = vector.load %arg13[%c0_55, %c0_56, %c0_57] : memref<1x128x32xbf16, #tpu.memory_space<vmem>>, vector<1x128x32xbf16>
    %175 = vector.shape_cast %174 : vector<1x128x32xbf16> to vector<128x32xbf16>
    %cst_58 = arith.constant dense<0.000000e+00> : vector<32x32xf32>
    %176 = tpu.matmul %173, %175, %cst_58 {dimension_numbers = #tpu.dot_dimension_numbers<[1], [0], [0], [1], [0, 0, 1, 1], [], []>} : vector<32x128xbf16>, vector<128x32xbf16>, vector<32x32xf32> -> vector<32x32xf32>
    %c0_59 = arith.constant 0 : index
    %c0_60 = arith.constant 0 : index
    %c0_61 = arith.constant 0 : index
    %177 = vector.load %arg14[%c0_59, %c0_60, %c0_61] : memref<1x1x32xf32, #tpu.memory_space<vmem>>, vector<1x1x32xf32>
    %178 = vector.shape_cast %177 : vector<1x1x32xf32> to vector<1x32xf32>
    %179 = vector.broadcast %178 : vector<1x32xf32> to vector<32x32xf32>
    %180 = arith.addf %176, %179 : vector<32x32xf32>
    %181 = arith.addf %125, %180 : vector<32x32xf32>
    %182 = vector.shape_cast %181 : vector<32x32xf32> to vector<4x8x32xf32>
    %c0_62 = arith.constant 0 : index
    %c0_63 = arith.constant 0 : index
    %c0_64 = arith.constant 0 : index
    %183 = vector.load %arg15[%c0_62, %c0_63, %c0_64] : memref<4x8x32xf32, #tpu.memory_space<vmem>>, vector<4x8x32xf32>
    tpu.vector_store %arg15[%c0_62, %c0_63, %c0_64], %182 {strides = array<i32>} : memref<4x8x32xf32, #tpu.memory_space<vmem>>, vector<4x8x32xf32>,
    return
  }
  func.func @transform_0(%arg0: i32, %arg1: i32) -> (i32, i32, i32) {
    %c0_i32 = arith.constant 0 : i32
    %c0_i32_0 = arith.constant 0 : i32
    %c0_i32_1 = arith.constant 0 : i32
    return %arg0, %c0_i32, %c0_i32_0 : i32, i32, i32
  }
  func.func @transform_1(%arg0: i32, %arg1: i32) -> (i32, i32, i32) {
    %c0_i32 = arith.constant 0 : i32
    %c0_i32_0 = arith.constant 0 : i32
    %c0_i32_1 = arith.constant 0 : i32
    return %arg1, %c0_i32, %c0_i32_0 : i32, i32, i32
  }
  func.func @transform_2(%arg0: i32, %arg1: i32) -> (i32, i32, i32) {
    %c0_i32 = arith.constant 0 : i32
    %c0_i32_0 = arith.constant 0 : i32
    %c0_i32_1 = arith.constant 0 : i32
    return %arg1, %c0_i32, %c0_i32_0 : i32, i32, i32
  }
  func.func @transform_3(%arg0: i32, %arg1: i32) -> (i32, i32, i32) {
    %c0_i32 = arith.constant 0 : i32
    %c0_i32_0 = arith.constant 0 : i32
    %c0_i32_1 = arith.constant 0 : i32
    return %arg1, %c0_i32, %c0_i32_0 : i32, i32, i32
  }
  func.func @transform_4(%arg0: i32, %arg1: i32) -> (i32, i32, i32) {
    %c0_i32 = arith.constant 0 : i32
    %c0_i32_0 = arith.constant 0 : i32
    %c0_i32_1 = arith.constant 0 : i32
    return %arg1, %c0_i32, %c0_i32_0 : i32, i32, i32
  }
  func.func @transform_5(%arg0: i32, %arg1: i32) -> (i32, i32, i32) {
    %c0_i32 = arith.constant 0 : i32
    %c0_i32_0 = arith.constant 0 : i32
    %c0_i32_1 = arith.constant 0 : i32
    return %arg1, %c0_i32, %c0_i32_0 : i32, i32, i32
  }
  func.func @transform_6(%arg0: i32, %arg1: i32) -> (i32, i32, i32) {
    %c0_i32 = arith.constant 0 : i32
    %c0_i32_0 = arith.constant 0 : i32
    %c0_i32_1 = arith.constant 0 : i32
    return %arg1, %c0_i32, %c0_i32_0 : i32, i32, i32
  }
  func.func @transform_7(%arg0: i32, %arg1: i32) -> (i32, i32, i32) {
    %c0_i32 = arith.constant 0 : i32
    %c0_i32_0 = arith.constant 0 : i32
    %c0_i32_1 = arith.constant 0 : i32
    return %arg1, %c0_i32, %c0_i32_0 : i32, i32, i32
  }
  func.func @transform_8(%arg0: i32, %arg1: i32) -> (i32, i32, i32) {
    %c0_i32 = arith.constant 0 : i32
    %c0_i32_0 = arith.constant 0 : i32
    %c0_i32_1 = arith.constant 0 : i32
    return %arg1, %c0_i32, %c0_i32_0 : i32, i32, i32
  }
  func.func @transform_9(%arg0: i32, %arg1: i32) -> (i32, i32, i32) {
    %c0_i32 = arith.constant 0 : i32
    %c0_i32_0 = arith.constant 0 : i32
    %c0_i32_1 = arith.constant 0 : i32
    return %arg1, %c0_i32, %c0_i32_0 : i32, i32, i32
  }
  func.func @transform_10(%arg0: i32, %arg1: i32) -> (i32, i32, i32) {
    %c0_i32 = arith.constant 0 : i32
    %c0_i32_0 = arith.constant 0 : i32
    %c0_i32_1 = arith.constant 0 : i32
    return %arg1, %c0_i32, %c0_i32_0 : i32, i32, i32
  }
  func.func @transform_11(%arg0: i32, %arg1: i32) -> (i32, i32, i32) {
    %c0_i32 = arith.constant 0 : i32
    %c0_i32_0 = arith.constant 0 : i32
    %c0_i32_1 = arith.constant 0 : i32
    return %arg1, %c0_i32, %c0_i32_0 : i32, i32, i32
  }
  func.func @transform_12(%arg0: i32, %arg1: i32) -> (i32, i32, i32) {
    %c0_i32 = arith.constant 0 : i32
    %c0_i32_0 = arith.constant 0 : i32
    %c0_i32_1 = arith.constant 0 : i32
    return %arg1, %c0_i32, %c0_i32_0 : i32, i32, i32
  }
  func.func @transform_13(%arg0: i32, %arg1: i32) -> (i32, i32, i32) {
    %c0_i32 = arith.constant 0 : i32
    %c0_i32_0 = arith.constant 0 : i32
    %c0_i32_1 = arith.constant 0 : i32
    return %arg0, %c0_i32, %c0_i32_0 : i32, i32, i32
  }
}

</mosaic_0001>

<llo_original>
// kernel: tpu_custom_call.1
$region0: #{tpu_custom_call.1}
  #allocation0 [shape = 'u32[]', space=smem, size = 0x4, offset = 0x4, fixed_abs, tag = 'smem constant byte address 0x4 - core index']
  #allocation1 [shape = 'u32[144,128]{1,0:T(1,128)}', space=vmem, size = 0x12000, scoped, tag = 'internal scratch']
  %s0 = inlined_call_operand.hbm [shape: f32[4,8,32], index: 0, kind: input, shape index: {}]
  %s1 = inlined_call_operand.hbm [shape: f32[2,1,32], index: 1, kind: input, shape index: {}]
  %s2 = inlined_call_operand.hbm [shape: f32[2,1,32], index: 2, kind: input, shape index: {}]
  %s3 = inlined_call_operand.hbm [shape: bf16[2,32,96], index: 3, kind: input, shape index: {}]
  %s4 = inlined_call_operand.hbm [shape: f32[2,1,96], index: 4, kind: input, shape index: {}]
  %s5 = inlined_call_operand.hbm [shape: bf16[2,32,32], index: 5, kind: input, shape index: {}]
  %s6 = inlined_call_operand.hbm [shape: f32[2,1,32], index: 6, kind: input, shape index: {}]
  %s7 = inlined_call_operand.hbm [shape: f32[2,1,32], index: 7, kind: input, shape index: {}]
  %s8 = inlined_call_operand.hbm [shape: f32[2,1,32], index: 8, kind: input, shape index: {}]
  %s9 = inlined_call_operand.hbm [shape: bf16[2,32,128], index: 9, kind: input, shape index: {}]
  %s10 = inlined_call_operand.hbm [shape: f32[2,1,128], index: 10, kind: input, shape index: {}]
  %s11 = inlined_call_operand.hbm [shape: bf16[2,128,32], index: 11, kind: input, shape index: {}]
  %s12 = inlined_call_operand.hbm [shape: f32[2,1,32], index: 12, kind: input, shape index: {}]
  %s13 = inlined_call_operand.hbm [shape: f32[4,8,32], index: 13, kind: output, shape index: {}]
  %s14 = sld [smem:[#allocation0]]
  $region141: #{tpu_custom_call.1} parent=0
    _
  %s16 = ssub.s32 1, %s14
  %s17 = scalar_select 0, %s16, %s14
  $region1: #{tpu_custom_call.1} parent=0
    #allocation2 [shape = 'u8[16384]{0}', space=vmem, size = 0x4000, scoped, tag = 'input window, operand 0, single buffered']
    #allocation3 [shape = 's32[2]{0}', space=sflag, size = 0x8, scoped, tag = 'scoped memory for tpu_custom_call.1']
    #allocation4 [shape = 's32[2]{0}', space=sflag, size = 0x8, scoped, tag = 'scoped memory for tpu_custom_call.1']
    #allocation5 [shape = 'u8[1024]{0}', space=vmem, size = 0x400, scoped, tag = 'input window, operand 1']
    #allocation6 [shape = 's32[2]{0}', space=sflag, size = 0x8, scoped, tag = 'scoped memory for tpu_custom_call.1']
    #allocation7 [shape = 'u8[1024]{0}', space=vmem, size = 0x400, scoped, tag = 'input window, operand 2']
    #allocation8 [shape = 'u8[16384]{0}', space=vmem, size = 0x4000, scoped, tag = 'input window, operand 3']
    #allocation9 [shape = 's32[2]{0}', space=sflag, size = 0x8, scoped, tag = 'scoped memory for tpu_custom_call.1']
    #allocation10 [shape = 'u8[1024]{0}', space=vmem, size = 0x400, scoped, tag = 'input window, operand 4']
    #allocation11 [shape = 'u8[16384]{0}', space=vmem, size = 0x4000, scoped, tag = 'input window, operand 5']
    #allocation12 [shape = 's32[2]{0}', space=sflag, size = 0x8, scoped, tag = 'scoped memory for tpu_custom_call.1']
    #allocation13 [shape = 'u8[1024]{0}', space=vmem, size = 0x400, scoped, tag = 'input window, operand 6']
    #allocation14 [shape = 'u8[1024]{0}', space=vmem, size = 0x400, scoped, tag = 'input window, operand 7']
    #allocation15 [shape = 's32[2]{0}', space=sflag, size = 0x8, scoped, tag = 'scoped memory for tpu_custom_call.1']
    #allocation16 [shape = 'u8[1024]{0}', space=vmem, size = 0x400, scoped, tag = 'input window, operand 8']
    #allocation17 [shape = 'u8[16384]{0}', space=vmem, size = 0x4000, scoped, tag = 'input window, operand 9']
    #allocation18 [shape = 's32[2]{0}', space=sflag, size = 0x8, scoped, tag = 'scoped memory for tpu_custom_call.1']
    #allocation19 [shape = 'u8[1024]{0}', space=vmem, size = 0x400, scoped, tag = 'input window, operand 10']
    #allocation20 [shape = 'u8[65536]{0}', space=vmem, size = 0x10000, scoped, tag = 'input window, operand 11']
    #allocation21 [shape = 's32[2]{0}', space=sflag, size = 0x8, scoped, tag = 'scoped memory for tpu_custom_call.1']
    #allocation22 [shape = 'u8[1024]{0}', space=vmem, size = 0x400, scoped, tag = 'input window, operand 12']
    #allocation23 [shape = 'u8[16384]{0}', space=vmem, size = 0x4000, scoped, tag = 'output window, operand 0, single buffered']
    %18 = vsyncpa [#allocation3], 0
    %19 = vsyncpa [#allocation6], 0
    %s20 = scalar_lea.sflag [#allocation6], 1
    %21 = vsyncpa %s20, 0
    %22 = vsyncpa [#allocation9], 0
    %s23 = scalar_lea.sflag [#allocation9], 1
    %24 = vsyncpa %s23, 0
    %25 = vsyncpa [#allocation12], 0
    %s26 = scalar_lea.sflag [#allocation12], 1
    %27 = vsyncpa %s26, 0
    %28 = vsyncpa [#allocation15], 0
    %s29 = scalar_lea.sflag [#allocation15], 1
    %30 = vsyncpa %s29, 0
    %31 = vsyncpa [#allocation18], 0
    %s32 = scalar_lea.sflag [#allocation18], 1
    %33 = vsyncpa %s32, 0
    %34 = vsyncpa [#allocation21], 0
    %s35 = scalar_lea.sflag [#allocation21], 1
    %36 = vsyncpa %s35, 0
    %37 = vsyncpa [#allocation4], 0
    loop: start=0, step=1, limit=4
    $region2: #{tpu_custom_call.1} parent=1 // loop_pre_header
      _
    $region3: #{tpu_custom_call.1} parent=1 // loop_header
      %s39 = sphi 0, %s43
      %p40 = scmp.ge.s32.totalorder %s39, 4
      %s46 = sphi 0, %s58
      %s47 = sphi 0, %s54
      %s48 = sphi 0, %s46
      %s49 = sphi 0, %s47
      %s50 = sphi 0, %s48
      %s51 = sphi 0, %s49
      %s61 = sphi 0, %s63
      %s64 = sphi 0, %s61
      %s65 = sphi 0, %s64
      %s81 = sphi 0, %s65
      %s87 = sphi 0, %s89
      %s90 = sphi 0, %s87
      %s91 = sphi 0, %s90
      %s107 = sphi 0, %s91
      %s113 = sphi 0, %s115
      %s116 = sphi 0, %s113
      %s117 = sphi 0, %s116
      %s133 = sphi 0, %s117
      %s139 = sphi 0, %s141
      %s142 = sphi 0, %s139
      %s143 = sphi 0, %s142
      %s159 = sphi 0, %s143
      %s165 = sphi 0, %s167
      %s168 = sphi 0, %s165
      %s169 = sphi 0, %s168
      %s185 = sphi 0, %s169
      %s191 = sphi 0, %s193
      %s194 = sphi 0, %s191
      %s195 = sphi 0, %s194
      %s211 = sphi 0, %s195
      %s217 = sphi 0, %s219
      %s220 = sphi 0, %s217
      %s221 = sphi 0, %s220
      %s237 = sphi 0, %s221
      %s243 = sphi 0, %s245
      %s246 = sphi 0, %s243
      %s247 = sphi 0, %s246
      %s263 = sphi 0, %s247
      %s269 = sphi 0, %s271
      %s272 = sphi 0, %s269
      %s273 = sphi 0, %s272
      %s289 = sphi 0, %s273
      %s295 = sphi 0, %s297
      %s298 = sphi 0, %s295
      %s299 = sphi 0, %s298
      %s315 = sphi 0, %s299
      %s321 = sphi 0, %s323
      %s324 = sphi 0, %s321
      %s325 = sphi 0, %s324
      %s341 = sphi 0, %s325
      %s347 = sphi 0, %s349
      %s350 = sphi 0, %s347
      %s351 = sphi 0, %s350
      %s367 = sphi 0, %s351
      %s373 = sphi 0, %s375
      %s376 = sphi 0, %s373
      %s377 = sphi 0, %s376
      %s393 = sphi 0, %s377
      %s399 = sphi 0, %s401
      %s402 = sphi 0, %s399
      %s403 = sphi 0, %s402
      %s419 = sphi 0, %s403
    $region4: #{tpu_custom_call.1} parent=1 // loop_header_branch
      %42 = sbr.rel (%p40) target = $region8
    $region5: #{tpu_custom_call.1} parent=1 // loop_body
      %s44 = ssub.s32 %s39, 1
      %s45 = ssub.s32 %s39, 2
      %s52 = sadd.s32 1, %s47
      %p53 = scmp.ge.s32.totalorder %s52, 2
      %s54 = scalar_select %p53, 0, %s52
      %s55 = sadd.s32 1, %s46
      %s56 = scalar_select %p53, %s55, %s46
      %p57 = scmp.ge.s32.totalorder %s56, 1
      %s58 = scalar_select %p57, 0, %s56
      %s59 = ssub.s32 %s46, %s58
      %p60 = scmp.eq.s32.totalorder %s59, 0
      %s62 = sadd.s32 %s61, 1
      %s63 = scalar_select %p60, %s61, %s62
      %p66 = pneg %p60
      %p67 = scmp.eq.s32.totalorder %s39, 1
      %p68 = por %p66, %p67
      %p69 = scmp.ne.s32.totalorder %s61, %s64
      %p70 = scmp.eq.s32.totalorder %s39, 0
      %p71 = por %p69, %p70
      %p72 = scmp.ne.s32.totalorder %s61, %s64
      %p73 = scmp.eq.s32.totalorder %s44, 1
      %p74 = por %p72, %p73
      %p75 = scmp.ne.s32.totalorder %s64, %s65
      %p76 = scmp.eq.s32.totalorder %s44, 0
      %p77 = por %p75, %p76
      %p78 = scmp.ne.s32.totalorder %s64, %s65
      %p79 = scmp.eq.s32.totalorder %s45, 1
      %p80 = por %p78, %p79
      %p82 = scmp.ne.s32.totalorder %s65, %s81
      %p83 = scmp.eq.s32.totalorder %s45, 0
      %p84 = por %p82, %p83
      %s85 = ssub.s32 %s47, %s54
      %p86 = scmp.eq.s32.totalorder %s85, 0
      %s88 = sadd.s32 %s87, 1
      %s89 = scalar_select %p86, %s87, %s88
      %p92 = pneg %p86
      %p93 = scmp.eq.s32.totalorder %s39, 1
      %p94 = por %p92, %p93
      %p95 = scmp.ne.s32.totalorder %s87, %s90
      %p96 = scmp.eq.s32.totalorder %s39, 0
      %p97 = por %p95, %p96
      %p98 = scmp.ne.s32.totalorder %s87, %s90
      %p99 = scmp.eq.s32.totalorder %s44, 1
      %p100 = por %p98, %p99
      %p101 = scmp.ne.s32.totalorder %s90, %s91
      %p102 = scmp.eq.s32.totalorder %s44, 0
      %p103 = por %p101, %p102
      %p104 = scmp.ne.s32.totalorder %s90, %s91
      %p105 = scmp.eq.s32.totalorder %s45, 1
      %p106 = por %p104, %p105
      %p108 = scmp.ne.s32.totalorder %s91, %s107
      %p109 = scmp.eq.s32.totalorder %s45, 0
      %p110 = por %p108, %p109
      %s111 = ssub.s32 %s47, %s54
      %p112 = scmp.eq.s32.totalorder %s111, 0
      %s114 = sadd.s32 %s113, 1
      %s115 = scalar_select %p112, %s113, %s114
      %p118 = pneg %p112
      %p119 = scmp.eq.s32.totalorder %s39, 1
      %p120 = por %p118, %p119
      %p121 = scmp.ne.s32.totalorder %s113, %s116
      %p122 = scmp.eq.s32.totalorder %s39, 0
      %p123 = por %p121, %p122
      %p124 = scmp.ne.s32.totalorder %s113, %s116
      %p125 = scmp.eq.s32.totalorder %s44, 1
      %p126 = por %p124, %p125
      %p127 = scmp.ne.s32.totalorder %s116, %s117
      %p128 = scmp.eq.s32.totalorder %s44, 0
      %p129 = por %p127, %p128
      %p130 = scmp.ne.s32.totalorder %s116, %s117
      %p131 = scmp.eq.s32.totalorder %s45, 1
      %p132 = por %p130, %p131
      %p134 = scmp.ne.s32.totalorder %s117, %s133
      %p135 = scmp.eq.s32.totalorder %s45, 0
      %p136 = por %p134, %p135
      %s137 = ssub.s32 %s47, %s54
      %p138 = scmp.eq.s32.totalorder %s137, 0
      %s140 = sadd.s32 %s139, 1
      %s141 = scalar_select %p138, %s139, %s140
      %p144 = pneg %p138
      %p145 = scmp.eq.s32.totalorder %s39, 1
      %p146 = por %p144, %p145
      %p147 = scmp.ne.s32.totalorder %s139, %s142
      %p148 = scmp.eq.s32.totalorder %s39, 0
      %p149 = por %p147, %p148
      %p150 = scmp.ne.s32.totalorder %s139, %s142
      %p151 = scmp.eq.s32.totalorder %s44, 1
      %p152 = por %p150, %p151
      %p153 = scmp.ne.s32.totalorder %s142, %s143
      %p154 = scmp.eq.s32.totalorder %s44, 0
      %p155 = por %p153, %p154
      %p156 = scmp.ne.s32.totalorder %s142, %s143
      %p157 = scmp.eq.s32.totalorder %s45, 1
      %p158 = por %p156, %p157
      %p160 = scmp.ne.s32.totalorder %s143, %s159
      %p161 = scmp.eq.s32.totalorder %s45, 0
      %p162 = por %p160, %p161
      %s163 = ssub.s32 %s47, %s54
      %p164 = scmp.eq.s32.totalorder %s163, 0
      %s166 = sadd.s32 %s165, 1
      %s167 = scalar_select %p164, %s165, %s166
      %p170 = pneg %p164
      %p171 = scmp.eq.s32.totalorder %s39, 1
      %p172 = por %p170, %p171
      %p173 = scmp.ne.s32.totalorder %s165, %s168
      %p174 = scmp.eq.s32.totalorder %s39, 0
      %p175 = por %p173, %p174
      %p176 = scmp.ne.s32.totalorder %s165, %s168
      %p177 = scmp.eq.s32.totalorder %s44, 1
      %p178 = por %p176, %p177
      %p179 = scmp.ne.s32.totalorder %s168, %s169
      %p180 = scmp.eq.s32.totalorder %s44, 0
      %p181 = por %p179, %p180
      %p182 = scmp.ne.s32.totalorder %s168, %s169
      %p183 = scmp.eq.s32.totalorder %s45, 1
      %p184 = por %p182, %p183
      %p186 = scmp.ne.s32.totalorder %s169, %s185
      %p187 = scmp.eq.s32.totalorder %s45, 0
      %p188 = por %p186, %p187
      %s189 = ssub.s32 %s47, %s54
      %p190 = scmp.eq.s32.totalorder %s189, 0
      %s192 = sadd.s32 %s191, 1
      %s193 = scalar_select %p190, %s191, %s192
      %p196 = pneg %p190
      %p197 = scmp.eq.s32.totalorder %s39, 1
      %p198 = por %p196, %p197
      %p199 = scmp.ne.s32.totalorder %s191, %s194
      %p200 = scmp.eq.s32.totalorder %s39, 0
      %p201 = por %p199, %p200
      %p202 = scmp.ne.s32.totalorder %s191, %s194
      %p203 = scmp.eq.s32.totalorder %s44, 1
      %p204 = por %p202, %p203
      %p205 = scmp.ne.s32.totalorder %s194, %s195
      %p206 = scmp.eq.s32.totalorder %s44, 0
      %p207 = por %p205, %p206
      %p208 = scmp.ne.s32.totalorder %s194, %s195
      %p209 = scmp.eq.s32.totalorder %s45, 1
      %p210 = por %p208, %p209
      %p212 = scmp.ne.s32.totalorder %s195, %s211
      %p213 = scmp.eq.s32.totalorder %s45, 0
      %p214 = por %p212, %p213
      %s215 = ssub.s32 %s47, %s54
      %p216 = scmp.eq.s32.totalorder %s215, 0
      %s218 = sadd.s32 %s217, 1
      %s219 = scalar_select %p216, %s217, %s218
      %p222 = pneg %p216
      %p223 = scmp.eq.s32.totalorder %s39, 1
      %p224 = por %p222, %p223
      %p225 = scmp.ne.s32.totalorder %s217, %s220
      %p226 = scmp.eq.s32.totalorder %s39, 0
      %p227 = por %p225, %p226
      %p228 = scmp.ne.s32.totalorder %s217, %s220
      %p229 = scmp.eq.s32.totalorder %s44, 1
      %p230 = por %p228, %p229
      %p231 = scmp.ne.s32.totalorder %s220, %s221
      %p232 = scmp.eq.s32.totalorder %s44, 0
      %p233 = por %p231, %p232
      %p234 = scmp.ne.s32.totalorder %s220, %s221
      %p235 = scmp.eq.s32.totalorder %s45, 1
      %p236 = por %p234, %p235
      %p238 = scmp.ne.s32.totalorder %s221, %s237
      %p239 = scmp.eq.s32.totalorder %s45, 0
      %p240 = por %p238, %p239
      %s241 = ssub.s32 %s47, %s54
      %p242 = scmp.eq.s32.totalorder %s241, 0
      %s244 = sadd.s32 %s243, 1
      %s245 = scalar_select %p242, %s243, %s244
      %p248 = pneg %p242
      %p249 = scmp.eq.s32.totalorder %s39, 1
      %p250 = por %p248, %p249
      %p251 = scmp.ne.s32.totalorder %s243, %s246
      %p252 = scmp.eq.s32.totalorder %s39, 0
      %p253 = por %p251, %p252
      %p254 = scmp.ne.s32.totalorder %s243, %s246
      %p255 = scmp.eq.s32.totalorder %s44, 1
      %p256 = por %p254, %p255
      %p257 = scmp.ne.s32.totalorder %s246, %s247
      %p258 = scmp.eq.s32.totalorder %s44, 0
      %p259 = por %p257, %p258
      %p260 = scmp.ne.s32.totalorder %s246, %s247
      %p261 = scmp.eq.s32.totalorder %s45, 1
      %p262 = por %p260, %p261
      %p264 = scmp.ne.s32.totalorder %s247, %s263
      %p265 = scmp.eq.s32.totalorder %s45, 0
      %p266 = por %p264, %p265
      %s267 = ssub.s32 %s47, %s54
      %p268 = scmp.eq.s32.totalorder %s267, 0
      %s270 = sadd.s32 %s269, 1
      %s271 = scalar_select %p268, %s269, %s270
      %p274 = pneg %p268
      %p275 = scmp.eq.s32.totalorder %s39, 1
      %p276 = por %p274, %p275
      %p277 = scmp.ne.s32.totalorder %s269, %s272
      %p278 = scmp.eq.s32.totalorder %s39, 0
      %p279 = por %p277, %p278
      %p280 = scmp.ne.s32.totalorder %s269, %s272
      %p281 = scmp.eq.s32.totalorder %s44, 1
      %p282 = por %p280, %p281
      %p283 = scmp.ne.s32.totalorder %s272, %s273
      %p284 = scmp.eq.s32.totalorder %s44, 0
      %p285 = por %p283, %p284
      %p286 = scmp.ne.s32.totalorder %s272, %s273
      %p287 = scmp.eq.s32.totalorder %s45, 1
      %p288 = por %p286, %p287
      %p290 = scmp.ne.s32.totalorder %s273, %s289
      %p291 = scmp.eq.s32.totalorder %s45, 0
      %p292 = por %p290, %p291
      %s293 = ssub.s32 %s47, %s54
      %p294 = scmp.eq.s32.totalorder %s293, 0
      %s296 = sadd.s32 %s295, 1
      %s297 = scalar_select %p294, %s295, %s296
      %p300 = pneg %p294
      %p301 = scmp.eq.s32.totalorder %s39, 1
      %p302 = por %p300, %p301
      %p303 = scmp.ne.s32.totalorder %s295, %s298
      %p304 = scmp.eq.s32.totalorder %s39, 0
      %p305 = por %p303, %p304
      %p306 = scmp.ne.s32.totalorder %s295, %s298
      %p307 = scmp.eq.s32.totalorder %s44, 1
      %p308 = por %p306, %p307
      %p309 = scmp.ne.s32.totalorder %s298, %s299
      %p310 = scmp.eq.s32.totalorder %s44, 0
      %p311 = por %p309, %p310
      %p312 = scmp.ne.s32.totalorder %s298, %s299
      %p313 = scmp.eq.s32.totalorder %s45, 1
      %p314 = por %p312, %p313
      %p316 = scmp.ne.s32.totalorder %s299, %s315
      %p317 = scmp.eq.s32.totalorder %s45, 0
      %p318 = por %p316, %p317
      %s319 = ssub.s32 %s47, %s54
      %p320 = scmp.eq.s32.totalorder %s319, 0
      %s322 = sadd.s32 %s321, 1
      %s323 = scalar_select %p320, %s321, %s322
      %p326 = pneg %p320
      %p327 = scmp.eq.s32.totalorder %s39, 1
      %p328 = por %p326, %p327
      %p329 = scmp.ne.s32.totalorder %s321, %s324
      %p330 = scmp.eq.s32.totalorder %s39, 0
      %p331 = por %p329, %p330
      %p332 = scmp.ne.s32.totalorder %s321, %s324
      %p333 = scmp.eq.s32.totalorder %s44, 1
      %p334 = por %p332, %p333
      %p335 = scmp.ne.s32.totalorder %s324, %s325
      %p336 = scmp.eq.s32.totalorder %s44, 0
      %p337 = por %p335, %p336
      %p338 = scmp.ne.s32.totalorder %s324, %s325
      %p339 = scmp.eq.s32.totalorder %s45, 1
      %p340 = por %p338, %p339
      %p342 = scmp.ne.s32.totalorder %s325, %s341
      %p343 = scmp.eq.s32.totalorder %s45, 0
      %p344 = por %p342, %p343
      %s345 = ssub.s32 %s47, %s54
      %p346 = scmp.eq.s32.totalorder %s345, 0
      %s348 = sadd.s32 %s347, 1
      %s349 = scalar_select %p346, %s347, %s348
      %p352 = pneg %p346
      %p353 = scmp.eq.s32.totalorder %s39, 1
      %p354 = por %p352, %p353
      %p355 = scmp.ne.s32.totalorder %s347, %s350
      %p356 = scmp.eq.s32.totalorder %s39, 0
      %p357 = por %p355, %p356
      %p358 = scmp.ne.s32.totalorder %s347, %s350
      %p359 = scmp.eq.s32.totalorder %s44, 1
      %p360 = por %p358, %p359
      %p361 = scmp.ne.s32.totalorder %s350, %s351
      %p362 = scmp.eq.s32.totalorder %s44, 0
      %p363 = por %p361, %p362
      %p364 = scmp.ne.s32.totalorder %s350, %s351
      %p365 = scmp.eq.s32.totalorder %s45, 1
      %p366 = por %p364, %p365
      %p368 = scmp.ne.s32.totalorder %s351, %s367
      %p369 = scmp.eq.s32.totalorder %s45, 0
      %p370 = por %p368, %p369
      %s371 = ssub.s32 %s47, %s54
      %p372 = scmp.eq.s32.totalorder %s371, 0
      %s374 = sadd.s32 %s373, 1
      %s375 = scalar_select %p372, %s373, %s374
      %p378 = pneg %p372
      %p379 = scmp.eq.s32.totalorder %s39, 1
      %p380 = por %p378, %p379
      %p381 = scmp.ne.s32.totalorder %s373, %s376
      %p382 = scmp.eq.s32.totalorder %s39, 0
      %p383 = por %p381, %p382
      %p384 = scmp.ne.s32.totalorder %s373, %s376
      %p385 = scmp.eq.s32.totalorder %s44, 1
      %p386 = por %p384, %p385
      %p387 = scmp.ne.s32.totalorder %s376, %s377
      %p388 = scmp.eq.s32.totalorder %s44, 0
      %p389 = por %p387, %p388
      %p390 = scmp.ne.s32.totalorder %s376, %s377
      %p391 = scmp.eq.s32.totalorder %s45, 1
      %p392 = por %p390, %p391
      %p394 = scmp.ne.s32.totalorder %s377, %s393
      %p395 = scmp.eq.s32.totalorder %s45, 0
      %p396 = por %p394, %p395
      %s397 = ssub.s32 %s46, %s58
      %p398 = scmp.eq.s32.totalorder %s397, 0
      %s400 = sadd.s32 %s399, 1
      %s401 = scalar_select %p398, %s399, %s400
      %p404 = pneg %p398
      %p405 = scmp.eq.s32.totalorder %s39, 1
      %p406 = por %p404, %p405
      %p407 = scmp.ne.s32.totalorder %s399, %s402
      %p408 = scmp.eq.s32.totalorder %s39, 0
      %p409 = por %p407, %p408
      %p410 = scmp.ne.s32.totalorder %s399, %s402
      %p411 = scmp.eq.s32.totalorder %s44, 1
      %p412 = por %p410, %p411
      %p413 = scmp.ne.s32.totalorder %s402, %s403
      %p414 = scmp.eq.s32.totalorder %s44, 0
      %p415 = por %p413, %p414
      %p416 = scmp.ne.s32.totalorder %s402, %s403
      %p417 = scmp.eq.s32.totalorder %s45, 1
      %p418 = por %p416, %p417
      %p420 = scmp.ne.s32.totalorder %s403, %s419
      %p421 = scmp.eq.s32.totalorder %s45, 0
      %p422 = por %p420, %p421
      %p423 = scmp.le.s32.totalorder 1, %s39
      %p424 = scmp.lt.s32.totalorder %s39, 3
      %p425 = pnand %p423, %p424
      %p426 = pneg %p425
      // Predicated region
      $region9: #{tpu_custom_call.1} parent=5 // pred_check
        _
      $region10: #{tpu_custom_call.1} parent=5 // pred_check_branch
        %428 = sbr.rel (%p425) target = $region12
      $region11: #{tpu_custom_call.1} parent=5 // pred_region
        %s429 = ssub.s32 %s39, 1
        // Predicated region
        $region13: #{tpu_custom_call.1} parent=11 // pred_check
          %p430 = pneg %p77
        $region14: #{tpu_custom_call.1} parent=11 // pred_check_branch
          %432 = sbr.rel (%p430) target = $region16
        $region15: #{tpu_custom_call.1} parent=11 // pred_region
          %s433 = smul.u32 4, %s48
          %s435 = ssub.s32 512, 512
          %436 = vsyncadd [#allocation3], %s435
          %s437 = smul.addr %s433, 128
          %s438 = scalar_lea.hbm %s0, %s437
          %s439 = sshll.u32 [#allocation2], 4
          %s440 = int_to_ptr.vmem [resolvable:$true] %s439
          %445 = dma.hbm_to_vmem [thread:$0]  %s438, 512, %s440, [#allocation3], 128, 128, 8
        $region16: #{tpu_custom_call.1} parent=11 // pred_fallthru
          _
      $region12: #{tpu_custom_call.1} parent=5 // pred_fallthru
        _
      %p446 = scmp.lt.s32.totalorder %s39, 2
      // Predicated region
      $region17: #{tpu_custom_call.1} parent=5 // pred_check
        %p447 = pneg %p446
      $region18: #{tpu_custom_call.1} parent=5 // pred_check_branch
        %449 = sbr.rel (%p447) target = $region20
      $region19: #{tpu_custom_call.1} parent=5 // pred_region
        // Predicated region
        $region21: #{tpu_custom_call.1} parent=19 // pred_check
          %p450 = pneg %p97
        $region22: #{tpu_custom_call.1} parent=19 // pred_check_branch
          %452 = sbr.rel (%p450) target = $region24
        $region23: #{tpu_custom_call.1} parent=19 // pred_region
          %s453 = sand.u32 %s39, 1
          %s454 = scalar_lea.sflag [#allocation6], %s453
          %s455 = sand.u32 %s87, 1
          %s456 = scalar_lea.vmem [#allocation5], %s455
          %s458 = ssub.s32 16, 16
          %459 = vsyncadd %s454, %s458
          %s460 = smul.addr %s47, 16
          %s461 = scalar_lea.hbm %s1, %s460
          %s463 = sshll.u32 %s456, 4
          %s464 = int_to_ptr.vmem [resolvable:$true] %s463
          %466 = dma.hbm_to_vmem [thread:$0]  %s461, 16, %s464, %s454
        $region24: #{tpu_custom_call.1} parent=19 // pred_fallthru
          _
        // Predicated region
        $region25: #{tpu_custom_call.1} parent=19 // pred_check
          %p467 = pneg %p123
        $region26: #{tpu_custom_call.1} parent=19 // pred_check_branch
          %469 = sbr.rel (%p467) target = $region28
        $region27: #{tpu_custom_call.1} parent=19 // pred_region
          %s470 = sand.u32 %s39, 1
          %s471 = scalar_lea.sflag [#allocation6], %s470
          %s472 = sand.u32 %s113, 1
          %s473 = scalar_lea.vmem [#allocation7], %s472
          %s475 = ssub.s32 16, 16
          %476 = vsyncadd %s471, %s475
          %s477 = smul.addr %s47, 16
          %s478 = scalar_lea.hbm %s2, %s477
          %s480 = sshll.u32 %s473, 4
          %s481 = int_to_ptr.vmem [resolvable:$true] %s480
          %483 = dma.hbm_to_vmem [thread:$0]  %s478, 16, %s481, %s471
        $region28: #{tpu_custom_call.1} parent=19 // pred_fallthru
          _
        // Predicated region
        $region29: #{tpu_custom_call.1} parent=19 // pred_check
          %p484 = pneg %p149
        $region30: #{tpu_custom_call.1} parent=19 // pred_check_branch
          %486 = sbr.rel (%p484) target = $region32
        $region31: #{tpu_custom_call.1} parent=19 // pred_region
          %s487 = sand.u32 %s39, 1
          %s488 = scalar_lea.sflag [#allocation9], %s487
          %s489 = sand.u32 %s139, 1
          %s490 = smul.addr %s489, 16
          %s491 = scalar_lea.vmem [#allocation8], %s490
          %s493 = ssub.s32 256, 256
          %494 = vsyncadd %s488, %s493
          %s495 = smul.addr %s47, 4
          %s496 = smul.addr %s495, 64
          %s497 = scalar_lea.hbm %s3, %s496
          %s498 = sshll.u32 %s491, 4
          %s499 = int_to_ptr.vmem [resolvable:$true] %s498
          %504 = dma.hbm_to_vmem [thread:$0]  %s497, 256, %s499, %s488, 64, 64, 4
        $region32: #{tpu_custom_call.1} parent=19 // pred_fallthru
          _
        // Predicated region
        $region33: #{tpu_custom_call.1} parent=19 // pred_check
          %p505 = pneg %p175
        $region34: #{tpu_custom_call.1} parent=19 // pred_check_branch
          %507 = sbr.rel (%p505) target = $region36
        $region35: #{tpu_custom_call.1} parent=19 // pred_region
          %s508 = sand.u32 %s39, 1
          %s509 = scalar_lea.sflag [#allocation9], %s508
          %s510 = sand.u32 %s165, 1
          %s511 = scalar_lea.vmem [#allocation10], %s510
          %s513 = ssub.s32 16, 16
          %514 = vsyncadd %s509, %s513
          %s515 = smul.addr %s47, 16
          %s516 = scalar_lea.hbm %s4, %s515
          %s518 = sshll.u32 %s511, 4
          %s519 = int_to_ptr.vmem [resolvable:$true] %s518
          %521 = dma.hbm_to_vmem [thread:$0]  %s516, 16, %s519, %s509
        $region36: #{tpu_custom_call.1} parent=19 // pred_fallthru
          _
        // Predicated region
        $region37: #{tpu_custom_call.1} parent=19 // pred_check
          %p522 = pneg %p201
        $region38: #{tpu_custom_call.1} parent=19 // pred_check_branch
          %524 = sbr.rel (%p522) target = $region40
        $region39: #{tpu_custom_call.1} parent=19 // pred_region
          %s525 = sand.u32 %s39, 1
          %s526 = scalar_lea.sflag [#allocation12], %s525
          %s527 = sand.u32 %s191, 1
          %s528 = smul.addr %s527, 16
          %s529 = scalar_lea.vmem [#allocation11], %s528
          %s531 = ssub.s32 256, 256
          %532 = vsyncadd %s526, %s531
          %s533 = smul.addr %s47, 4
          %s534 = smul.addr %s533, 64
          %s535 = scalar_lea.hbm %s5, %s534
          %s536 = sshll.u32 %s529, 4
          %s537 = int_to_ptr.vmem [resolvable:$true] %s536
          %542 = dma.hbm_to_vmem [thread:$0]  %s535, 256, %s537, %s526, 64, 64, 4
        $region40: #{tpu_custom_call.1} parent=19 // pred_fallthru
          _
        // Predicated region
        $region41: #{tpu_custom_call.1} parent=19 // pred_check
          %p543 = pneg %p227
        $region42: #{tpu_custom_call.1} parent=19 // pred_check_branch
          %545 = sbr.rel (%p543) target = $region44
        $region43: #{tpu_custom_call.1} parent=19 // pred_region
          %s546 = sand.u32 %s39, 1
          %s547 = scalar_lea.sflag [#allocation12], %s546
          %s548 = sand.u32 %s217, 1
          %s549 = scalar_lea.vmem [#allocation13], %s548
          %s551 = ssub.s32 16, 16
          %552 = vsyncadd %s547, %s551
          %s553 = smul.addr %s47, 16
          %s554 = scalar_lea.hbm %s6, %s553
          %s556 = sshll.u32 %s549, 4
          %s557 = int_to_ptr.vmem [resolvable:$true] %s556
          %559 = dma.hbm_to_vmem [thread:$0]  %s554, 16, %s557, %s547
        $region44: #{tpu_custom_call.1} parent=19 // pred_fallthru
          _
        // Predicated region
        $region45: #{tpu_custom_call.1} parent=19 // pred_check
          %p560 = pneg %p253
        $region46: #{tpu_custom_call.1} parent=19 // pred_check_branch
          %562 = sbr.rel (%p560) target = $region48
        $region47: #{tpu_custom_call.1} parent=19 // pred_region
          %s563 = sand.u32 %s39, 1
          %s564 = scalar_lea.sflag [#allocation15], %s563
          %s565 = sand.u32 %s243, 1
          %s566 = scalar_lea.vmem [#allocation14], %s565
          %s568 = ssub.s32 16, 16
          %569 = vsyncadd %s564, %s568
          %s570 = smul.addr %s47, 16
          %s571 = scalar_lea.hbm %s7, %s570
          %s573 = sshll.u32 %s566, 4
          %s574 = int_to_ptr.vmem [resolvable:$true] %s573
          %576 = dma.hbm_to_vmem [thread:$0]  %s571, 16, %s574, %s564
        $region48: #{tpu_custom_call.1} parent=19 // pred_fallthru
          _
        // Predicated region
        $region49: #{tpu_custom_call.1} parent=19 // pred_check
          %p577 = pneg %p279
        $region50: #{tpu_custom_call.1} parent=19 // pred_check_branch
          %579 = sbr.rel (%p577) target = $region52
        $region51: #{tpu_custom_call.1} parent=19 // pred_region
          %s580 = sand.u32 %s39, 1
          %s581 = scalar_lea.sflag [#allocation15], %s580
          %s582 = sand.u32 %s269, 1
          %s583 = scalar_lea.vmem [#allocation16], %s582
          %s585 = ssub.s32 16, 16
          %586 = vsyncadd %s581, %s585
          %s587 = smul.addr %s47, 16
          %s588 = scalar_lea.hbm %s8, %s587
          %s590 = sshll.u32 %s583, 4
          %s591 = int_to_ptr.vmem [resolvable:$true] %s590
          %593 = dma.hbm_to_vmem [thread:$0]  %s588, 16, %s591, %s581
        $region52: #{tpu_custom_call.1} parent=19 // pred_fallthru
          _
        // Predicated region
        $region53: #{tpu_custom_call.1} parent=19 // pred_check
          %p594 = pneg %p305
        $region54: #{tpu_custom_call.1} parent=19 // pred_check_branch
          %596 = sbr.rel (%p594) target = $region56
        $region55: #{tpu_custom_call.1} parent=19 // pred_region
          %s597 = sand.u32 %s39, 1
          %s598 = scalar_lea.sflag [#allocation18], %s597
          %s599 = sand.u32 %s295, 1
          %s600 = smul.addr %s599, 16
          %s601 = scalar_lea.vmem [#allocation17], %s600
          %s603 = ssub.s32 256, 256
          %604 = vsyncadd %s598, %s603
          %s605 = smul.addr %s47, 4
          %s606 = smul.addr %s605, 64
          %s607 = scalar_lea.hbm %s9, %s606
          %s608 = sshll.u32 %s601, 4
          %s609 = int_to_ptr.vmem [resolvable:$true] %s608
          %614 = dma.hbm_to_vmem [thread:$0]  %s607, 256, %s609, %s598, 64, 64, 4
        $region56: #{tpu_custom_call.1} parent=19 // pred_fallthru
          _
        // Predicated region
        $region57: #{tpu_custom_call.1} parent=19 // pred_check
          %p615 = pneg %p331
        $region58: #{tpu_custom_call.1} parent=19 // pred_check_branch
          %617 = sbr.rel (%p615) target = $region60
        $region59: #{tpu_custom_call.1} parent=19 // pred_region
          %s618 = sand.u32 %s39, 1
          %s619 = scalar_lea.sflag [#allocation18], %s618
          %s620 = sand.u32 %s321, 1
          %s621 = scalar_lea.vmem [#allocation19], %s620
          %s623 = ssub.s32 16, 16
          %624 = vsyncadd %s619, %s623
          %s625 = smul.addr %s47, 16
          %s626 = scalar_lea.hbm %s10, %s625
          %s628 = sshll.u32 %s621, 4
          %s629 = int_to_ptr.vmem [resolvable:$true] %s628
          %631 = dma.hbm_to_vmem [thread:$0]  %s626, 16, %s629, %s619
        $region60: #{tpu_custom_call.1} parent=19 // pred_fallthru
          _
        // Predicated region
        $region61: #{tpu_custom_call.1} parent=19 // pred_check
          %p632 = pneg %p357
        $region62: #{tpu_custom_call.1} parent=19 // pred_check_branch
          %634 = sbr.rel (%p632) target = $region64
        $region63: #{tpu_custom_call.1} parent=19 // pred_region
          %s635 = sand.u32 %s39, 1
          %s636 = scalar_lea.sflag [#allocation21], %s635
          %s637 = sand.u32 %s347, 1
          %s638 = smul.addr %s637, 64
          %s639 = scalar_lea.vmem [#allocation20], %s638
          %s641 = ssub.s32 1024, 1024
          %642 = vsyncadd %s636, %s641
          %s643 = smul.addr %s47, 16
          %s644 = smul.addr %s643, 64
          %s645 = scalar_lea.hbm %s11, %s644
          %s646 = sshll.u32 %s639, 4
          %s647 = int_to_ptr.vmem [resolvable:$true] %s646
          %652 = dma.hbm_to_vmem [thread:$0]  %s645, 1024, %s647, %s636, 64, 64, 4
        $region64: #{tpu_custom_call.1} parent=19 // pred_fallthru
          _
        // Predicated region
        $region65: #{tpu_custom_call.1} parent=19 // pred_check
          %p653 = pneg %p383
        $region66: #{tpu_custom_call.1} parent=19 // pred_check_branch
          %655 = sbr.rel (%p653) target = $region68
        $region67: #{tpu_custom_call.1} parent=19 // pred_region
          %s656 = sand.u32 %s39, 1
          %s657 = scalar_lea.sflag [#allocation21], %s656
          %s658 = sand.u32 %s373, 1
          %s659 = scalar_lea.vmem [#allocation22], %s658
          %s661 = ssub.s32 16, 16
          %662 = vsyncadd %s657, %s661
          %s663 = smul.addr %s47, 16
          %s664 = scalar_lea.hbm %s12, %s663
          %s666 = sshll.u32 %s659, 4
          %s667 = int_to_ptr.vmem [resolvable:$true] %s666
          %669 = dma.hbm_to_vmem [thread:$0]  %s664, 16, %s667, %s657
        $region68: #{tpu_custom_call.1} parent=19 // pred_fallthru
          _
      $region20: #{tpu_custom_call.1} parent=5 // pred_fallthru
        _
      %p670 = scmp.le.s32.totalorder 1, %s39
      %p671 = scmp.lt.s32.totalorder %s39, 3
      %p672 = pnand %p670, %p671
      %p673 = pneg %p672
      // Predicated region
      $region69: #{tpu_custom_call.1} parent=5 // pred_check
        _
      $region70: #{tpu_custom_call.1} parent=5 // pred_check_branch
        %675 = sbr.rel (%p672) target = $region72
      $region71: #{tpu_custom_call.1} parent=5 // pred_region
        %s676 = ssub.s32 %s39, 1
        // Predicated region
        $region73: #{tpu_custom_call.1} parent=71 // pred_check
          %p677 = pneg %p77
        $region74: #{tpu_custom_call.1} parent=71 // pred_check_branch
          %679 = sbr.rel (%p677) target = $region76
        $region75: #{tpu_custom_call.1} parent=71 // pred_region
          %680 = dma.done [#allocation3], 512
        $region76: #{tpu_custom_call.1} parent=71 // pred_fallthru
          _
        %s681 = sand.u32 %s44, 1
        %s682 = scalar_lea.sflag [#allocation6], %s681
        %s683 = sand.u32 %s90, 1
        %s684 = scalar_lea.vmem [#allocation5], %s683
        // Predicated region
        $region77: #{tpu_custom_call.1} parent=71 // pred_check
          %p685 = pneg %p103
        $region78: #{tpu_custom_call.1} parent=71 // pred_check_branch
          %687 = sbr.rel (%p685) target = $region80
        $region79: #{tpu_custom_call.1} parent=71 // pred_region
          %688 = dma.done %s682, 16
        $region80: #{tpu_custom_call.1} parent=71 // pred_fallthru
          _
        %s689 = sand.u32 %s44, 1
        %s690 = scalar_lea.sflag [#allocation6], %s689
        %s691 = sand.u32 %s116, 1
        %s692 = scalar_lea.vmem [#allocation7], %s691
        // Predicated region
        $region81: #{tpu_custom_call.1} parent=71 // pred_check
          %p693 = pneg %p129
        $region82: #{tpu_custom_call.1} parent=71 // pred_check_branch
          %695 = sbr.rel (%p693) target = $region84
        $region83: #{tpu_custom_call.1} parent=71 // pred_region
          %696 = dma.done %s690, 16
        $region84: #{tpu_custom_call.1} parent=71 // pred_fallthru
          _
        %s697 = sand.u32 %s44, 1
        %s698 = scalar_lea.sflag [#allocation9], %s697
        %s699 = sand.u32 %s142, 1
        %s700 = smul.addr %s699, 16
        %s701 = scalar_lea.vmem [#allocation8], %s700
        // Predicated region
        $region85: #{tpu_custom_call.1} parent=71 // pred_check
          %p702 = pneg %p155
        $region86: #{tpu_custom_call.1} parent=71 // pred_check_branch
          %704 = sbr.rel (%p702) target = $region88
        $region87: #{tpu_custom_call.1} parent=71 // pred_region
          %705 = dma.done %s698, 256
        $region88: #{tpu_custom_call.1} parent=71 // pred_fallthru
          _
        %s706 = sand.u32 %s44, 1
        %s707 = scalar_lea.sflag [#allocation9], %s706
        %s708 = sand.u32 %s168, 1
        %s709 = scalar_lea.vmem [#allocation10], %s708
        // Predicated region
        $region89: #{tpu_custom_call.1} parent=71 // pred_check
          %p710 = pneg %p181
        $region90: #{tpu_custom_call.1} parent=71 // pred_check_branch
          %712 = sbr.rel (%p710) target = $region92
        $region91: #{tpu_custom_call.1} parent=71 // pred_region
          %713 = dma.done %s707, 16
        $region92: #{tpu_custom_call.1} parent=71 // pred_fallthru
          _
        %s714 = sand.u32 %s44, 1
        %s715 = scalar_lea.sflag [#allocation12], %s714
        %s716 = sand.u32 %s194, 1
        %s717 = smul.addr %s716, 16
        %s718 = scalar_lea.vmem [#allocation11], %s717
        // Predicated region
        $region93: #{tpu_custom_call.1} parent=71 // pred_check
          %p719 = pneg %p207
        $region94: #{tpu_custom_call.1} parent=71 // pred_check_branch
          %721 = sbr.rel (%p719) target = $region96
        $region95: #{tpu_custom_call.1} parent=71 // pred_region
          %722 = dma.done %s715, 256
        $region96: #{tpu_custom_call.1} parent=71 // pred_fallthru
          _
        %s723 = sand.u32 %s44, 1
        %s724 = scalar_lea.sflag [#allocation12], %s723
        %s725 = sand.u32 %s220, 1
        %s726 = scalar_lea.vmem [#allocation13], %s725
        // Predicated region
        $region97: #{tpu_custom_call.1} parent=71 // pred_check
          %p727 = pneg %p233
        $region98: #{tpu_custom_call.1} parent=71 // pred_check_branch
          %729 = sbr.rel (%p727) target = $region100
        $region99: #{tpu_custom_call.1} parent=71 // pred_region
          %730 = dma.done %s724, 16
        $region100: #{tpu_custom_call.1} parent=71 // pred_fallthru
          _
        %s731 = sand.u32 %s44, 1
        %s732 = scalar_lea.sflag [#allocation15], %s731
        %s733 = sand.u32 %s246, 1
        %s734 = scalar_lea.vmem [#allocation14], %s733
        // Predicated region
        $region101: #{tpu_custom_call.1} parent=71 // pred_check
          %p735 = pneg %p259
        $region102: #{tpu_custom_call.1} parent=71 // pred_check_branch
          %737 = sbr.rel (%p735) target = $region104
        $region103: #{tpu_custom_call.1} parent=71 // pred_region
          %738 = dma.done %s732, 16
        $region104: #{tpu_custom_call.1} parent=71 // pred_fallthru
          _
        %s739 = sand.u32 %s44, 1
        %s740 = scalar_lea.sflag [#allocation15], %s739
        %s741 = sand.u32 %s272, 1
        %s742 = scalar_lea.vmem [#allocation16], %s741
        // Predicated region
        $region105: #{tpu_custom_call.1} parent=71 // pred_check
          %p743 = pneg %p285
        $region106: #{tpu_custom_call.1} parent=71 // pred_check_branch
          %745 = sbr.rel (%p743) target = $region108
        $region107: #{tpu_custom_call.1} parent=71 // pred_region
          %746 = dma.done %s740, 16
        $region108: #{tpu_custom_call.1} parent=71 // pred_fallthru
          _
        %s747 = sand.u32 %s44, 1
        %s748 = scalar_lea.sflag [#allocation18], %s747
        %s749 = sand.u32 %s298, 1
        %s750 = smul.addr %s749, 16
        %s751 = scalar_lea.vmem [#allocation17], %s750
        // Predicated region
        $region109: #{tpu_custom_call.1} parent=71 // pred_check
          %p752 = pneg %p311
        $region110: #{tpu_custom_call.1} parent=71 // pred_check_branch
          %754 = sbr.rel (%p752) target = $region112
        $region111: #{tpu_custom_call.1} parent=71 // pred_region
          %755 = dma.done %s748, 256
        $region112: #{tpu_custom_call.1} parent=71 // pred_fallthru
          _
        %s756 = sand.u32 %s44, 1
        %s757 = scalar_lea.sflag [#allocation18], %s756
        %s758 = sand.u32 %s324, 1
        %s759 = scalar_lea.vmem [#allocation19], %s758
        // Predicated region
        $region113: #{tpu_custom_call.1} parent=71 // pred_check
          %p760 = pneg %p337
        $region114: #{tpu_custom_call.1} parent=71 // pred_check_branch
          %762 = sbr.rel (%p760) target = $region116
        $region115: #{tpu_custom_call.1} parent=71 // pred_region
          %763 = dma.done %s757, 16
        $region116: #{tpu_custom_call.1} parent=71 // pred_fallthru
          _
        %s764 = sand.u32 %s44, 1
        %s765 = scalar_lea.sflag [#allocation21], %s764
        %s766 = sand.u32 %s350, 1
        %s767 = smul.addr %s766, 64
        %s768 = scalar_lea.vmem [#allocation20], %s767
        // Predicated region
        $region117: #{tpu_custom_call.1} parent=71 // pred_check
          %p769 = pneg %p363
        $region118: #{tpu_custom_call.1} parent=71 // pred_check_branch
          %771 = sbr.rel (%p769) target = $region120
        $region119: #{tpu_custom_call.1} parent=71 // pred_region
          %772 = dma.done %s765, 1024
        $region120: #{tpu_custom_call.1} parent=71 // pred_fallthru
          _
        %s773 = sand.u32 %s44, 1
        %s774 = scalar_lea.sflag [#allocation21], %s773
        %s775 = sand.u32 %s376, 1
        %s776 = scalar_lea.vmem [#allocation22], %s775
        // Predicated region
        $region121: #{tpu_custom_call.1} parent=71 // pred_check
          %p777 = pneg %p389
        $region122: #{tpu_custom_call.1} parent=71 // pred_check_branch
          %779 = sbr.rel (%p777) target = $region124
        $region123: #{tpu_custom_call.1} parent=71 // pred_region
          %780 = dma.done %s774, 16
        $region124: #{tpu_custom_call.1} parent=71 // pred_fallthru
          _
        %p781 = pneg %p77
        %p782 = pneg %p74
        %s783 = sand.u32 %s44, 1
        %s784 = scalar_lea.sflag [#allocation6], %s783
        %s785 = sand.u32 %s90, 1
        %s786 = scalar_lea.vmem [#allocation5], %s785
        %p787 = pneg %p103
        %p788 = pneg %p100
        %s789 = sand.u32 %s44, 1
        %s790 = scalar_lea.sflag [#allocation6], %s789
        %s791 = sand.u32 %s116, 1
        %s792 = scalar_lea.vmem [#allocation7], %s791
        %p793 = pneg %p129
        %p794 = pneg %p126
        %s795 = sand.u32 %s44, 1
        %s796 = scalar_lea.sflag [#allocation9], %s795
        %s797 = sand.u32 %s142, 1
        %s798 = smul.addr %s797, 16
        %s799 = scalar_lea.vmem [#allocation8], %s798
        %p800 = pneg %p155
        %p801 = pneg %p152
        %s802 = sand.u32 %s44, 1
        %s803 = scalar_lea.sflag [#allocation9], %s802
        %s804 = sand.u32 %s168, 1
        %s805 = scalar_lea.vmem [#allocation10], %s804
        %p806 = pneg %p181
        %p807 = pneg %p178
        %s808 = sand.u32 %s44, 1
        %s809 = scalar_lea.sflag [#allocation12], %s808
        %s810 = sand.u32 %s194, 1
        %s811 = smul.addr %s810, 16
        %s812 = scalar_lea.vmem [#allocation11], %s811
        %p813 = pneg %p207
        %p814 = pneg %p204
        %s815 = sand.u32 %s44, 1
        %s816 = scalar_lea.sflag [#allocation12], %s815
        %s817 = sand.u32 %s220, 1
        %s818 = scalar_lea.vmem [#allocation13], %s817
        %p819 = pneg %p233
        %p820 = pneg %p230
        %s821 = sand.u32 %s44, 1
        %s822 = scalar_lea.sflag [#allocation15], %s821
        %s823 = sand.u32 %s246, 1
        %s824 = scalar_lea.vmem [#allocation14], %s823
        %p825 = pneg %p259
        %p826 = pneg %p256
        %s827 = sand.u32 %s44, 1
        %s828 = scalar_lea.sflag [#allocation15], %s827
        %s829 = sand.u32 %s272, 1
        %s830 = scalar_lea.vmem [#allocation16], %s829
        %p831 = pneg %p285
        %p832 = pneg %p282
        %s833 = sand.u32 %s44, 1
        %s834 = scalar_lea.sflag [#allocation18], %s833
        %s835 = sand.u32 %s298, 1
        %s836 = smul.addr %s835, 16
        %s837 = scalar_lea.vmem [#allocation17], %s836
        %p838 = pneg %p311
        %p839 = pneg %p308
        %s840 = sand.u32 %s44, 1
        %s841 = scalar_lea.sflag [#allocation18], %s840
        %s842 = sand.u32 %s324, 1
        %s843 = scalar_lea.vmem [#allocation19], %s842
        %p844 = pneg %p337
        %p845 = pneg %p334
        %s846 = sand.u32 %s44, 1
        %s847 = scalar_lea.sflag [#allocation21], %s846
        %s848 = sand.u32 %s350, 1
        %s849 = smul.addr %s848, 64
        %s850 = scalar_lea.vmem [#allocation20], %s849
        %p851 = pneg %p363
        %p852 = pneg %p360
        %s853 = sand.u32 %s44, 1
        %s854 = scalar_lea.sflag [#allocation21], %s853
        %s855 = sand.u32 %s376, 1
        %s856 = scalar_lea.vmem [#allocation22], %s855
        %p857 = pneg %p389
        %p858 = pneg %p386
        %p859 = pneg %p415
        %p860 = pneg %p412
        %s861 = smul.u32 4, %s48
        %s862 = smul.u32 4, %s48
        %p864 = scmp.eq.s32.totalorder %s49, 0
        // Predicated region
        $region125: #{tpu_custom_call.1} parent=71 // pred_check
          %p865 = pneg %p864
        $region126: #{tpu_custom_call.1} parent=71 // pred_check_branch
          %867 = sbr.rel (%p865) target = $region128
        $region127: #{tpu_custom_call.1} parent=71 // pred_region
          %v868 = vld [vmem:[#allocation2] sm:$0xff]
          %v869 = vld [vmem:[#allocation2 + $0x8] sm:$0xff]
          %v870 = vld [vmem:[#allocation2 + $0x10] sm:$0xff]
          %v871 = vld [vmem:[#allocation2 + $0x18] sm:$0xff]
          %vm872 = vcmask 261120
          %873 = vst.msk [vmem:[#allocation23] sm:$0xff] %vm872, %v868
          %874 = vst.msk [vmem:[#allocation23 + $0x8] sm:$0xff] %vm872, %v869
          %875 = vst.msk [vmem:[#allocation23 + $0x10] sm:$0xff] %vm872, %v870
          %876 = vst.msk [vmem:[#allocation23 + $0x18] sm:$0xff] %vm872, %v871
        $region128: #{tpu_custom_call.1} parent=71 // pred_fallthru
          _
        %v877 = vld [vmem:[#allocation23] sm:$0xff]
        %v878 = vld [vmem:[#allocation23 + $0x8] sm:$0xff]
        %v879 = vld [vmem:[#allocation23 + $0x10] sm:$0xff]
        %v880 = vld [vmem:[#allocation23 + $0x18] sm:$0xff]
        %v881 = vlaneseq
        %v882 = vshrl.u32 %v881, 7
        %v883 = vlaneseq
        %v884 = vand.u32 %v883, 127
        %vm885 = vcmp.gt.s32.totalorder %v884, %v882
        %v886 = vsel %vm885, -1e+09, 0.0
        %v887 = vld [vmem:[%s684] sm:$0x1]
        %v888 = vld [vmem:[%s692] sm:$0x1]
        %vm889 = vcmask 261120
        %v890 = vsel %vm889, %v877, 0.0
        %891 = vadd.xlane.f32.xlu0 %v890
        %v892 = vpop.xlane.xlu0 %891
        %v893 = vsel %vm889, %v878, 0.0
        %894 = vadd.xlane.f32.xlu0 %v893
        %v895 = vpop.xlane.xlu0 %894
        %v896 = vsel %vm889, %v879, 0.0
        %897 = vadd.xlane.f32.xlu0 %v896
        %v898 = vpop.xlane.xlu0 %897
        %v899 = vsel %vm889, %v880, 0.0
        %900 = vadd.xlane.f32.xlu0 %v899
        %v901 = vpop.xlane.xlu0 %900
        %v902 = vrcp.pop 32.0
        %v903 = vmul.f32 %v892, %v902
        %v904 = vmul.f32 %v895, %v902
        %v905 = vmul.f32 %v898, %v902
        %v906 = vmul.f32 %v901, %v902
        %v907 = vsub.f32 %v877, %v903
        %v908 = vsub.f32 %v878, %v904
        %v909 = vsub.f32 %v879, %v905
        %v910 = vsub.f32 %v880, %v906
        %v911 = vmul.f32 %v907, %v907
        %v912 = vmul.f32 %v908, %v908
        %v913 = vmul.f32 %v909, %v909
        %v914 = vmul.f32 %v910, %v910
        %v915 = vsel %vm889, %v911, 0.0
        %916 = vadd.xlane.f32.xlu0 %v915
        %v917 = vpop.xlane.xlu0 %916
        %v918 = vsel %vm889, %v912, 0.0
        %919 = vadd.xlane.f32.xlu0 %v918
        %v920 = vpop.xlane.xlu0 %919
        %v921 = vsel %vm889, %v913, 0.0
        %922 = vadd.xlane.f32.xlu0 %v921
        %v923 = vpop.xlane.xlu0 %922
        %v924 = vsel %vm889, %v914, 0.0
        %925 = vadd.xlane.f32.xlu0 %v924
        %v926 = vpop.xlane.xlu0 %925
        %v927 = vmul.f32 %v917, %v902
        %v928 = vmul.f32 %v920, %v902
        %v929 = vmul.f32 %v923, %v902
        %v930 = vmul.f32 %v926, %v902
        %v931 = vadd.f32 %v927, 1e-05
        %v932 = vadd.f32 %v928, 1e-05
        %v933 = vadd.f32 %v929, 1e-05
        %v934 = vadd.f32 %v930, 1e-05
        %v935 = vrsqrt.pop %v931
        %v936 = vrsqrt.pop %v932
        %v937 = vrsqrt.pop %v933
        %v938 = vrsqrt.pop %v934
        %v939 = vmul.f32 %v907, %v935
        %v940 = vmul.f32 %v908, %v936
        %v941 = vmul.f32 %v909, %v937
        %v942 = vmul.f32 %v910, %v938
        %v944 = vlaneseq
        %v945 = vshrl.u32 %v944, 7
        %v946 = vsub.s32 0, %v945
        %v947 = vrot.slane %v887, %v946
        %v949 = vmul.f32 %v939, %v947
        %v950 = vmul.f32 %v940, %v947
        %v951 = vmul.f32 %v941, %v947
        %v952 = vmul.f32 %v942, %v947
        %v954 = vlaneseq
        %v955 = vshrl.u32 %v954, 7
        %v956 = vsub.s32 0, %v955
        %v957 = vrot.slane %v888, %v956
        %v959 = vadd.f32 %v949, %v957
        %v960 = vadd.f32 %v950, %v957
        %v961 = vadd.f32 %v951, %v957
        %v962 = vadd.f32 %v952, %v957
        %v963 = vpack.c.bf16 %v960, %v959
        %v964 = vpack.c.bf16 %v962, %v961
        %v965 = vld [vmem:[%s701] sm:$0xf]
        %v966 = vld [vmem:[%s701 + $0x4] sm:$0xf]
        %v967 = vld [vmem:[%s701 + $0x8] sm:$0xf]
        %v968 = vld [vmem:[%s701 + $0xc] sm:$0xf]
        %v969 = vld [vmem:[%s709] sm:$0x1]
        %v971 = vlaneseq
        %v972 = vshrl.u32 %v971, 7
        %v973 = vsub.s32 0, %v972
        %v974 = vrot.slane %v969, %v973
        %v980 = vunpack.c.l.b16 %v965
        %v981 = vunpack.c.l.b16 %v966
        %v982 = vunpack.c.l.b16 %v967
        %v983 = vunpack.c.l.b16 %v968
        %v984 = vpack.c.b16 %v981, %v980
        %v985 = vpack.c.b16 %v983, %v982
        %v989 = vsel %vm889, %v963, 0
        %v992 = vsel %vm889, %v964, 0
        %994 = vmatprep.subr.bf16.mxu0 0
        %995 = vmatpush1.bf16.msra.mxu0 %v984
        %996 = vmatprep.subr.bf16.mxu0 0
        %997 = vmatpush1.bf16.msra.mxu0 %v985
        %998 = vmatprep.subr.bf16.mxu0 0
        %999 = vmatpush1.bf16.msra.mxu0 0
        %1000 = vmatprep.subr.bf16.mxu0 0
        %1001 = vmatpush1.bf16.msra.mxu0 0
        %1002 = vmatprep.subr.bf16.mxu0 0
        %1003 = vmatpush1.bf16.msra.mxu0 0
        %1004 = vmatprep.subr.bf16.mxu0 0
        %1005 = vmatpush1.bf16.msra.mxu0 0
        %1006 = vmatprep.subr.bf16.mxu0 0
        %1007 = vmatpush1.bf16.msra.mxu0 0
        %1008 = vmatprep.subr.bf16.mxu0 0
        %1009 = vmatpush1.bf16.msra.mxu0 0
        %1010 = vmatprep.subr.bf16.mxu0 0
        %1011 = vmatpush1.bf16.msra.mxu0 0
        %1012 = vmatprep.subr.bf16.mxu0 0
        %1013 = vmatpush1.bf16.msra.mxu0 0
        %1014 = vmatprep.subr.bf16.mxu0 0
        %1015 = vmatpush1.bf16.msra.mxu0 0
        %1016 = vmatprep.subr.bf16.mxu0 0
        %1017 = vmatpush1.bf16.msra.mxu0 0
        %1018 = vmatprep.subr.bf16.mxu0 0
        %1019 = vmatpush1.bf16.msra.mxu0 0
        %1020 = vmatprep.subr.bf16.mxu0 0
        %1021 = vmatpush1.bf16.msra.mxu0 0
        %1022 = vmatprep.subr.bf16.mxu0 0
        %1023 = vmatpush1.bf16.msra.mxu0 0
        %1024 = vmatprep.subr.bf16.mxu0 0
        %1025 = vmatpush1.bf16.msra.mxu0 0
        %1026 = vmatprep.mubr.bf16.mxu0 0
        %1027 = vmatmul.mubr.bf16.gmra.mrb[0].mxu0 %v989
        %v1028 = vpop.f32.mrb[0].mxu0
        %v1029 = vadd.f32 %v974, %v1028
        %v1030 = vpop.f32.mrb[0].mxu0
        %v1031 = vpop.f32.mrb[0].mxu0
        %v1032 = vadd.f32 %v974, %v1031
        %v1033 = vpop.f32.mrb[0].mxu0
        %1034 = vmatprep.mubr.bf16.mxu0 0
        %1035 = vmatmul.mubr.bf16.gmra.mrb[0].mxu0 %v992
        %v1036 = vpop.f32.mrb[0].mxu0
        %v1037 = vadd.f32 %v974, %v1036
        %v1038 = vpop.f32.mrb[0].mxu0
        %v1039 = vpop.f32.mrb[0].mxu0
        %v1040 = vadd.f32 %v974, %v1039
        %v1041 = vpop.f32.mrb[0].mxu0
        %1042 = vdwg.mxu0
        %1047 = vrot.lane.b32.xlu0 %v1029, 120
        %v1048 = vpop.permute.xlu0 %1047
        %1049 = vrot.lane.b32.xlu0 %v1032, 120
        %v1050 = vpop.permute.xlu0 %1049
        %1051 = vrot.lane.b32.xlu0 %v1037, 120
        %v1052 = vpop.permute.xlu0 %1051
        %1053 = vrot.lane.b32.xlu0 %v1040, 120
        %v1054 = vpop.permute.xlu0 %1053
        %1059 = vrot.lane.b32.xlu0 %v1029, 112
        %v1060 = vpop.permute.xlu0 %1059
        %1061 = vrot.lane.b32.xlu0 %v1032, 112
        %v1062 = vpop.permute.xlu0 %1061
        %1063 = vrot.lane.b32.xlu0 %v1037, 112
        %v1064 = vpop.permute.xlu0 %1063
        %1065 = vrot.lane.b32.xlu0 %v1040, 112
        %v1066 = vpop.permute.xlu0 %1065
        %1071 = vrot.lane.b32.xlu0 %v1029, 104
        %v1072 = vpop.permute.xlu0 %1071
        %1073 = vrot.lane.b32.xlu0 %v1032, 104
        %v1074 = vpop.permute.xlu0 %1073
        %1075 = vrot.lane.b32.xlu0 %v1037, 104
        %v1076 = vpop.permute.xlu0 %1075
        %1077 = vrot.lane.b32.xlu0 %v1040, 104
        %v1078 = vpop.permute.xlu0 %1077
        %v1083 = vpack.c.bf16 %v1029, %v1029
        %v1084 = vpack.c.bf16 %v1032, %v1032
        %v1085 = vpack.c.bf16 %v1037, %v1037
        %v1086 = vpack.c.bf16 %v1040, %v1040
        %v1087 = vpack.c.bf16 %v1048, %v1048
        %v1088 = vpack.c.bf16 %v1050, %v1050
        %v1089 = vpack.c.bf16 %v1052, %v1052
        %v1090 = vpack.c.bf16 %v1054, %v1054
        %v1091 = vpack.c.bf16 %v1060, %v1060
        %v1092 = vpack.c.bf16 %v1062, %v1062
        %v1093 = vpack.c.bf16 %v1064, %v1064
        %v1094 = vpack.c.bf16 %v1066, %v1066
        %v1095 = vpack.c.bf16 %v1072, %v1072
        %v1096 = vpack.c.bf16 %v1074, %v1074
        %v1097 = vpack.c.bf16 %v1076, %v1076
        %v1098 = vpack.c.bf16 %v1078, %v1078
        %1100 = vrot.lane.b32.xlu0 %v1083, 96
        %v1101 = vpop.permute.xlu0 %1100
        %vm1102 = vcmask 64512
        %v1104 = vsel %vm1102, %v1083, 0
        %v1107 = vsel %vm1102, %v1101, 0
        %1109 = vmatprep.subr.bf16.mxu0 0
        %1110 = vmatpush1.bf16.xpose.msra.mxu0 %v1107
        %1111 = vmatprep.subr.bf16.mxu0 0
        %1112 = vmatpush1.bf16.xpose.msra.mxu0 0
        %1113 = vmatprep.subr.bf16.mxu0 0
        %1114 = vmatpush1.bf16.xpose.msra.mxu0 0
        %1115 = vmatprep.subr.bf16.mxu0 0
        %1116 = vmatpush1.bf16.xpose.msra.mxu0 0
        %1117 = vmatprep.subr.bf16.mxu0 0
        %1118 = vmatpush1.bf16.xpose.msra.mxu0 0
        %1119 = vmatprep.subr.bf16.mxu0 0
        %1120 = vmatpush1.bf16.xpose.msra.mxu0 0
        %1121 = vmatprep.subr.bf16.mxu0 0
        %1122 = vmatpush1.bf16.xpose.msra.mxu0 0
        %1123 = vmatprep.subr.bf16.mxu0 0
        %1124 = vmatpush1.bf16.xpose.msra.mxu0 0
        %1125 = vmatprep.subr.bf16.mxu0 0
        %1126 = vmatpush1.bf16.xpose.msra.mxu0 0
        %1127 = vmatprep.subr.bf16.mxu0 0
        %1128 = vmatpush1.bf16.xpose.msra.mxu0 0
        %1129 = vmatprep.subr.bf16.mxu0 0
        %1130 = vmatpush1.bf16.xpose.msra.mxu0 0
        %1131 = vmatprep.subr.bf16.mxu0 0
        %1132 = vmatpush1.bf16.xpose.msra.mxu0 0
        %1133 = vmatprep.subr.bf16.mxu0 0
        %1134 = vmatpush1.bf16.xpose.msra.mxu0 0
        %1135 = vmatprep.subr.bf16.mxu0 0
        %1136 = vmatpush1.bf16.xpose.msra.mxu0 0
        %1137 = vmatprep.subr.bf16.mxu0 0
        %1138 = vmatpush1.bf16.xpose.msra.mxu0 0
        %1139 = vmatprep.subr.bf16.mxu0 0
        %1140 = vmatpush1.bf16.xpose.msra.mxu0 0
        %1141 = vmatprep.mubr.bf16.mxu0 0
        %1142 = vmatmul.mubr.bf16.gmra.mrb[0].mxu0 %v1104
        %v1143 = vpop.f32.mrb[0].mxu0
        %v1144 = vadd.f32 %v886, %v1143
        %v1145 = vpop.f32.mrb[0].mxu0
        %v1146 = vpop.f32.mrb[0].mxu0
        %v1147 = vpop.f32.mrb[0].mxu0
        %1148 = vdwg.mxu0
        %1150 = vrot.lane.b32.xlu0 %v1084, 96
        %v1151 = vpop.permute.xlu0 %1150
        %v1153 = vsel %vm1102, %v1084, 0
        %v1156 = vsel %vm1102, %v1151, 0
        %1158 = vmatprep.subr.bf16.mxu0 0
        %1159 = vmatpush1.bf16.xpose.msra.mxu0 %v1156
        %1160 = vmatprep.subr.bf16.mxu0 0
        %1161 = vmatpush1.bf16.xpose.msra.mxu0 0
        %1162 = vmatprep.subr.bf16.mxu0 0
        %1163 = vmatpush1.bf16.xpose.msra.mxu0 0
        %1164 = vmatprep.subr.bf16.mxu0 0
        %1165 = vmatpush1.bf16.xpose.msra.mxu0 0
        %1166 = vmatprep.subr.bf16.mxu0 0
        %1167 = vmatpush1.bf16.xpose.msra.mxu0 0
        %1168 = vmatprep.subr.bf16.mxu0 0
        %1169 = vmatpush1.bf16.xpose.msra.mxu0 0
        %1170 = vmatprep.subr.bf16.mxu0 0
        %1171 = vmatpush1.bf16.xpose.msra.mxu0 0
        %1172 = vmatprep.subr.bf16.mxu0 0
        %1173 = vmatpush1.bf16.xpose.msra.mxu0 0
        %1174 = vmatprep.subr.bf16.mxu0 0
        %1175 = vmatpush1.bf16.xpose.msra.mxu0 0
        %1176 = vmatprep.subr.bf16.mxu0 0
        %1177 = vmatpush1.bf16.xpose.msra.mxu0 0
        %1178 = vmatprep.subr.bf16.mxu0 0
        %1179 = vmatpush1.bf16.xpose.msra.mxu0 0
        %1180 = vmatprep.subr.bf16.mxu0 0
        %1181 = vmatpush1.bf16.xpose.msra.mxu0 0
        %1182 = vmatprep.subr.bf16.mxu0 0
        %1183 = vmatpush1.bf16.xpose.msra.mxu0 0
        %1184 = vmatprep.subr.bf16.mxu0 0
        %1185 = vmatpush1.bf16.xpose.msra.mxu0 0
        %1186 = vmatprep.subr.bf16.mxu0 0
        %1187 = vmatpush1.bf16.xpose.msra.mxu0 0
        %1188 = vmatprep.subr.bf16.mxu0 0
        %1189 = vmatpush1.bf16.xpose.msra.mxu0 0
        %1190 = vmatprep.mubr.bf16.mxu0 0
        %1191 = vmatmul.mubr.bf16.gmra.mrb[0].mxu0 %v1153
        %v1192 = vpop.f32.mrb[0].mxu0
        %v1193 = vadd.f32 %v886, %v1192
        %v1194 = vpop.f32.mrb[0].mxu0
        %v1195 = vpop.f32.mrb[0].mxu0
        %v1196 = vpop.f32.mrb[0].mxu0
        %1197 = vdwg.mxu0
        %1199 = vrot.lane.b32.xlu0 %v1085, 96
        %v1200 = vpop.permute.xlu0 %1199
        %v1202 = vsel %vm1102, %v1085, 0
        %v1205 = vsel %vm1102, %v1200, 0
        %1207 = vmatprep.subr.bf16.mxu0 0
        %1208 = vmatpush1.bf16.xpose.msra.mxu0 %v1205
        %1209 = vmatprep.subr.bf16.mxu0 0
        %1210 = vmatpush1.bf16.xpose.msra.mxu0 0
        %1211 = vmatprep.subr.bf16.mxu0 0
        %1212 = vmatpush1.bf16.xpose.msra.mxu0 0
        %1213 = vmatprep.subr.bf16.mxu0 0
        %1214 = vmatpush1.bf16.xpose.msra.mxu0 0
        %1215 = vmatprep.subr.bf16.mxu0 0
        %1216 = vmatpush1.bf16.xpose.msra.mxu0 0
        %1217 = vmatprep.subr.bf16.mxu0 0
        %1218 = vmatpush1.bf16.xpose.msra.mxu0 0
        %1219 = vmatprep.subr.bf16.mxu0 0
        %1220 = vmatpush1.bf16.xpose.msra.mxu0 0
        %1221 = vmatprep.subr.bf16.mxu0 0
        %1222 = vmatpush1.bf16.xpose.msra.mxu0 0
        %1223 = vmatprep.subr.bf16.mxu0 0
        %1224 = vmatpush1.bf16.xpose.msra.mxu0 0
        %1225 = vmatprep.subr.bf16.mxu0 0
        %1226 = vmatpush1.bf16.xpose.msra.mxu0 0
        %1227 = vmatprep.subr.bf16.mxu0 0
        %1228 = vmatpush1.bf16.xpose.msra.mxu0 0
        %1229 = vmatprep.subr.bf16.mxu0 0
        %1230 = vmatpush1.bf16.xpose.msra.mxu0 0
        %1231 = vmatprep.subr.bf16.mxu0 0
        %1232 = vmatpush1.bf16.xpose.msra.mxu0 0
        %1233 = vmatprep.subr.bf16.mxu0 0
        %1234 = vmatpush1.bf16.xpose.msra.mxu0 0
        %1235 = vmatprep.subr.bf16.mxu0 0
        %1236 = vmatpush1.bf16.xpose.msra.mxu0 0
        %1237 = vmatprep.subr.bf16.mxu0 0
        %1238 = vmatpush1.bf16.xpose.msra.mxu0 0
        %1239 = vmatprep.mubr.bf16.mxu0 0
        %1240 = vmatmul.mubr.bf16.gmra.mrb[0].mxu0 %v1202
        %v1241 = vpop.f32.mrb[0].mxu0
        %v1242 = vadd.f32 %v886, %v1241
        %v1243 = vpop.f32.mrb[0].mxu0
        %v1244 = vpop.f32.mrb[0].mxu0
        %v1245 = vpop.f32.mrb[0].mxu0
        %1246 = vdwg.mxu0
        %1248 = vrot.lane.b32.xlu0 %v1086, 96
        %v1249 = vpop.permute.xlu0 %1248
        %v1251 = vsel %vm1102, %v1086, 0
        %v1254 = vsel %vm1102, %v1249, 0
        %1256 = vmatprep.subr.bf16.mxu0 0
        %1257 = vmatpush1.bf16.xpose.msra.mxu0 %v1254
        %1258 = vmatprep.subr.bf16.mxu0 0
        %1259 = vmatpush1.bf16.xpose.msra.mxu0 0
        %1260 = vmatprep.subr.bf16.mxu0 0
        %1261 = vmatpush1.bf16.xpose.msra.mxu0 0
        %1262 = vmatprep.subr.bf16.mxu0 0
        %1263 = vmatpush1.bf16.xpose.msra.mxu0 0
        %1264 = vmatprep.subr.bf16.mxu0 0
        %1265 = vmatpush1.bf16.xpose.msra.mxu0 0
        %1266 = vmatprep.subr.bf16.mxu0 0
        %1267 = vmatpush1.bf16.xpose.msra.mxu0 0
        %1268 = vmatprep.subr.bf16.mxu0 0
        %1269 = vmatpush1.bf16.xpose.msra.mxu0 0
        %1270 = vmatprep.subr.bf16.mxu0 0
        %1271 = vmatpush1.bf16.xpose.msra.mxu0 0
        %1272 = vmatprep.subr.bf16.mxu0 0
        %1273 = vmatpush1.bf16.xpose.msra.mxu0 0
        %1274 = vmatprep.subr.bf16.mxu0 0
        %1275 = vmatpush1.bf16.xpose.msra.mxu0 0
        %1276 = vmatprep.subr.bf16.mxu0 0
        %1277 = vmatpush1.bf16.xpose.msra.mxu0 0
        %1278 = vmatprep.subr.bf16.mxu0 0
        %1279 = vmatpush1.bf16.xpose.msra.mxu0 0
        %1280 = vmatprep.subr.bf16.mxu0 0
        %1281 = vmatpush1.bf16.xpose.msra.mxu0 0
        %1282 = vmatprep.subr.bf16.mxu0 0
        %1283 = vmatpush1.bf16.xpose.msra.mxu0 0
        %1284 = vmatprep.subr.bf16.mxu0 0
        %1285 = vmatpush1.bf16.xpose.msra.mxu0 0
        %1286 = vmatprep.subr.bf16.mxu0 0
        %1287 = vmatpush1.bf16.xpose.msra.mxu0 0
        %1288 = vmatprep.mubr.bf16.mxu0 0
        %1289 = vmatmul.mubr.bf16.gmra.mrb[0].mxu0 %v1251
        %v1290 = vpop.f32.mrb[0].mxu0
        %v1291 = vadd.f32 %v886, %v1290
        %v1292 = vpop.f32.mrb[0].mxu0
        %v1293 = vpop.f32.mrb[0].mxu0
        %v1294 = vpop.f32.mrb[0].mxu0
        %1295 = vdwg.mxu0
        %1297 = vrot.lane.b32.xlu0 %v1087, 96
        %v1298 = vpop.permute.xlu0 %1297
        %v1300 = vsel %vm1102, %v1087, 0
        %v1303 = vsel %vm1102, %v1298, 0
        %1305 = vmatprep.subr.bf16.mxu0 0
        %1306 = vmatpush1.bf16.xpose.msra.mxu0 %v1303
        %1307 = vmatprep.subr.bf16.mxu0 0
        %1308 = vmatpush1.bf16.xpose.msra.mxu0 0
        %1309 = vmatprep.subr.bf16.mxu0 0
        %1310 = vmatpush1.bf16.xpose.msra.mxu0 0
        %1311 = vmatprep.subr.bf16.mxu0 0
        %1312 = vmatpush1.bf16.xpose.msra.mxu0 0
        %1313 = vmatprep.subr.bf16.mxu0 0
        %1314 = vmatpush1.bf16.xpose.msra.mxu0 0
        %1315 = vmatprep.subr.bf16.mxu0 0
        %1316 = vmatpush1.bf16.xpose.msra.mxu0 0
        %1317 = vmatprep.subr.bf16.mxu0 0
        %1318 = vmatpush1.bf16.xpose.msra.mxu0 0
        %1319 = vmatprep.subr.bf16.mxu0 0
        %1320 = vmatpush1.bf16.xpose.msra.mxu0 0
        %1321 = vmatprep.subr.bf16.mxu0 0
        %1322 = vmatpush1.bf16.xpose.msra.mxu0 0
        %1323 = vmatprep.subr.bf16.mxu0 0
        %1324 = vmatpush1.bf16.xpose.msra.mxu0 0
        %1325 = vmatprep.subr.bf16.mxu0 0
        %1326 = vmatpush1.bf16.xpose.msra.mxu0 0
        %1327 = vmatprep.subr.bf16.mxu0 0
        %1328 = vmatpush1.bf16.xpose.msra.mxu0 0
        %1329 = vmatprep.subr.bf16.mxu0 0
        %1330 = vmatpush1.bf16.xpose.msra.mxu0 0
        %1331 = vmatprep.subr.bf16.mxu0 0
        %1332 = vmatpush1.bf16.xpose.msra.mxu0 0
        %1333 = vmatprep.subr.bf16.mxu0 0
        %1334 = vmatpush1.bf16.xpose.msra.mxu0 0
        %1335 = vmatprep.subr.bf16.mxu0 0
        %1336 = vmatpush1.bf16.xpose.msra.mxu0 0
        %1337 = vmatprep.mubr.bf16.mxu0 0
        %1338 = vmatmul.mubr.bf16.gmra.mrb[0].mxu0 %v1300
        %v1339 = vpop.f32.mrb[0].mxu0
        %v1340 = vadd.f32 %v886, %v1339
        %v1341 = vpop.f32.mrb[0].mxu0
        %v1342 = vpop.f32.mrb[0].mxu0
        %v1343 = vpop.f32.mrb[0].mxu0
        %1344 = vdwg.mxu0
        %1346 = vrot.lane.b32.xlu0 %v1088, 96
        %v1347 = vpop.permute.xlu0 %1346
        %v1349 = vsel %vm1102, %v1088, 0
        %v1352 = vsel %vm1102, %v1347, 0
        %1354 = vmatprep.subr.bf16.mxu0 0
        %1355 = vmatpush1.bf16.xpose.msra.mxu0 %v1352
        %1356 = vmatprep.subr.bf16.mxu0 0
        %1357 = vmatpush1.bf16.xpose.msra.mxu0 0
        %1358 = vmatprep.subr.bf16.mxu0 0
        %1359 = vmatpush1.bf16.xpose.msra.mxu0 0
        %1360 = vmatprep.subr.bf16.mxu0 0
        %1361 = vmatpush1.bf16.xpose.msra.mxu0 0
        %1362 = vmatprep.subr.bf16.mxu0 0
        %1363 = vmatpush1.bf16.xpose.msra.mxu0 0
        %1364 = vmatprep.subr.bf16.mxu0 0
        %1365 = vmatpush1.bf16.xpose.msra.mxu0 0
        %1366 = vmatprep.subr.bf16.mxu0 0
        %1367 = vmatpush1.bf16.xpose.msra.mxu0 0
        %1368 = vmatprep.subr.bf16.mxu0 0
        %1369 = vmatpush1.bf16.xpose.msra.mxu0 0
        %1370 = vmatprep.subr.bf16.mxu0 0
        %1371 = vmatpush1.bf16.xpose.msra.mxu0 0
        %1372 = vmatprep.subr.bf16.mxu0 0
        %1373 = vmatpush1.bf16.xpose.msra.mxu0 0
        %1374 = vmatprep.subr.bf16.mxu0 0
        %1375 = vmatpush1.bf16.xpose.msra.mxu0 0
        %1376 = vmatprep.subr.bf16.mxu0 0
        %1377 = vmatpush1.bf16.xpose.msra.mxu0 0
        %1378 = vmatprep.subr.bf16.mxu0 0
        %1379 = vmatpush1.bf16.xpose.msra.mxu0 0
        %1380 = vmatprep.subr.bf16.mxu0 0
        %1381 = vmatpush1.bf16.xpose.msra.mxu0 0
        %1382 = vmatprep.subr.bf16.mxu0 0
        %1383 = vmatpush1.bf16.xpose.msra.mxu0 0
        %1384 = vmatprep.subr.bf16.mxu0 0
        %1385 = vmatpush1.bf16.xpose.msra.mxu0 0
        %1386 = vmatprep.mubr.bf16.mxu0 0
        %1387 = vmatmul.mubr.bf16.gmra.mrb[0].mxu0 %v1349
        %v1388 = vpop.f32.mrb[0].mxu0
        %v1389 = vadd.f32 %v886, %v1388
        %v1390 = vpop.f32.mrb[0].mxu0
        %v1391 = vpop.f32.mrb[0].mxu0
        %v1392 = vpop.f32.mrb[0].mxu0
        %1393 = vdwg.mxu0
        %1395 = vrot.lane.b32.xlu0 %v1089, 96
        %v1396 = vpop.permute.xlu0 %1395
        %v1398 = vsel %vm1102, %v1089, 0
        %v1401 = vsel %vm1102, %v1396, 0
        %1403 = vmatprep.subr.bf16.mxu0 0
        %1404 = vmatpush1.bf16.xpose.msra.mxu0 %v1401
        %1405 = vmatprep.subr.bf16.mxu0 0
        %1406 = vmatpush1.bf16.xpose.msra.mxu0 0
        %1407 = vmatprep.subr.bf16.mxu0 0
        %1408 = vmatpush1.bf16.xpose.msra.mxu0 0
        %1409 = vmatprep.subr.bf16.mxu0 0
        %1410 = vmatpush1.bf16.xpose.msra.mxu0 0
        %1411 = vmatprep.subr.bf16.mxu0 0
        %1412 = vmatpush1.bf16.xpose.msra.mxu0 0
        %1413 = vmatprep.subr.bf16.mxu0 0
        %1414 = vmatpush1.bf16.xpose.msra.mxu0 0
        %1415 = vmatprep.subr.bf16.mxu0 0
        %1416 = vmatpush1.bf16.xpose.msra.mxu0 0
        %1417 = vmatprep.subr.bf16.mxu0 0
        %1418 = vmatpush1.bf16.xpose.msra.mxu0 0
        %1419 = vmatprep.subr.bf16.mxu0 0
        %1420 = vmatpush1.bf16.xpose.msra.mxu0 0
        %1421 = vmatprep.subr.bf16.mxu0 0
        %1422 = vmatpush1.bf16.xpose.msra.mxu0 0
        %1423 = vmatprep.subr.bf16.mxu0 0
        %1424 = vmatpush1.bf16.xpose.msra.mxu0 0
        %1425 = vmatprep.subr.bf16.mxu0 0
        %1426 = vmatpush1.bf16.xpose.msra.mxu0 0
        %1427 = vmatprep.subr.bf16.mxu0 0
        %1428 = vmatpush1.bf16.xpose.msra.mxu0 0
        %1429 = vmatprep.subr.bf16.mxu0 0
        %1430 = vmatpush1.bf16.xpose.msra.mxu0 0
        %1431 = vmatprep.subr.bf16.mxu0 0
        %1432 = vmatpush1.bf16.xpose.msra.mxu0 0
        %1433 = vmatprep.subr.bf16.mxu0 0
        %1434 = vmatpush1.bf16.xpose.msra.mxu0 0
        %1435 = vmatprep.mubr.bf16.mxu0 0
        %1436 = vmatmul.mubr.bf16.gmra.mrb[0].mxu0 %v1398
        %v1437 = vpop.f32.mrb[0].mxu0
        %v1438 = vadd.f32 %v886, %v1437
        %v1439 = vpop.f32.mrb[0].mxu0
        %v1440 = vpop.f32.mrb[0].mxu0
        %v1441 = vpop.f32.mrb[0].mxu0
        %1442 = vdwg.mxu0
        %1444 = vrot.lane.b32.xlu0 %v1090, 96
        %v1445 = vpop.permute.xlu0 %1444
        %v1447 = vsel %vm1102, %v1090, 0
        %v1450 = vsel %vm1102, %v1445, 0
        %1452 = vmatprep.subr.bf16.mxu0 0
        %1453 = vmatpush1.bf16.xpose.msra.mxu0 %v1450
        %1454 = vmatprep.subr.bf16.mxu0 0
        %1455 = vmatpush1.bf16.xpose.msra.mxu0 0
        %1456 = vmatprep.subr.bf16.mxu0 0
        %1457 = vmatpush1.bf16.xpose.msra.mxu0 0
        %1458 = vmatprep.subr.bf16.mxu0 0
        %1459 = vmatpush1.bf16.xpose.msra.mxu0 0
        %1460 = vmatprep.subr.bf16.mxu0 0
        %1461 = vmatpush1.bf16.xpose.msra.mxu0 0
        %1462 = vmatprep.subr.bf16.mxu0 0
        %1463 = vmatpush1.bf16.xpose.msra.mxu0 0
        %1464 = vmatprep.subr.bf16.mxu0 0
        %1465 = vmatpush1.bf16.xpose.msra.mxu0 0
        %1466 = vmatprep.subr.bf16.mxu0 0
        %1467 = vmatpush1.bf16.xpose.msra.mxu0 0
        %1468 = vmatprep.subr.bf16.mxu0 0
        %1469 = vmatpush1.bf16.xpose.msra.mxu0 0
        %1470 = vmatprep.subr.bf16.mxu0 0
        %1471 = vmatpush1.bf16.xpose.msra.mxu0 0
        %1472 = vmatprep.subr.bf16.mxu0 0
        %1473 = vmatpush1.bf16.xpose.msra.mxu0 0
        %1474 = vmatprep.subr.bf16.mxu0 0
        %1475 = vmatpush1.bf16.xpose.msra.mxu0 0
        %1476 = vmatprep.subr.bf16.mxu0 0
        %1477 = vmatpush1.bf16.xpose.msra.mxu0 0
        %1478 = vmatprep.subr.bf16.mxu0 0
        %1479 = vmatpush1.bf16.xpose.msra.mxu0 0
        %1480 = vmatprep.subr.bf16.mxu0 0
        %1481 = vmatpush1.bf16.xpose.msra.mxu0 0
        %1482 = vmatprep.subr.bf16.mxu0 0
        %1483 = vmatpush1.bf16.xpose.msra.mxu0 0
        %1484 = vmatprep.mubr.bf16.mxu0 0
        %1485 = vmatmul.mubr.bf16.gmra.mrb[0].mxu0 %v1447
        %v1486 = vpop.f32.mrb[0].mxu0
        %v1487 = vadd.f32 %v886, %v1486
        %v1488 = vpop.f32.mrb[0].mxu0
        %v1489 = vpop.f32.mrb[0].mxu0
        %v1490 = vpop.f32.mrb[0].mxu0
        %1491 = vdwg.mxu0
        %1493 = vrot.lane.b32.xlu0 %v1091, 96
        %v1494 = vpop.permute.xlu0 %1493
        %v1496 = vsel %vm1102, %v1091, 0
        %v1499 = vsel %vm1102, %v1494, 0
        %1501 = vmatprep.subr.bf16.mxu0 0
        %1502 = vmatpush1.bf16.xpose.msra.mxu0 %v1499
        %1503 = vmatprep.subr.bf16.mxu0 0
        %1504 = vmatpush1.bf16.xpose.msra.mxu0 0
        %1505 = vmatprep.subr.bf16.mxu0 0
        %1506 = vmatpush1.bf16.xpose.msra.mxu0 0
        %1507 = vmatprep.subr.bf16.mxu0 0
        %1508 = vmatpush1.bf16.xpose.msra.mxu0 0
        %1509 = vmatprep.subr.bf16.mxu0 0
        %1510 = vmatpush1.bf16.xpose.msra.mxu0 0
        %1511 = vmatprep.subr.bf16.mxu0 0
        %1512 = vmatpush1.bf16.xpose.msra.mxu0 0
        %1513 = vmatprep.subr.bf16.mxu0 0
        %1514 = vmatpush1.bf16.xpose.msra.mxu0 0
        %1515 = vmatprep.subr.bf16.mxu0 0
        %1516 = vmatpush1.bf16.xpose.msra.mxu0 0
        %1517 = vmatprep.subr.bf16.mxu0 0
        %1518 = vmatpush1.bf16.xpose.msra.mxu0 0
        %1519 = vmatprep.subr.bf16.mxu0 0
        %1520 = vmatpush1.bf16.xpose.msra.mxu0 0
        %1521 = vmatprep.subr.bf16.mxu0 0
        %1522 = vmatpush1.bf16.xpose.msra.mxu0 0
        %1523 = vmatprep.subr.bf16.mxu0 0
        %1524 = vmatpush1.bf16.xpose.msra.mxu0 0
        %1525 = vmatprep.subr.bf16.mxu0 0
        %1526 = vmatpush1.bf16.xpose.msra.mxu0 0
        %1527 = vmatprep.subr.bf16.mxu0 0
        %1528 = vmatpush1.bf16.xpose.msra.mxu0 0
        %1529 = vmatprep.subr.bf16.mxu0 0
        %1530 = vmatpush1.bf16.xpose.msra.mxu0 0
        %1531 = vmatprep.subr.bf16.mxu0 0
        %1532 = vmatpush1.bf16.xpose.msra.mxu0 0
        %1533 = vmatprep.mubr.bf16.mxu0 0
        %1534 = vmatmul.mubr.bf16.gmra.mrb[0].mxu0 %v1496
        %v1535 = vpop.f32.mrb[0].mxu0
        %v1536 = vadd.f32 %v886, %v1535
        %v1537 = vpop.f32.mrb[0].mxu0
        %v1538 = vpop.f32.mrb[0].mxu0
        %v1539 = vpop.f32.mrb[0].mxu0
        %1540 = vdwg.mxu0
        %1542 = vrot.lane.b32.xlu0 %v1092, 96
        %v1543 = vpop.permute.xlu0 %1542
        %v1545 = vsel %vm1102, %v1092, 0
        %v1548 = vsel %vm1102, %v1543, 0
        %1550 = vmatprep.subr.bf16.mxu0 0
        %1551 = vmatpush1.bf16.xpose.msra.mxu0 %v1548
        %1552 = vmatprep.subr.bf16.mxu0 0
        %1553 = vmatpush1.bf16.xpose.msra.mxu0 0
        %1554 = vmatprep.subr.bf16.mxu0 0
        %1555 = vmatpush1.bf16.xpose.msra.mxu0 0
        %1556 = vmatprep.subr.bf16.mxu0 0
        %1557 = vmatpush1.bf16.xpose.msra.mxu0 0
        %1558 = vmatprep.subr.bf16.mxu0 0
        %1559 = vmatpush1.bf16.xpose.msra.mxu0 0
        %1560 = vmatprep.subr.bf16.mxu0 0
        %1561 = vmatpush1.bf16.xpose.msra.mxu0 0
        %1562 = vmatprep.subr.bf16.mxu0 0
        %1563 = vmatpush1.bf16.xpose.msra.mxu0 0
        %1564 = vmatprep.subr.bf16.mxu0 0
        %1565 = vmatpush1.bf16.xpose.msra.mxu0 0
        %1566 = vmatprep.subr.bf16.mxu0 0
        %1567 = vmatpush1.bf16.xpose.msra.mxu0 0
        %1568 = vmatprep.subr.bf16.mxu0 0
        %1569 = vmatpush1.bf16.xpose.msra.mxu0 0
        %1570 = vmatprep.subr.bf16.mxu0 0
        %1571 = vmatpush1.bf16.xpose.msra.mxu0 0
        %1572 = vmatprep.subr.bf16.mxu0 0
        %1573 = vmatpush1.bf16.xpose.msra.mxu0 0
        %1574 = vmatprep.subr.bf16.mxu0 0
        %1575 = vmatpush1.bf16.xpose.msra.mxu0 0
        %1576 = vmatprep.subr.bf16.mxu0 0
        %1577 = vmatpush1.bf16.xpose.msra.mxu0 0
        %1578 = vmatprep.subr.bf16.mxu0 0
        %1579 = vmatpush1.bf16.xpose.msra.mxu0 0
        %1580 = vmatprep.subr.bf16.mxu0 0
        %1581 = vmatpush1.bf16.xpose.msra.mxu0 0
        %1582 = vmatprep.mubr.bf16.mxu0 0
        %1583 = vmatmul.mubr.bf16.gmra.mrb[0].mxu0 %v1545
        %v1584 = vpop.f32.mrb[0].mxu0
        %v1585 = vadd.f32 %v886, %v1584
        %v1586 = vpop.f32.mrb[0].mxu0
        %v1587 = vpop.f32.mrb[0].mxu0
        %v1588 = vpop.f32.mrb[0].mxu0
        %1589 = vdwg.mxu0
        %1591 = vrot.lane.b32.xlu0 %v1093, 96
        %v1592 = vpop.permute.xlu0 %1591
        %v1594 = vsel %vm1102, %v1093, 0
        %v1597 = vsel %vm1102, %v1592, 0
        %1599 = vmatprep.subr.bf16.mxu0 0
        %1600 = vmatpush1.bf16.xpose.msra.mxu0 %v1597
        %1601 = vmatprep.subr.bf16.mxu0 0
        %1602 = vmatpush1.bf16.xpose.msra.mxu0 0
        %1603 = vmatprep.subr.bf16.mxu0 0
        %1604 = vmatpush1.bf16.xpose.msra.mxu0 0
        %1605 = vmatprep.subr.bf16.mxu0 0
        %1606 = vmatpush1.bf16.xpose.msra.mxu0 0
        %1607 = vmatprep.subr.bf16.mxu0 0
        %1608 = vmatpush1.bf16.xpose.msra.mxu0 0
        %1609 = vmatprep.subr.bf16.mxu0 0
        %1610 = vmatpush1.bf16.xpose.msra.mxu0 0
        %1611 = vmatprep.subr.bf16.mxu0 0
        %1612 = vmatpush1.bf16.xpose.msra.mxu0 0
        %1613 = vmatprep.subr.bf16.mxu0 0
        %1614 = vmatpush1.bf16.xpose.msra.mxu0 0
        %1615 = vmatprep.subr.bf16.mxu0 0
        %1616 = vmatpush1.bf16.xpose.msra.mxu0 0
        %1617 = vmatprep.subr.bf16.mxu0 0
        %1618 = vmatpush1.bf16.xpose.msra.mxu0 0
        %1619 = vmatprep.subr.bf16.mxu0 0
        %1620 = vmatpush1.bf16.xpose.msra.mxu0 0
        %1621 = vmatprep.subr.bf16.mxu0 0
        %1622 = vmatpush1.bf16.xpose.msra.mxu0 0
        %1623 = vmatprep.subr.bf16.mxu0 0
        %1624 = vmatpush1.bf16.xpose.msra.mxu0 0
        %1625 = vmatprep.subr.bf16.mxu0 0
        %1626 = vmatpush1.bf16.xpose.msra.mxu0 0
        %1627 = vmatprep.subr.bf16.mxu0 0
        %1628 = vmatpush1.bf16.xpose.msra.mxu0 0
        %1629 = vmatprep.subr.bf16.mxu0 0
        %1630 = vmatpush1.bf16.xpose.msra.mxu0 0
        %1631 = vmatprep.mubr.bf16.mxu0 0
        %1632 = vmatmul.mubr.bf16.gmra.mrb[0].mxu0 %v1594
        %v1633 = vpop.f32.mrb[0].mxu0
        %v1634 = vadd.f32 %v886, %v1633
        %v1635 = vpop.f32.mrb[0].mxu0
        %v1636 = vpop.f32.mrb[0].mxu0
        %v1637 = vpop.f32.mrb[0].mxu0
        %1638 = vdwg.mxu0
        %1640 = vrot.lane.b32.xlu0 %v1094, 96
        %v1641 = vpop.permute.xlu0 %1640
        %v1643 = vsel %vm1102, %v1094, 0
        %v1646 = vsel %vm1102, %v1641, 0
        %1648 = vmatprep.subr.bf16.mxu0 0
        %1649 = vmatpush1.bf16.xpose.msra.mxu0 %v1646
        %1650 = vmatprep.subr.bf16.mxu0 0
        %1651 = vmatpush1.bf16.xpose.msra.mxu0 0
        %1652 = vmatprep.subr.bf16.mxu0 0
        %1653 = vmatpush1.bf16.xpose.msra.mxu0 0
        %1654 = vmatprep.subr.bf16.mxu0 0
        %1655 = vmatpush1.bf16.xpose.msra.mxu0 0
        %1656 = vmatprep.subr.bf16.mxu0 0
        %1657 = vmatpush1.bf16.xpose.msra.mxu0 0
        %1658 = vmatprep.subr.bf16.mxu0 0
        %1659 = vmatpush1.bf16.xpose.msra.mxu0 0
        %1660 = vmatprep.subr.bf16.mxu0 0
        %1661 = vmatpush1.bf16.xpose.msra.mxu0 0
        %1662 = vmatprep.subr.bf16.mxu0 0
        %1663 = vmatpush1.bf16.xpose.msra.mxu0 0
        %1664 = vmatprep.subr.bf16.mxu0 0
        %1665 = vmatpush1.bf16.xpose.msra.mxu0 0
        %1666 = vmatprep.subr.bf16.mxu0 0
        %1667 = vmatpush1.bf16.xpose.msra.mxu0 0
        %1668 = vmatprep.subr.bf16.mxu0 0
        %1669 = vmatpush1.bf16.xpose.msra.mxu0 0
        %1670 = vmatprep.subr.bf16.mxu0 0
        %1671 = vmatpush1.bf16.xpose.msra.mxu0 0
        %1672 = vmatprep.subr.bf16.mxu0 0
        %1673 = vmatpush1.bf16.xpose.msra.mxu0 0
        %1674 = vmatprep.subr.bf16.mxu0 0
        %1675 = vmatpush1.bf16.xpose.msra.mxu0 0
        %1676 = vmatprep.subr.bf16.mxu0 0
        %1677 = vmatpush1.bf16.xpose.msra.mxu0 0
        %1678 = vmatprep.subr.bf16.mxu0 0
        %1679 = vmatpush1.bf16.xpose.msra.mxu0 0
        %1680 = vmatprep.mubr.bf16.mxu0 0
        %1681 = vmatmul.mubr.bf16.gmra.mrb[0].mxu0 %v1643
        %v1682 = vpop.f32.mrb[0].mxu0
        %v1683 = vadd.f32 %v886, %v1682
        %v1684 = vpop.f32.mrb[0].mxu0
        %v1685 = vpop.f32.mrb[0].mxu0
        %v1686 = vpop.f32.mrb[0].mxu0
        %1687 = vdwg.mxu0
        %1689 = vrot.lane.b32.xlu0 %v1095, 96
        %v1690 = vpop.permute.xlu0 %1689
        %v1692 = vsel %vm1102, %v1095, 0
        %v1695 = vsel %vm1102, %v1690, 0
        %1697 = vmatprep.subr.bf16.mxu0 0
        %1698 = vmatpush1.bf16.xpose.msra.mxu0 %v1695
        %1699 = vmatprep.subr.bf16.mxu0 0
        %1700 = vmatpush1.bf16.xpose.msra.mxu0 0
        %1701 = vmatprep.subr.bf16.mxu0 0
        %1702 = vmatpush1.bf16.xpose.msra.mxu0 0
        %1703 = vmatprep.subr.bf16.mxu0 0
        %1704 = vmatpush1.bf16.xpose.msra.mxu0 0
        %1705 = vmatprep.subr.bf16.mxu0 0
        %1706 = vmatpush1.bf16.xpose.msra.mxu0 0
        %1707 = vmatprep.subr.bf16.mxu0 0
        %1708 = vmatpush1.bf16.xpose.msra.mxu0 0
        %1709 = vmatprep.subr.bf16.mxu0 0
        %1710 = vmatpush1.bf16.xpose.msra.mxu0 0
        %1711 = vmatprep.subr.bf16.mxu0 0
        %1712 = vmatpush1.bf16.xpose.msra.mxu0 0
        %1713 = vmatprep.subr.bf16.mxu0 0
        %1714 = vmatpush1.bf16.xpose.msra.mxu0 0
        %1715 = vmatprep.subr.bf16.mxu0 0
        %1716 = vmatpush1.bf16.xpose.msra.mxu0 0
        %1717 = vmatprep.subr.bf16.mxu0 0
        %1718 = vmatpush1.bf16.xpose.msra.mxu0 0
        %1719 = vmatprep.subr.bf16.mxu0 0
        %1720 = vmatpush1.bf16.xpose.msra.mxu0 0
        %1721 = vmatprep.subr.bf16.mxu0 0
        %1722 = vmatpush1.bf16.xpose.msra.mxu0 0
        %1723 = vmatprep.subr.bf16.mxu0 0
        %1724 = vmatpush1.bf16.xpose.msra.mxu0 0
        %1725 = vmatprep.subr.bf16.mxu0 0
        %1726 = vmatpush1.bf16.xpose.msra.mxu0 0
        %1727 = vmatprep.subr.bf16.mxu0 0
        %1728 = vmatpush1.bf16.xpose.msra.mxu0 0
        %1729 = vmatprep.mubr.bf16.mxu0 0
        %1730 = vmatmul.mubr.bf16.gmra.mrb[0].mxu0 %v1692
        %v1731 = vpop.f32.mrb[0].mxu0
        %v1732 = vadd.f32 %v886, %v1731
        %v1733 = vpop.f32.mrb[0].mxu0
        %v1734 = vpop.f32.mrb[0].mxu0
        %v1735 = vpop.f32.mrb[0].mxu0
        %1736 = vdwg.mxu0
        %1738 = vrot.lane.b32.xlu0 %v1096, 96
        %v1739 = vpop.permute.xlu0 %1738
        %v1741 = vsel %vm1102, %v1096, 0
        %v1744 = vsel %vm1102, %v1739, 0
        %1746 = vmatprep.subr.bf16.mxu0 0
        %1747 = vmatpush1.bf16.xpose.msra.mxu0 %v1744
        %1748 = vmatprep.subr.bf16.mxu0 0
        %1749 = vmatpush1.bf16.xpose.msra.mxu0 0
        %1750 = vmatprep.subr.bf16.mxu0 0
        %1751 = vmatpush1.bf16.xpose.msra.mxu0 0
        %1752 = vmatprep.subr.bf16.mxu0 0
        %1753 = vmatpush1.bf16.xpose.msra.mxu0 0
        %1754 = vmatprep.subr.bf16.mxu0 0
        %1755 = vmatpush1.bf16.xpose.msra.mxu0 0
        %1756 = vmatprep.subr.bf16.mxu0 0
        %1757 = vmatpush1.bf16.xpose.msra.mxu0 0
        %1758 = vmatprep.subr.bf16.mxu0 0
        %1759 = vmatpush1.bf16.xpose.msra.mxu0 0
        %1760 = vmatprep.subr.bf16.mxu0 0
        %1761 = vmatpush1.bf16.xpose.msra.mxu0 0
        %1762 = vmatprep.subr.bf16.mxu0 0
        %1763 = vmatpush1.bf16.xpose.msra.mxu0 0
        %1764 = vmatprep.subr.bf16.mxu0 0
        %1765 = vmatpush1.bf16.xpose.msra.mxu0 0
        %1766 = vmatprep.subr.bf16.mxu0 0
        %1767 = vmatpush1.bf16.xpose.msra.mxu0 0
        %1768 = vmatprep.subr.bf16.mxu0 0
        %1769 = vmatpush1.bf16.xpose.msra.mxu0 0
        %1770 = vmatprep.subr.bf16.mxu0 0
        %1771 = vmatpush1.bf16.xpose.msra.mxu0 0
        %1772 = vmatprep.subr.bf16.mxu0 0
        %1773 = vmatpush1.bf16.xpose.msra.mxu0 0
        %1774 = vmatprep.subr.bf16.mxu0 0
        %1775 = vmatpush1.bf16.xpose.msra.mxu0 0
        %1776 = vmatprep.subr.bf16.mxu0 0
        %1777 = vmatpush1.bf16.xpose.msra.mxu0 0
        %1778 = vmatprep.mubr.bf16.mxu0 0
        %1779 = vmatmul.mubr.bf16.gmra.mrb[0].mxu0 %v1741
        %v1780 = vpop.f32.mrb[0].mxu0
        %v1781 = vadd.f32 %v886, %v1780
        %v1782 = vpop.f32.mrb[0].mxu0
        %v1783 = vpop.f32.mrb[0].mxu0
        %v1784 = vpop.f32.mrb[0].mxu0
        %1785 = vdwg.mxu0
        %1787 = vrot.lane.b32.xlu0 %v1097, 96
        %v1788 = vpop.permute.xlu0 %1787
        %v1790 = vsel %vm1102, %v1097, 0
        %v1793 = vsel %vm1102, %v1788, 0
        %1795 = vmatprep.subr.bf16.mxu0 0
        %1796 = vmatpush1.bf16.xpose.msra.mxu0 %v1793
        %1797 = vmatprep.subr.bf16.mxu0 0
        %1798 = vmatpush1.bf16.xpose.msra.mxu0 0
        %1799 = vmatprep.subr.bf16.mxu0 0
        %1800 = vmatpush1.bf16.xpose.msra.mxu0 0
        %1801 = vmatprep.subr.bf16.mxu0 0
        %1802 = vmatpush1.bf16.xpose.msra.mxu0 0
        %1803 = vmatprep.subr.bf16.mxu0 0
        %1804 = vmatpush1.bf16.xpose.msra.mxu0 0
        %1805 = vmatprep.subr.bf16.mxu0 0
        %1806 = vmatpush1.bf16.xpose.msra.mxu0 0
        %1807 = vmatprep.subr.bf16.mxu0 0
        %1808 = vmatpush1.bf16.xpose.msra.mxu0 0
        %1809 = vmatprep.subr.bf16.mxu0 0
        %1810 = vmatpush1.bf16.xpose.msra.mxu0 0
        %1811 = vmatprep.subr.bf16.mxu0 0
        %1812 = vmatpush1.bf16.xpose.msra.mxu0 0
        %1813 = vmatprep.subr.bf16.mxu0 0
        %1814 = vmatpush1.bf16.xpose.msra.mxu0 0
        %1815 = vmatprep.subr.bf16.mxu0 0
        %1816 = vmatpush1.bf16.xpose.msra.mxu0 0
        %1817 = vmatprep.subr.bf16.mxu0 0
        %1818 = vmatpush1.bf16.xpose.msra.mxu0 0
        %1819 = vmatprep.subr.bf16.mxu0 0
        %1820 = vmatpush1.bf16.xpose.msra.mxu0 0
        %1821 = vmatprep.subr.bf16.mxu0 0
        %1822 = vmatpush1.bf16.xpose.msra.mxu0 0
        %1823 = vmatprep.subr.bf16.mxu0 0
        %1824 = vmatpush1.bf16.xpose.msra.mxu0 0
        %1825 = vmatprep.subr.bf16.mxu0 0
        %1826 = vmatpush1.bf16.xpose.msra.mxu0 0
        %1827 = vmatprep.mubr.bf16.mxu0 0
        %1828 = vmatmul.mubr.bf16.gmra.mrb[0].mxu0 %v1790
        %v1829 = vpop.f32.mrb[0].mxu0
        %v1830 = vadd.f32 %v886, %v1829
        %v1831 = vpop.f32.mrb[0].mxu0
        %v1832 = vpop.f32.mrb[0].mxu0
        %v1833 = vpop.f32.mrb[0].mxu0
        %1834 = vdwg.mxu0
        %1836 = vrot.lane.b32.xlu0 %v1098, 96
        %v1837 = vpop.permute.xlu0 %1836
        %v1839 = vsel %vm1102, %v1098, 0
        %v1842 = vsel %vm1102, %v1837, 0
        %1844 = vmatprep.subr.bf16.mxu0 0
        %1845 = vmatpush1.bf16.xpose.msra.mxu0 %v1842
        %1846 = vmatprep.subr.bf16.mxu0 0
        %1847 = vmatpush1.bf16.xpose.msra.mxu0 0
        %1848 = vmatprep.subr.bf16.mxu0 0
        %1849 = vmatpush1.bf16.xpose.msra.mxu0 0
        %1850 = vmatprep.subr.bf16.mxu0 0
        %1851 = vmatpush1.bf16.xpose.msra.mxu0 0
        %1852 = vmatprep.subr.bf16.mxu0 0
        %1853 = vmatpush1.bf16.xpose.msra.mxu0 0
        %1854 = vmatprep.subr.bf16.mxu0 0
        %1855 = vmatpush1.bf16.xpose.msra.mxu0 0
        %1856 = vmatprep.subr.bf16.mxu0 0
        %1857 = vmatpush1.bf16.xpose.msra.mxu0 0
        %1858 = vmatprep.subr.bf16.mxu0 0
        %1859 = vmatpush1.bf16.xpose.msra.mxu0 0
        %1860 = vmatprep.subr.bf16.mxu0 0
        %1861 = vmatpush1.bf16.xpose.msra.mxu0 0
        %1862 = vmatprep.subr.bf16.mxu0 0
        %1863 = vmatpush1.bf16.xpose.msra.mxu0 0
        %1864 = vmatprep.subr.bf16.mxu0 0
        %1865 = vmatpush1.bf16.xpose.msra.mxu0 0
        %1866 = vmatprep.subr.bf16.mxu0 0
        %1867 = vmatpush1.bf16.xpose.msra.mxu0 0
        %1868 = vmatprep.subr.bf16.mxu0 0
        %1869 = vmatpush1.bf16.xpose.msra.mxu0 0
        %1870 = vmatprep.subr.bf16.mxu0 0
        %1871 = vmatpush1.bf16.xpose.msra.mxu0 0
        %1872 = vmatprep.subr.bf16.mxu0 0
        %1873 = vmatpush1.bf16.xpose.msra.mxu0 0
        %1874 = vmatprep.subr.bf16.mxu0 0
        %1875 = vmatpush1.bf16.xpose.msra.mxu0 0
        %1876 = vmatprep.mubr.bf16.mxu0 0
        %1877 = vmatmul.mubr.bf16.gmra.mrb[0].mxu0 %v1839
        %v1878 = vpop.f32.mrb[0].mxu0
        %v1879 = vadd.f32 %v886, %v1878
        %v1880 = vpop.f32.mrb[0].mxu0
        %v1881 = vpop.f32.mrb[0].mxu0
        %v1882 = vpop.f32.mrb[0].mxu0
        %1883 = vdwg.mxu0
        %v1884 = vsel %vm1102, %v1144, -inf
        %1885 = vmax.xlane.f32.xlu0 %v1884
        %v1886 = vpop.xlane.xlu0 %1885
        %v1887 = vsel %vm1102, %v1193, -inf
        %1888 = vmax.xlane.f32.xlu0 %v1887
        %v1889 = vpop.xlane.xlu0 %1888
        %v1890 = vsel %vm1102, %v1242, -inf
        %1891 = vmax.xlane.f32.xlu0 %v1890
        %v1892 = vpop.xlane.xlu0 %1891
        %v1893 = vsel %vm1102, %v1291, -inf
        %1894 = vmax.xlane.f32.xlu0 %v1893
        %v1895 = vpop.xlane.xlu0 %1894
        %v1896 = vsel %vm1102, %v1340, -inf
        %1897 = vmax.xlane.f32.xlu0 %v1896
        %v1898 = vpop.xlane.xlu0 %1897
        %v1899 = vsel %vm1102, %v1389, -inf
        %1900 = vmax.xlane.f32.xlu0 %v1899
        %v1901 = vpop.xlane.xlu0 %1900
        %v1902 = vsel %vm1102, %v1438, -inf
        %1903 = vmax.xlane.f32.xlu0 %v1902
        %v1904 = vpop.xlane.xlu0 %1903
        %v1905 = vsel %vm1102, %v1487, -inf
        %1906 = vmax.xlane.f32.xlu0 %v1905
        %v1907 = vpop.xlane.xlu0 %1906
        %v1908 = vsel %vm1102, %v1536, -inf
        %1909 = vmax.xlane.f32.xlu0 %v1908
        %v1910 = vpop.xlane.xlu0 %1909
        %v1911 = vsel %vm1102, %v1585, -inf
        %1912 = vmax.xlane.f32.xlu0 %v1911
        %v1913 = vpop.xlane.xlu0 %1912
        %v1914 = vsel %vm1102, %v1634, -inf
        %1915 = vmax.xlane.f32.xlu0 %v1914
        %v1916 = vpop.xlane.xlu0 %1915
        %v1917 = vsel %vm1102, %v1683, -inf
        %1918 = vmax.xlane.f32.xlu0 %v1917
        %v1919 = vpop.xlane.xlu0 %1918
        %v1920 = vsel %vm1102, %v1732, -inf
        %1921 = vmax.xlane.f32.xlu0 %v1920
        %v1922 = vpop.xlane.xlu0 %1921
        %v1923 = vsel %vm1102, %v1781, -inf
        %1924 = vmax.xlane.f32.xlu0 %v1923
        %v1925 = vpop.xlane.xlu0 %1924
        %v1926 = vsel %vm1102, %v1830, -inf
        %1927 = vmax.xlane.f32.xlu0 %v1926
        %v1928 = vpop.xlane.xlu0 %1927
        %v1929 = vsel %vm1102, %v1879, -inf
        %1930 = vmax.xlane.f32.xlu0 %v1929
        %v1931 = vpop.xlane.xlu0 %1930
        %v1932 = vsub.f32 %v1144, %v1886
        %v1933 = vsub.f32 %v1193, %v1889
        %v1934 = vsub.f32 %v1242, %v1892
        %v1935 = vsub.f32 %v1291, %v1895
        %v1936 = vsub.f32 %v1340, %v1898
        %v1937 = vsub.f32 %v1389, %v1901
        %v1938 = vsub.f32 %v1438, %v1904
        %v1939 = vsub.f32 %v1487, %v1907
        %v1940 = vsub.f32 %v1536, %v1910
        %v1941 = vsub.f32 %v1585, %v1913
        %v1942 = vsub.f32 %v1634, %v1916
        %v1943 = vsub.f32 %v1683, %v1919
        %v1944 = vsub.f32 %v1732, %v1922
        %v1945 = vsub.f32 %v1781, %v1925
        %v1946 = vsub.f32 %v1830, %v1928
        %v1947 = vsub.f32 %v1879, %v1931
        %v1948 = vmul.f32 %v1932, 1.442695
        %v1949 = vpow.pop %v1948
        %v1950 = vmul.f32 %v1933, 1.442695
        %v1951 = vpow.pop %v1950
        %v1952 = vmul.f32 %v1934, 1.442695
        %v1953 = vpow.pop %v1952
        %v1954 = vmul.f32 %v1935, 1.442695
        %v1955 = vpow.pop %v1954
        %v1956 = vmul.f32 %v1936, 1.442695
        %v1957 = vpow.pop %v1956
        %v1958 = vmul.f32 %v1937, 1.442695
        %v1959 = vpow.pop %v1958
        %v1960 = vmul.f32 %v1938, 1.442695
        %v1961 = vpow.pop %v1960
        %v1962 = vmul.f32 %v1939, 1.442695
        %v1963 = vpow.pop %v1962
        %v1964 = vmul.f32 %v1940, 1.442695
        %v1965 = vpow.pop %v1964
        %v1966 = vmul.f32 %v1941, 1.442695
        %v1967 = vpow.pop %v1966
        %v1968 = vmul.f32 %v1942, 1.442695
        %v1969 = vpow.pop %v1968
        %v1970 = vmul.f32 %v1943, 1.442695
        %v1971 = vpow.pop %v1970
        %v1972 = vmul.f32 %v1944, 1.442695
        %v1973 = vpow.pop %v1972
        %v1974 = vmul.f32 %v1945, 1.442695
        %v1975 = vpow.pop %v1974
        %v1976 = vmul.f32 %v1946, 1.442695
        %v1977 = vpow.pop %v1976
        %v1978 = vmul.f32 %v1947, 1.442695
        %v1979 = vpow.pop %v1978
        %v1980 = vsel %vm1102, %v1949, 0.0
        %1981 = vadd.xlane.f32.xlu0 %v1980
        %v1982 = vpop.xlane.xlu0 %1981
        %v1983 = vsel %vm1102, %v1951, 0.0
        %1984 = vadd.xlane.f32.xlu0 %v1983
        %v1985 = vpop.xlane.xlu0 %1984
        %v1986 = vsel %vm1102, %v1953, 0.0
        %1987 = vadd.xlane.f32.xlu0 %v1986
        %v1988 = vpop.xlane.xlu0 %1987
        %v1989 = vsel %vm1102, %v1955, 0.0
        %1990 = vadd.xlane.f32.xlu0 %v1989
        %v1991 = vpop.xlane.xlu0 %1990
        %v1992 = vsel %vm1102, %v1957, 0.0
        %1993 = vadd.xlane.f32.xlu0 %v1992
        %v1994 = vpop.xlane.xlu0 %1993
        %v1995 = vsel %vm1102, %v1959, 0.0
        %1996 = vadd.xlane.f32.xlu0 %v1995
        %v1997 = vpop.xlane.xlu0 %1996
        %v1998 = vsel %vm1102, %v1961, 0.0
        %1999 = vadd.xlane.f32.xlu0 %v1998
        %v2000 = vpop.xlane.xlu0 %1999
        %v2001 = vsel %vm1102, %v1963, 0.0
        %2002 = vadd.xlane.f32.xlu0 %v2001
        %v2003 = vpop.xlane.xlu0 %2002
        %v2004 = vsel %vm1102, %v1965, 0.0
        %2005 = vadd.xlane.f32.xlu0 %v2004
        %v2006 = vpop.xlane.xlu0 %2005
        %v2007 = vsel %vm1102, %v1967, 0.0
        %2008 = vadd.xlane.f32.xlu0 %v2007
        %v2009 = vpop.xlane.xlu0 %2008
        %v2010 = vsel %vm1102, %v1969, 0.0
        %2011 = vadd.xlane.f32.xlu0 %v2010
        %v2012 = vpop.xlane.xlu0 %2011
        %v2013 = vsel %vm1102, %v1971, 0.0
        %2014 = vadd.xlane.f32.xlu0 %v2013
        %v2015 = vpop.xlane.xlu0 %2014
        %v2016 = vsel %vm1102, %v1973, 0.0
        %2017 = vadd.xlane.f32.xlu0 %v2016
        %v2018 = vpop.xlane.xlu0 %2017
        %v2019 = vsel %vm1102, %v1975, 0.0
        %2020 = vadd.xlane.f32.xlu0 %v2019
        %v2021 = vpop.xlane.xlu0 %2020
        %v2022 = vsel %vm1102, %v1977, 0.0
        %2023 = vadd.xlane.f32.xlu0 %v2022
        %v2024 = vpop.xlane.xlu0 %2023
        %v2025 = vsel %vm1102, %v1979, 0.0
        %2026 = vadd.xlane.f32.xlu0 %v2025
        %v2027 = vpop.xlane.xlu0 %2026
        %v2028 = vrcp.pop %v1982
        %v2029 = vrcp.pop %v1985
        %v2030 = vrcp.pop %v1988
        %v2031 = vrcp.pop %v1991
        %v2032 = vrcp.pop %v1994
        %v2033 = vrcp.pop %v1997
        %v2034 = vrcp.pop %v2000
        %v2035 = vrcp.pop %v2003
        %v2036 = vrcp.pop %v2006
        %v2037 = vrcp.pop %v2009
        %v2038 = vrcp.pop %v2012
        %v2039 = vrcp.pop %v2015
        %v2040 = vrcp.pop %v2018
        %v2041 = vrcp.pop %v2021
        %v2042 = vrcp.pop %v2024
        %v2043 = vrcp.pop %v2027
        %v2044 = vmul.f32 %v1949, %v2028
        %v2045 = vmul.f32 %v1951, %v2029
        %v2046 = vmul.f32 %v1953, %v2030
        %v2047 = vmul.f32 %v1955, %v2031
        %v2048 = vmul.f32 %v1957, %v2032
        %v2049 = vmul.f32 %v1959, %v2033
        %v2050 = vmul.f32 %v1961, %v2034
        %v2051 = vmul.f32 %v1963, %v2035
        %v2052 = vmul.f32 %v1965, %v2036
        %v2053 = vmul.f32 %v1967, %v2037
        %v2054 = vmul.f32 %v1969, %v2038
        %v2055 = vmul.f32 %v1971, %v2039
        %v2056 = vmul.f32 %v1973, %v2040
        %v2057 = vmul.f32 %v1975, %v2041
        %v2058 = vmul.f32 %v1977, %v2042
        %v2059 = vmul.f32 %v1979, %v2043
        %v2060 = vpack.c.bf16 %v2044, %v2044
        %v2061 = vpack.c.bf16 %v2045, %v2045
        %v2062 = vpack.c.bf16 %v2046, %v2046
        %v2063 = vpack.c.bf16 %v2047, %v2047
        %v2064 = vpack.c.bf16 %v2048, %v2048
        %v2065 = vpack.c.bf16 %v2049, %v2049
        %v2066 = vpack.c.bf16 %v2050, %v2050
        %v2067 = vpack.c.bf16 %v2051, %v2051
        %v2068 = vpack.c.bf16 %v2052, %v2052
        %v2069 = vpack.c.bf16 %v2053, %v2053
        %v2070 = vpack.c.bf16 %v2054, %v2054
        %v2071 = vpack.c.bf16 %v2055, %v2055
        %v2072 = vpack.c.bf16 %v2056, %v2056
        %v2073 = vpack.c.bf16 %v2057, %v2057
        %v2074 = vpack.c.bf16 %v2058, %v2058
        %v2075 = vpack.c.bf16 %v2059, %v2059
        %2076 = vrot.lane.b32.xlu0 %v1083, 64
        %v2077 = vpop.permute.xlu0 %2076
        %v2079 = vsel %vm1102, %v2060, 0
        %vm2081 = vcmask 1043456
        %v2083 = vsel %vm2081, %v2077, 0
        %2085 = vmatprep.subr.bf16.mxu0 0
        %2086 = vmatpush1.bf16.msra.mxu0 %v2083
        %2087 = vmatprep.subr.bf16.mxu0 0
        %2088 = vmatpush1.bf16.msra.mxu0 0
        %2089 = vmatprep.subr.bf16.mxu0 0
        %2090 = vmatpush1.bf16.msra.mxu0 0
        %2091 = vmatprep.subr.bf16.mxu0 0
        %2092 = vmatpush1.bf16.msra.mxu0 0
        %2093 = vmatprep.subr.bf16.mxu0 0
        %2094 = vmatpush1.bf16.msra.mxu0 0
        %2095 = vmatprep.subr.bf16.mxu0 0
        %2096 = vmatpush1.bf16.msra.mxu0 0
        %2097 = vmatprep.subr.bf16.mxu0 0
        %2098 = vmatpush1.bf16.msra.mxu0 0
        %2099 = vmatprep.subr.bf16.mxu0 0
        %2100 = vmatpush1.bf16.msra.mxu0 0
        %2101 = vmatprep.subr.bf16.mxu0 0
        %2102 = vmatpush1.bf16.msra.mxu0 0
        %2103 = vmatprep.subr.bf16.mxu0 0
        %2104 = vmatpush1.bf16.msra.mxu0 0
        %2105 = vmatprep.subr.bf16.mxu0 0
        %2106 = vmatpush1.bf16.msra.mxu0 0
        %2107 = vmatprep.subr.bf16.mxu0 0
        %2108 = vmatpush1.bf16.msra.mxu0 0
        %2109 = vmatprep.subr.bf16.mxu0 0
        %2110 = vmatpush1.bf16.msra.mxu0 0
        %2111 = vmatprep.subr.bf16.mxu0 0
        %2112 = vmatpush1.bf16.msra.mxu0 0
        %2113 = vmatprep.subr.bf16.mxu0 0
        %2114 = vmatpush1.bf16.msra.mxu0 0
        %2115 = vmatprep.subr.bf16.mxu0 0
        %2116 = vmatpush1.bf16.msra.mxu0 0
        %2117 = vmatprep.mubr.bf16.mxu0 0
        %2118 = vmatmul.mubr.bf16.gmra.mrb[0].mxu0 %v2079
        %v2119 = vpop.f32.mrb[0].mxu0
        %v2120 = vadd.f32 0.0, %v2119
        %v2121 = vpop.f32.mrb[0].mxu0
        %v2122 = vpop.f32.mrb[0].mxu0
        %v2123 = vpop.f32.mrb[0].mxu0
        %2124 = vdwg.mxu0
        %2125 = vrot.lane.b32.xlu0 %v1084, 64
        %v2126 = vpop.permute.xlu0 %2125
        %v2128 = vsel %vm1102, %v2061, 0
        %v2131 = vsel %vm2081, %v2126, 0
        %2133 = vmatprep.subr.bf16.mxu0 0
        %2134 = vmatpush1.bf16.msra.mxu0 %v2131
        %2135 = vmatprep.subr.bf16.mxu0 0
        %2136 = vmatpush1.bf16.msra.mxu0 0
        %2137 = vmatprep.subr.bf16.mxu0 0
        %2138 = vmatpush1.bf16.msra.mxu0 0
        %2139 = vmatprep.subr.bf16.mxu0 0
        %2140 = vmatpush1.bf16.msra.mxu0 0
        %2141 = vmatprep.subr.bf16.mxu0 0
        %2142 = vmatpush1.bf16.msra.mxu0 0
        %2143 = vmatprep.subr.bf16.mxu0 0
        %2144 = vmatpush1.bf16.msra.mxu0 0
        %2145 = vmatprep.subr.bf16.mxu0 0
        %2146 = vmatpush1.bf16.msra.mxu0 0
        %2147 = vmatprep.subr.bf16.mxu0 0
        %2148 = vmatpush1.bf16.msra.mxu0 0
        %2149 = vmatprep.subr.bf16.mxu0 0
        %2150 = vmatpush1.bf16.msra.mxu0 0
        %2151 = vmatprep.subr.bf16.mxu0 0
        %2152 = vmatpush1.bf16.msra.mxu0 0
        %2153 = vmatprep.subr.bf16.mxu0 0
        %2154 = vmatpush1.bf16.msra.mxu0 0
        %2155 = vmatprep.subr.bf16.mxu0 0
        %2156 = vmatpush1.bf16.msra.mxu0 0
        %2157 = vmatprep.subr.bf16.mxu0 0
        %2158 = vmatpush1.bf16.msra.mxu0 0
        %2159 = vmatprep.subr.bf16.mxu0 0
        %2160 = vmatpush1.bf16.msra.mxu0 0
        %2161 = vmatprep.subr.bf16.mxu0 0
        %2162 = vmatpush1.bf16.msra.mxu0 0
        %2163 = vmatprep.subr.bf16.mxu0 0
        %2164 = vmatpush1.bf16.msra.mxu0 0
        %2165 = vmatprep.mubr.bf16.mxu0 0
        %2166 = vmatmul.mubr.bf16.gmra.mrb[0].mxu0 %v2128
        %v2167 = vpop.f32.mrb[0].mxu0
        %v2168 = vadd.f32 0.0, %v2167
        %v2169 = vpop.f32.mrb[0].mxu0
        %v2170 = vpop.f32.mrb[0].mxu0
        %v2171 = vpop.f32.mrb[0].mxu0
        %2172 = vdwg.mxu0
        %2173 = vrot.lane.b32.xlu0 %v1085, 64
        %v2174 = vpop.permute.xlu0 %2173
        %v2176 = vsel %vm1102, %v2062, 0
        %v2179 = vsel %vm2081, %v2174, 0
        %2181 = vmatprep.subr.bf16.mxu0 0
        %2182 = vmatpush1.bf16.msra.mxu0 %v2179
        %2183 = vmatprep.subr.bf16.mxu0 0
        %2184 = vmatpush1.bf16.msra.mxu0 0
        %2185 = vmatprep.subr.bf16.mxu0 0
        %2186 = vmatpush1.bf16.msra.mxu0 0
        %2187 = vmatprep.subr.bf16.mxu0 0
        %2188 = vmatpush1.bf16.msra.mxu0 0
        %2189 = vmatprep.subr.bf16.mxu0 0
        %2190 = vmatpush1.bf16.msra.mxu0 0
        %2191 = vmatprep.subr.bf16.mxu0 0
        %2192 = vmatpush1.bf16.msra.mxu0 0
        %2193 = vmatprep.subr.bf16.mxu0 0
        %2194 = vmatpush1.bf16.msra.mxu0 0
        %2195 = vmatprep.subr.bf16.mxu0 0
        %2196 = vmatpush1.bf16.msra.mxu0 0
        %2197 = vmatprep.subr.bf16.mxu0 0
        %2198 = vmatpush1.bf16.msra.mxu0 0
        %2199 = vmatprep.subr.bf16.mxu0 0
        %2200 = vmatpush1.bf16.msra.mxu0 0
        %2201 = vmatprep.subr.bf16.mxu0 0
        %2202 = vmatpush1.bf16.msra.mxu0 0
        %2203 = vmatprep.subr.bf16.mxu0 0
        %2204 = vmatpush1.bf16.msra.mxu0 0
        %2205 = vmatprep.subr.bf16.mxu0 0
        %2206 = vmatpush1.bf16.msra.mxu0 0
        %2207 = vmatprep.subr.bf16.mxu0 0
        %2208 = vmatpush1.bf16.msra.mxu0 0
        %2209 = vmatprep.subr.bf16.mxu0 0
        %2210 = vmatpush1.bf16.msra.mxu0 0
        %2211 = vmatprep.subr.bf16.mxu0 0
        %2212 = vmatpush1.bf16.msra.mxu0 0
        %2213 = vmatprep.mubr.bf16.mxu0 0
        %2214 = vmatmul.mubr.bf16.gmra.mrb[0].mxu0 %v2176
        %v2215 = vpop.f32.mrb[0].mxu0
        %v2216 = vadd.f32 0.0, %v2215
        %v2217 = vpop.f32.mrb[0].mxu0
        %v2218 = vpop.f32.mrb[0].mxu0
        %v2219 = vpop.f32.mrb[0].mxu0
        %2220 = vdwg.mxu0
        %2221 = vrot.lane.b32.xlu0 %v1086, 64
        %v2222 = vpop.permute.xlu0 %2221
        %v2224 = vsel %vm1102, %v2063, 0
        %v2227 = vsel %vm2081, %v2222, 0
        %2229 = vmatprep.subr.bf16.mxu0 0
        %2230 = vmatpush1.bf16.msra.mxu0 %v2227
        %2231 = vmatprep.subr.bf16.mxu0 0
        %2232 = vmatpush1.bf16.msra.mxu0 0
        %2233 = vmatprep.subr.bf16.mxu0 0
        %2234 = vmatpush1.bf16.msra.mxu0 0
        %2235 = vmatprep.subr.bf16.mxu0 0
        %2236 = vmatpush1.bf16.msra.mxu0 0
        %2237 = vmatprep.subr.bf16.mxu0 0
        %2238 = vmatpush1.bf16.msra.mxu0 0
        %2239 = vmatprep.subr.bf16.mxu0 0
        %2240 = vmatpush1.bf16.msra.mxu0 0
        %2241 = vmatprep.subr.bf16.mxu0 0
        %2242 = vmatpush1.bf16.msra.mxu0 0
        %2243 = vmatprep.subr.bf16.mxu0 0
        %2244 = vmatpush1.bf16.msra.mxu0 0
        %2245 = vmatprep.subr.bf16.mxu0 0
        %2246 = vmatpush1.bf16.msra.mxu0 0
        %2247 = vmatprep.subr.bf16.mxu0 0
        %2248 = vmatpush1.bf16.msra.mxu0 0
        %2249 = vmatprep.subr.bf16.mxu0 0
        %2250 = vmatpush1.bf16.msra.mxu0 0
        %2251 = vmatprep.subr.bf16.mxu0 0
        %2252 = vmatpush1.bf16.msra.mxu0 0
        %2253 = vmatprep.subr.bf16.mxu0 0
        %2254 = vmatpush1.bf16.msra.mxu0 0
        %2255 = vmatprep.subr.bf16.mxu0 0
        %2256 = vmatpush1.bf16.msra.mxu0 0
        %2257 = vmatprep.subr.bf16.mxu0 0
        %2258 = vmatpush1.bf16.msra.mxu0 0
        %2259 = vmatprep.subr.bf16.mxu0 0
        %2260 = vmatpush1.bf16.msra.mxu0 0
        %2261 = vmatprep.mubr.bf16.mxu0 0
        %2262 = vmatmul.mubr.bf16.gmra.mrb[0].mxu0 %v2224
        %v2263 = vpop.f32.mrb[0].mxu0
        %v2264 = vadd.f32 0.0, %v2263
        %v2265 = vpop.f32.mrb[0].mxu0
        %v2266 = vpop.f32.mrb[0].mxu0
        %v2267 = vpop.f32.mrb[0].mxu0
        %2268 = vdwg.mxu0
        %2269 = vrot.lane.b32.xlu0 %v1087, 64
        %v2270 = vpop.permute.xlu0 %2269
        %v2272 = vsel %vm1102, %v2064, 0
        %v2275 = vsel %vm2081, %v2270, 0
        %2277 = vmatprep.subr.bf16.mxu0 0
        %2278 = vmatpush1.bf16.msra.mxu0 %v2275
        %2279 = vmatprep.subr.bf16.mxu0 0
        %2280 = vmatpush1.bf16.msra.mxu0 0
        %2281 = vmatprep.subr.bf16.mxu0 0
        %2282 = vmatpush1.bf16.msra.mxu0 0
        %2283 = vmatprep.subr.bf16.mxu0 0
        %2284 = vmatpush1.bf16.msra.mxu0 0
        %2285 = vmatprep.subr.bf16.mxu0 0
        %2286 = vmatpush1.bf16.msra.mxu0 0
        %2287 = vmatprep.subr.bf16.mxu0 0
        %2288 = vmatpush1.bf16.msra.mxu0 0
        %2289 = vmatprep.subr.bf16.mxu0 0
        %2290 = vmatpush1.bf16.msra.mxu0 0
        %2291 = vmatprep.subr.bf16.mxu0 0
        %2292 = vmatpush1.bf16.msra.mxu0 0
        %2293 = vmatprep.subr.bf16.mxu0 0
        %2294 = vmatpush1.bf16.msra.mxu0 0
        %2295 = vmatprep.subr.bf16.mxu0 0
        %2296 = vmatpush1.bf16.msra.mxu0 0
        %2297 = vmatprep.subr.bf16.mxu0 0
        %2298 = vmatpush1.bf16.msra.mxu0 0
        %2299 = vmatprep.subr.bf16.mxu0 0
        %2300 = vmatpush1.bf16.msra.mxu0 0
        %2301 = vmatprep.subr.bf16.mxu0 0
        %2302 = vmatpush1.bf16.msra.mxu0 0
        %2303 = vmatprep.subr.bf16.mxu0 0
        %2304 = vmatpush1.bf16.msra.mxu0 0
        %2305 = vmatprep.subr.bf16.mxu0 0
        %2306 = vmatpush1.bf16.msra.mxu0 0
        %2307 = vmatprep.subr.bf16.mxu0 0
        %2308 = vmatpush1.bf16.msra.mxu0 0
        %2309 = vmatprep.mubr.bf16.mxu0 0
        %2310 = vmatmul.mubr.bf16.gmra.mrb[0].mxu0 %v2272
        %v2311 = vpop.f32.mrb[0].mxu0
        %v2312 = vadd.f32 0.0, %v2311
        %v2313 = vpop.f32.mrb[0].mxu0
        %v2314 = vpop.f32.mrb[0].mxu0
        %v2315 = vpop.f32.mrb[0].mxu0
        %2316 = vdwg.mxu0
        %2317 = vrot.lane.b32.xlu0 %v1088, 64
        %v2318 = vpop.permute.xlu0 %2317
        %v2320 = vsel %vm1102, %v2065, 0
        %v2323 = vsel %vm2081, %v2318, 0
        %2325 = vmatprep.subr.bf16.mxu0 0
        %2326 = vmatpush1.bf16.msra.mxu0 %v2323
        %2327 = vmatprep.subr.bf16.mxu0 0
        %2328 = vmatpush1.bf16.msra.mxu0 0
        %2329 = vmatprep.subr.bf16.mxu0 0
        %2330 = vmatpush1.bf16.msra.mxu0 0
        %2331 = vmatprep.subr.bf16.mxu0 0
        %2332 = vmatpush1.bf16.msra.mxu0 0
        %2333 = vmatprep.subr.bf16.mxu0 0
        %2334 = vmatpush1.bf16.msra.mxu0 0
        %2335 = vmatprep.subr.bf16.mxu0 0
        %2336 = vmatpush1.bf16.msra.mxu0 0
        %2337 = vmatprep.subr.bf16.mxu0 0
        %2338 = vmatpush1.bf16.msra.mxu0 0
        %2339 = vmatprep.subr.bf16.mxu0 0
        %2340 = vmatpush1.bf16.msra.mxu0 0
        %2341 = vmatprep.subr.bf16.mxu0 0
        %2342 = vmatpush1.bf16.msra.mxu0 0
        %2343 = vmatprep.subr.bf16.mxu0 0
        %2344 = vmatpush1.bf16.msra.mxu0 0
        %2345 = vmatprep.subr.bf16.mxu0 0
        %2346 = vmatpush1.bf16.msra.mxu0 0
        %2347 = vmatprep.subr.bf16.mxu0 0
        %2348 = vmatpush1.bf16.msra.mxu0 0
        %2349 = vmatprep.subr.bf16.mxu0 0
        %2350 = vmatpush1.bf16.msra.mxu0 0
        %2351 = vmatprep.subr.bf16.mxu0 0
        %2352 = vmatpush1.bf16.msra.mxu0 0
        %2353 = vmatprep.subr.bf16.mxu0 0
        %2354 = vmatpush1.bf16.msra.mxu0 0
        %2355 = vmatprep.subr.bf16.mxu0 0
        %2356 = vmatpush1.bf16.msra.mxu0 0
        %2357 = vmatprep.mubr.bf16.mxu0 0
        %2358 = vmatmul.mubr.bf16.gmra.mrb[0].mxu0 %v2320
        %v2359 = vpop.f32.mrb[0].mxu0
        %v2360 = vadd.f32 0.0, %v2359
        %v2361 = vpop.f32.mrb[0].mxu0
        %v2362 = vpop.f32.mrb[0].mxu0
        %v2363 = vpop.f32.mrb[0].mxu0
        %2364 = vdwg.mxu0
        %2365 = vrot.lane.b32.xlu0 %v1089, 64
        %v2366 = vpop.permute.xlu0 %2365
        %v2368 = vsel %vm1102, %v2066, 0
        %v2371 = vsel %vm2081, %v2366, 0
        %2373 = vmatprep.subr.bf16.mxu0 0
        %2374 = vmatpush1.bf16.msra.mxu0 %v2371
        %2375 = vmatprep.subr.bf16.mxu0 0
        %2376 = vmatpush1.bf16.msra.mxu0 0
        %2377 = vmatprep.subr.bf16.mxu0 0
        %2378 = vmatpush1.bf16.msra.mxu0 0
        %2379 = vmatprep.subr.bf16.mxu0 0
        %2380 = vmatpush1.bf16.msra.mxu0 0
        %2381 = vmatprep.subr.bf16.mxu0 0
        %2382 = vmatpush1.bf16.msra.mxu0 0
        %2383 = vmatprep.subr.bf16.mxu0 0
        %2384 = vmatpush1.bf16.msra.mxu0 0
        %2385 = vmatprep.subr.bf16.mxu0 0
        %2386 = vmatpush1.bf16.msra.mxu0 0
        %2387 = vmatprep.subr.bf16.mxu0 0
        %2388 = vmatpush1.bf16.msra.mxu0 0
        %2389 = vmatprep.subr.bf16.mxu0 0
        %2390 = vmatpush1.bf16.msra.mxu0 0
        %2391 = vmatprep.subr.bf16.mxu0 0
        %2392 = vmatpush1.bf16.msra.mxu0 0
        %2393 = vmatprep.subr.bf16.mxu0 0
        %2394 = vmatpush1.bf16.msra.mxu0 0
        %2395 = vmatprep.subr.bf16.mxu0 0
        %2396 = vmatpush1.bf16.msra.mxu0 0
        %2397 = vmatprep.subr.bf16.mxu0 0
        %2398 = vmatpush1.bf16.msra.mxu0 0
        %2399 = vmatprep.subr.bf16.mxu0 0
        %2400 = vmatpush1.bf16.msra.mxu0 0
        %2401 = vmatprep.subr.bf16.mxu0 0
        %2402 = vmatpush1.bf16.msra.mxu0 0
        %2403 = vmatprep.subr.bf16.mxu0 0
        %2404 = vmatpush1.bf16.msra.mxu0 0
        %2405 = vmatprep.mubr.bf16.mxu0 0
        %2406 = vmatmul.mubr.bf16.gmra.mrb[0].mxu0 %v2368
        %v2407 = vpop.f32.mrb[0].mxu0
        %v2408 = vadd.f32 0.0, %v2407
        %v2409 = vpop.f32.mrb[0].mxu0
        %v2410 = vpop.f32.mrb[0].mxu0
        %v2411 = vpop.f32.mrb[0].mxu0
        %2412 = vdwg.mxu0
        %2413 = vrot.lane.b32.xlu0 %v1090, 64
        %v2414 = vpop.permute.xlu0 %2413
        %v2416 = vsel %vm1102, %v2067, 0
        %v2419 = vsel %vm2081, %v2414, 0
        %2421 = vmatprep.subr.bf16.mxu0 0
        %2422 = vmatpush1.bf16.msra.mxu0 %v2419
        %2423 = vmatprep.subr.bf16.mxu0 0
        %2424 = vmatpush1.bf16.msra.mxu0 0
        %2425 = vmatprep.subr.bf16.mxu0 0
        %2426 = vmatpush1.bf16.msra.mxu0 0
        %2427 = vmatprep.subr.bf16.mxu0 0
        %2428 = vmatpush1.bf16.msra.mxu0 0
        %2429 = vmatprep.subr.bf16.mxu0 0
        %2430 = vmatpush1.bf16.msra.mxu0 0
        %2431 = vmatprep.subr.bf16.mxu0 0
        %2432 = vmatpush1.bf16.msra.mxu0 0
        %2433 = vmatprep.subr.bf16.mxu0 0
        %2434 = vmatpush1.bf16.msra.mxu0 0
        %2435 = vmatprep.subr.bf16.mxu0 0
        %2436 = vmatpush1.bf16.msra.mxu0 0
        %2437 = vmatprep.subr.bf16.mxu0 0
        %2438 = vmatpush1.bf16.msra.mxu0 0
        %2439 = vmatprep.subr.bf16.mxu0 0
        %2440 = vmatpush1.bf16.msra.mxu0 0
        %2441 = vmatprep.subr.bf16.mxu0 0
        %2442 = vmatpush1.bf16.msra.mxu0 0
        %2443 = vmatprep.subr.bf16.mxu0 0
        %2444 = vmatpush1.bf16.msra.mxu0 0
        %2445 = vmatprep.subr.bf16.mxu0 0
        %2446 = vmatpush1.bf16.msra.mxu0 0
        %2447 = vmatprep.subr.bf16.mxu0 0
        %2448 = vmatpush1.bf16.msra.mxu0 0
        %2449 = vmatprep.subr.bf16.mxu0 0
        %2450 = vmatpush1.bf16.msra.mxu0 0
        %2451 = vmatprep.subr.bf16.mxu0 0
        %2452 = vmatpush1.bf16.msra.mxu0 0
        %2453 = vmatprep.mubr.bf16.mxu0 0
        %2454 = vmatmul.mubr.bf16.gmra.mrb[0].mxu0 %v2416
        %v2455 = vpop.f32.mrb[0].mxu0
        %v2456 = vadd.f32 0.0, %v2455
        %v2457 = vpop.f32.mrb[0].mxu0
        %v2458 = vpop.f32.mrb[0].mxu0
        %v2459 = vpop.f32.mrb[0].mxu0
        %2460 = vdwg.mxu0
        %2461 = vrot.lane.b32.xlu0 %v1091, 64
        %v2462 = vpop.permute.xlu0 %2461
        %v2464 = vsel %vm1102, %v2068, 0
        %v2467 = vsel %vm2081, %v2462, 0
        %2469 = vmatprep.subr.bf16.mxu0 0
        %2470 = vmatpush1.bf16.msra.mxu0 %v2467
        %2471 = vmatprep.subr.bf16.mxu0 0
        %2472 = vmatpush1.bf16.msra.mxu0 0
        %2473 = vmatprep.subr.bf16.mxu0 0
        %2474 = vmatpush1.bf16.msra.mxu0 0
        %2475 = vmatprep.subr.bf16.mxu0 0
        %2476 = vmatpush1.bf16.msra.mxu0 0
        %2477 = vmatprep.subr.bf16.mxu0 0
        %2478 = vmatpush1.bf16.msra.mxu0 0
        %2479 = vmatprep.subr.bf16.mxu0 0
        %2480 = vmatpush1.bf16.msra.mxu0 0
        %2481 = vmatprep.subr.bf16.mxu0 0
        %2482 = vmatpush1.bf16.msra.mxu0 0
        %2483 = vmatprep.subr.bf16.mxu0 0
        %2484 = vmatpush1.bf16.msra.mxu0 0
        %2485 = vmatprep.subr.bf16.mxu0 0
        %2486 = vmatpush1.bf16.msra.mxu0 0
        %2487 = vmatprep.subr.bf16.mxu0 0
        %2488 = vmatpush1.bf16.msra.mxu0 0
        %2489 = vmatprep.subr.bf16.mxu0 0
        %2490 = vmatpush1.bf16.msra.mxu0 0
        %2491 = vmatprep.subr.bf16.mxu0 0
        %2492 = vmatpush1.bf16.msra.mxu0 0
        %2493 = vmatprep.subr.bf16.mxu0 0
        %2494 = vmatpush1.bf16.msra.mxu0 0
        %2495 = vmatprep.subr.bf16.mxu0 0
        %2496 = vmatpush1.bf16.msra.mxu0 0
        %2497 = vmatprep.subr.bf16.mxu0 0
        %2498 = vmatpush1.bf16.msra.mxu0 0
        %2499 = vmatprep.subr.bf16.mxu0 0
        %2500 = vmatpush1.bf16.msra.mxu0 0
        %2501 = vmatprep.mubr.bf16.mxu0 0
        %2502 = vmatmul.mubr.bf16.gmra.mrb[0].mxu0 %v2464
        %v2503 = vpop.f32.mrb[0].mxu0
        %v2504 = vadd.f32 0.0, %v2503
        %v2505 = vpop.f32.mrb[0].mxu0
        %v2506 = vpop.f32.mrb[0].mxu0
        %v2507 = vpop.f32.mrb[0].mxu0
        %2508 = vdwg.mxu0
        %2509 = vrot.lane.b32.xlu0 %v1092, 64
        %v2510 = vpop.permute.xlu0 %2509
        %v2512 = vsel %vm1102, %v2069, 0
        %v2515 = vsel %vm2081, %v2510, 0
        %2517 = vmatprep.subr.bf16.mxu0 0
        %2518 = vmatpush1.bf16.msra.mxu0 %v2515
        %2519 = vmatprep.subr.bf16.mxu0 0
        %2520 = vmatpush1.bf16.msra.mxu0 0
        %2521 = vmatprep.subr.bf16.mxu0 0
        %2522 = vmatpush1.bf16.msra.mxu0 0
        %2523 = vmatprep.subr.bf16.mxu0 0
        %2524 = vmatpush1.bf16.msra.mxu0 0
        %2525 = vmatprep.subr.bf16.mxu0 0
        %2526 = vmatpush1.bf16.msra.mxu0 0
        %2527 = vmatprep.subr.bf16.mxu0 0
        %2528 = vmatpush1.bf16.msra.mxu0 0
        %2529 = vmatprep.subr.bf16.mxu0 0
        %2530 = vmatpush1.bf16.msra.mxu0 0
        %2531 = vmatprep.subr.bf16.mxu0 0
        %2532 = vmatpush1.bf16.msra.mxu0 0
        %2533 = vmatprep.subr.bf16.mxu0 0
        %2534 = vmatpush1.bf16.msra.mxu0 0
        %2535 = vmatprep.subr.bf16.mxu0 0
        %2536 = vmatpush1.bf16.msra.mxu0 0
        %2537 = vmatprep.subr.bf16.mxu0 0
        %2538 = vmatpush1.bf16.msra.mxu0 0
        %2539 = vmatprep.subr.bf16.mxu0 0
        %2540 = vmatpush1.bf16.msra.mxu0 0
        %2541 = vmatprep.subr.bf16.mxu0 0
        %2542 = vmatpush1.bf16.msra.mxu0 0
        %2543 = vmatprep.subr.bf16.mxu0 0
        %2544 = vmatpush1.bf16.msra.mxu0 0
        %2545 = vmatprep.subr.bf16.mxu0 0
        %2546 = vmatpush1.bf16.msra.mxu0 0
        %2547 = vmatprep.subr.bf16.mxu0 0
        %2548 = vmatpush1.bf16.msra.mxu0 0
        %2549 = vmatprep.mubr.bf16.mxu0 0
        %2550 = vmatmul.mubr.bf16.gmra.mrb[0].mxu0 %v2512
        %v2551 = vpop.f32.mrb[0].mxu0
        %v2552 = vadd.f32 0.0, %v2551
        %v2553 = vpop.f32.mrb[0].mxu0
        %v2554 = vpop.f32.mrb[0].mxu0
        %v2555 = vpop.f32.mrb[0].mxu0
        %2556 = vdwg.mxu0
        %2557 = vrot.lane.b32.xlu0 %v1093, 64
        %v2558 = vpop.permute.xlu0 %2557
        %v2560 = vsel %vm1102, %v2070, 0
        %v2563 = vsel %vm2081, %v2558, 0
        %2565 = vmatprep.subr.bf16.mxu0 0
        %2566 = vmatpush1.bf16.msra.mxu0 %v2563
        %2567 = vmatprep.subr.bf16.mxu0 0
        %2568 = vmatpush1.bf16.msra.mxu0 0
        %2569 = vmatprep.subr.bf16.mxu0 0
        %2570 = vmatpush1.bf16.msra.mxu0 0
        %2571 = vmatprep.subr.bf16.mxu0 0
        %2572 = vmatpush1.bf16.msra.mxu0 0
        %2573 = vmatprep.subr.bf16.mxu0 0
        %2574 = vmatpush1.bf16.msra.mxu0 0
        %2575 = vmatprep.subr.bf16.mxu0 0
        %2576 = vmatpush1.bf16.msra.mxu0 0
        %2577 = vmatprep.subr.bf16.mxu0 0
        %2578 = vmatpush1.bf16.msra.mxu0 0
        %2579 = vmatprep.subr.bf16.mxu0 0
        %2580 = vmatpush1.bf16.msra.mxu0 0
        %2581 = vmatprep.subr.bf16.mxu0 0
        %2582 = vmatpush1.bf16.msra.mxu0 0
        %2583 = vmatprep.subr.bf16.mxu0 0
        %2584 = vmatpush1.bf16.msra.mxu0 0
        %2585 = vmatprep.subr.bf16.mxu0 0
        %2586 = vmatpush1.bf16.msra.mxu0 0
        %2587 = vmatprep.subr.bf16.mxu0 0
        %2588 = vmatpush1.bf16.msra.mxu0 0
        %2589 = vmatprep.subr.bf16.mxu0 0
        %2590 = vmatpush1.bf16.msra.mxu0 0
        %2591 = vmatprep.subr.bf16.mxu0 0
        %2592 = vmatpush1.bf16.msra.mxu0 0
        %2593 = vmatprep.subr.bf16.mxu0 0
        %2594 = vmatpush1.bf16.msra.mxu0 0
        %2595 = vmatprep.subr.bf16.mxu0 0
        %2596 = vmatpush1.bf16.msra.mxu0 0
        %2597 = vmatprep.mubr.bf16.mxu0 0
        %2598 = vmatmul.mubr.bf16.gmra.mrb[0].mxu0 %v2560
        %v2599 = vpop.f32.mrb[0].mxu0
        %v2600 = vadd.f32 0.0, %v2599
        %v2601 = vpop.f32.mrb[0].mxu0
        %v2602 = vpop.f32.mrb[0].mxu0
        %v2603 = vpop.f32.mrb[0].mxu0
        %2604 = vdwg.mxu0
        %2605 = vrot.lane.b32.xlu0 %v1094, 64
        %v2606 = vpop.permute.xlu0 %2605
        %v2608 = vsel %vm1102, %v2071, 0
        %v2611 = vsel %vm2081, %v2606, 0
        %2613 = vmatprep.subr.bf16.mxu0 0
        %2614 = vmatpush1.bf16.msra.mxu0 %v2611
        %2615 = vmatprep.subr.bf16.mxu0 0
        %2616 = vmatpush1.bf16.msra.mxu0 0
        %2617 = vmatprep.subr.bf16.mxu0 0
        %2618 = vmatpush1.bf16.msra.mxu0 0
        %2619 = vmatprep.subr.bf16.mxu0 0
        %2620 = vmatpush1.bf16.msra.mxu0 0
        %2621 = vmatprep.subr.bf16.mxu0 0
        %2622 = vmatpush1.bf16.msra.mxu0 0
        %2623 = vmatprep.subr.bf16.mxu0 0
        %2624 = vmatpush1.bf16.msra.mxu0 0
        %2625 = vmatprep.subr.bf16.mxu0 0
        %2626 = vmatpush1.bf16.msra.mxu0 0
        %2627 = vmatprep.subr.bf16.mxu0 0
        %2628 = vmatpush1.bf16.msra.mxu0 0
        %2629 = vmatprep.subr.bf16.mxu0 0
        %2630 = vmatpush1.bf16.msra.mxu0 0
        %2631 = vmatprep.subr.bf16.mxu0 0
        %2632 = vmatpush1.bf16.msra.mxu0 0
        %2633 = vmatprep.subr.bf16.mxu0 0
        %2634 = vmatpush1.bf16.msra.mxu0 0
        %2635 = vmatprep.subr.bf16.mxu0 0
        %2636 = vmatpush1.bf16.msra.mxu0 0
        %2637 = vmatprep.subr.bf16.mxu0 0
        %2638 = vmatpush1.bf16.msra.mxu0 0
        %2639 = vmatprep.subr.bf16.mxu0 0
        %2640 = vmatpush1.bf16.msra.mxu0 0
        %2641 = vmatprep.subr.bf16.mxu0 0
        %2642 = vmatpush1.bf16.msra.mxu0 0
        %2643 = vmatprep.subr.bf16.mxu0 0
        %2644 = vmatpush1.bf16.msra.mxu0 0
        %2645 = vmatprep.mubr.bf16.mxu0 0
        %2646 = vmatmul.mubr.bf16.gmra.mrb[0].mxu0 %v2608
        %v2647 = vpop.f32.mrb[0].mxu0
        %v2648 = vadd.f32 0.0, %v2647
        %v2649 = vpop.f32.mrb[0].mxu0
        %v2650 = vpop.f32.mrb[0].mxu0
        %v2651 = vpop.f32.mrb[0].mxu0
        %2652 = vdwg.mxu0
        %2653 = vrot.lane.b32.xlu0 %v1095, 64
        %v2654 = vpop.permute.xlu0 %2653
        %v2656 = vsel %vm1102, %v2072, 0
        %v2659 = vsel %vm2081, %v2654, 0
        %2661 = vmatprep.subr.bf16.mxu0 0
        %2662 = vmatpush1.bf16.msra.mxu0 %v2659
        %2663 = vmatprep.subr.bf16.mxu0 0
        %2664 = vmatpush1.bf16.msra.mxu0 0
        %2665 = vmatprep.subr.bf16.mxu0 0
        %2666 = vmatpush1.bf16.msra.mxu0 0
        %2667 = vmatprep.subr.bf16.mxu0 0
        %2668 = vmatpush1.bf16.msra.mxu0 0
        %2669 = vmatprep.subr.bf16.mxu0 0
        %2670 = vmatpush1.bf16.msra.mxu0 0
        %2671 = vmatprep.subr.bf16.mxu0 0
        %2672 = vmatpush1.bf16.msra.mxu0 0
        %2673 = vmatprep.subr.bf16.mxu0 0
        %2674 = vmatpush1.bf16.msra.mxu0 0
        %2675 = vmatprep.subr.bf16.mxu0 0
        %2676 = vmatpush1.bf16.msra.mxu0 0
        %2677 = vmatprep.subr.bf16.mxu0 0
        %2678 = vmatpush1.bf16.msra.mxu0 0
        %2679 = vmatprep.subr.bf16.mxu0 0
        %2680 = vmatpush1.bf16.msra.mxu0 0
        %2681 = vmatprep.subr.bf16.mxu0 0
        %2682 = vmatpush1.bf16.msra.mxu0 0
        %2683 = vmatprep.subr.bf16.mxu0 0
        %2684 = vmatpush1.bf16.msra.mxu0 0
        %2685 = vmatprep.subr.bf16.mxu0 0
        %2686 = vmatpush1.bf16.msra.mxu0 0
        %2687 = vmatprep.subr.bf16.mxu0 0
        %2688 = vmatpush1.bf16.msra.mxu0 0
        %2689 = vmatprep.subr.bf16.mxu0 0
        %2690 = vmatpush1.bf16.msra.mxu0 0
        %2691 = vmatprep.subr.bf16.mxu0 0
        %2692 = vmatpush1.bf16.msra.mxu0 0
        %2693 = vmatprep.mubr.bf16.mxu0 0
        %2694 = vmatmul.mubr.bf16.gmra.mrb[0].mxu0 %v2656
        %v2695 = vpop.f32.mrb[0].mxu0
        %v2696 = vadd.f32 0.0, %v2695
        %v2697 = vpop.f32.mrb[0].mxu0
        %v2698 = vpop.f32.mrb[0].mxu0
        %v2699 = vpop.f32.mrb[0].mxu0
        %2700 = vdwg.mxu0
        %2701 = vrot.lane.b32.xlu0 %v1096, 64
        %v2702 = vpop.permute.xlu0 %2701
        %v2704 = vsel %vm1102, %v2073, 0
        %v2707 = vsel %vm2081, %v2702, 0
        %2709 = vmatprep.subr.bf16.mxu0 0
        %2710 = vmatpush1.bf16.msra.mxu0 %v2707
        %2711 = vmatprep.subr.bf16.mxu0 0
        %2712 = vmatpush1.bf16.msra.mxu0 0
        %2713 = vmatprep.subr.bf16.mxu0 0
        %2714 = vmatpush1.bf16.msra.mxu0 0
        %2715 = vmatprep.subr.bf16.mxu0 0
        %2716 = vmatpush1.bf16.msra.mxu0 0
        %2717 = vmatprep.subr.bf16.mxu0 0
        %2718 = vmatpush1.bf16.msra.mxu0 0
        %2719 = vmatprep.subr.bf16.mxu0 0
        %2720 = vmatpush1.bf16.msra.mxu0 0
        %2721 = vmatprep.subr.bf16.mxu0 0
        %2722 = vmatpush1.bf16.msra.mxu0 0
        %2723 = vmatprep.subr.bf16.mxu0 0
        %2724 = vmatpush1.bf16.msra.mxu0 0
        %2725 = vmatprep.subr.bf16.mxu0 0
        %2726 = vmatpush1.bf16.msra.mxu0 0
        %2727 = vmatprep.subr.bf16.mxu0 0
        %2728 = vmatpush1.bf16.msra.mxu0 0
        %2729 = vmatprep.subr.bf16.mxu0 0
        %2730 = vmatpush1.bf16.msra.mxu0 0
        %2731 = vmatprep.subr.bf16.mxu0 0
        %2732 = vmatpush1.bf16.msra.mxu0 0
        %2733 = vmatprep.subr.bf16.mxu0 0
        %2734 = vmatpush1.bf16.msra.mxu0 0
        %2735 = vmatprep.subr.bf16.mxu0 0
        %2736 = vmatpush1.bf16.msra.mxu0 0
        %2737 = vmatprep.subr.bf16.mxu0 0
        %2738 = vmatpush1.bf16.msra.mxu0 0
        %2739 = vmatprep.subr.bf16.mxu0 0
        %2740 = vmatpush1.bf16.msra.mxu0 0
        %2741 = vmatprep.mubr.bf16.mxu0 0
        %2742 = vmatmul.mubr.bf16.gmra.mrb[0].mxu0 %v2704
        %v2743 = vpop.f32.mrb[0].mxu0
        %v2744 = vadd.f32 0.0, %v2743
        %v2745 = vpop.f32.mrb[0].mxu0
        %v2746 = vpop.f32.mrb[0].mxu0
        %v2747 = vpop.f32.mrb[0].mxu0
        %2748 = vdwg.mxu0
        %2749 = vrot.lane.b32.xlu0 %v1097, 64
        %v2750 = vpop.permute.xlu0 %2749
        %v2752 = vsel %vm1102, %v2074, 0
        %v2755 = vsel %vm2081, %v2750, 0
        %2757 = vmatprep.subr.bf16.mxu0 0
        %2758 = vmatpush1.bf16.msra.mxu0 %v2755
        %2759 = vmatprep.subr.bf16.mxu0 0
        %2760 = vmatpush1.bf16.msra.mxu0 0
        %2761 = vmatprep.subr.bf16.mxu0 0
        %2762 = vmatpush1.bf16.msra.mxu0 0
        %2763 = vmatprep.subr.bf16.mxu0 0
        %2764 = vmatpush1.bf16.msra.mxu0 0
        %2765 = vmatprep.subr.bf16.mxu0 0
        %2766 = vmatpush1.bf16.msra.mxu0 0
        %2767 = vmatprep.subr.bf16.mxu0 0
        %2768 = vmatpush1.bf16.msra.mxu0 0
        %2769 = vmatprep.subr.bf16.mxu0 0
        %2770 = vmatpush1.bf16.msra.mxu0 0
        %2771 = vmatprep.subr.bf16.mxu0 0
        %2772 = vmatpush1.bf16.msra.mxu0 0
        %2773 = vmatprep.subr.bf16.mxu0 0
        %2774 = vmatpush1.bf16.msra.mxu0 0
        %2775 = vmatprep.subr.bf16.mxu0 0
        %2776 = vmatpush1.bf16.msra.mxu0 0
        %2777 = vmatprep.subr.bf16.mxu0 0
        %2778 = vmatpush1.bf16.msra.mxu0 0
        %2779 = vmatprep.subr.bf16.mxu0 0
        %2780 = vmatpush1.bf16.msra.mxu0 0
        %2781 = vmatprep.subr.bf16.mxu0 0
        %2782 = vmatpush1.bf16.msra.mxu0 0
        %2783 = vmatprep.subr.bf16.mxu0 0
        %2784 = vmatpush1.bf16.msra.mxu0 0
        %2785 = vmatprep.subr.bf16.mxu0 0
        %2786 = vmatpush1.bf16.msra.mxu0 0
        %2787 = vmatprep.subr.bf16.mxu0 0
        %2788 = vmatpush1.bf16.msra.mxu0 0
        %2789 = vmatprep.mubr.bf16.mxu0 0
        %2790 = vmatmul.mubr.bf16.gmra.mrb[0].mxu0 %v2752
        %v2791 = vpop.f32.mrb[0].mxu0
        %v2792 = vadd.f32 0.0, %v2791
        %v2793 = vpop.f32.mrb[0].mxu0
        %v2794 = vpop.f32.mrb[0].mxu0
        %v2795 = vpop.f32.mrb[0].mxu0
        %2796 = vdwg.mxu0
        %2797 = vrot.lane.b32.xlu0 %v1098, 64
        %v2798 = vpop.permute.xlu0 %2797
        %v2800 = vsel %vm1102, %v2075, 0
        %v2803 = vsel %vm2081, %v2798, 0
        %2805 = vmatprep.subr.bf16.mxu0 0
        %2806 = vmatpush1.bf16.msra.mxu0 %v2803
        %2807 = vmatprep.subr.bf16.mxu0 0
        %2808 = vmatpush1.bf16.msra.mxu0 0
        %2809 = vmatprep.subr.bf16.mxu0 0
        %2810 = vmatpush1.bf16.msra.mxu0 0
        %2811 = vmatprep.subr.bf16.mxu0 0
        %2812 = vmatpush1.bf16.msra.mxu0 0
        %2813 = vmatprep.subr.bf16.mxu0 0
        %2814 = vmatpush1.bf16.msra.mxu0 0
        %2815 = vmatprep.subr.bf16.mxu0 0
        %2816 = vmatpush1.bf16.msra.mxu0 0
        %2817 = vmatprep.subr.bf16.mxu0 0
        %2818 = vmatpush1.bf16.msra.mxu0 0
        %2819 = vmatprep.subr.bf16.mxu0 0
        %2820 = vmatpush1.bf16.msra.mxu0 0
        %2821 = vmatprep.subr.bf16.mxu0 0
        %2822 = vmatpush1.bf16.msra.mxu0 0
        %2823 = vmatprep.subr.bf16.mxu0 0
        %2824 = vmatpush1.bf16.msra.mxu0 0
        %2825 = vmatprep.subr.bf16.mxu0 0
        %2826 = vmatpush1.bf16.msra.mxu0 0
        %2827 = vmatprep.subr.bf16.mxu0 0
        %2828 = vmatpush1.bf16.msra.mxu0 0
        %2829 = vmatprep.subr.bf16.mxu0 0
        %2830 = vmatpush1.bf16.msra.mxu0 0
        %2831 = vmatprep.subr.bf16.mxu0 0
        %2832 = vmatpush1.bf16.msra.mxu0 0
        %2833 = vmatprep.subr.bf16.mxu0 0
        %2834 = vmatpush1.bf16.msra.mxu0 0
        %2835 = vmatprep.subr.bf16.mxu0 0
        %2836 = vmatpush1.bf16.msra.mxu0 0
        %2837 = vmatprep.mubr.bf16.mxu0 0
        %2838 = vmatmul.mubr.bf16.gmra.mrb[0].mxu0 %v2800
        %v2839 = vpop.f32.mrb[0].mxu0
        %v2840 = vadd.f32 0.0, %v2839
        %v2841 = vpop.f32.mrb[0].mxu0
        %v2842 = vpop.f32.mrb[0].mxu0
        %v2843 = vpop.f32.mrb[0].mxu0
        %2844 = vdwg.mxu0
        %2849 = vrot.lane.b32.xlu0 %v2312, 8
        %v2850 = vpop.permute.xlu0 %2849
        %2851 = vrot.lane.b32.xlu0 %v2360, 8
        %v2852 = vpop.permute.xlu0 %2851
        %2853 = vrot.lane.b32.xlu0 %v2408, 8
        %v2854 = vpop.permute.xlu0 %2853
        %2855 = vrot.lane.b32.xlu0 %v2456, 8
        %v2856 = vpop.permute.xlu0 %2855
        %2865 = vrot.lane.b32.xlu0 %v2504, 16
        %v2866 = vpop.permute.xlu0 %2865
        %2867 = vrot.lane.b32.xlu0 %v2552, 16
        %v2868 = vpop.permute.xlu0 %2867
        %2869 = vrot.lane.b32.xlu0 %v2600, 16
        %v2870 = vpop.permute.xlu0 %2869
        %2871 = vrot.lane.b32.xlu0 %v2648, 16
        %v2872 = vpop.permute.xlu0 %2871
        %2881 = vrot.lane.b32.xlu0 %v2696, 24
        %v2882 = vpop.permute.xlu0 %2881
        %2883 = vrot.lane.b32.xlu0 %v2744, 24
        %v2884 = vpop.permute.xlu0 %2883
        %2885 = vrot.lane.b32.xlu0 %v2792, 24
        %v2886 = vpop.permute.xlu0 %2885
        %2887 = vrot.lane.b32.xlu0 %v2840, 24
        %v2888 = vpop.permute.xlu0 %2887
        %v2893 = vsel %vm1102, %v2120, %v2850
        %v2894 = vsel %vm1102, %v2168, %v2852
        %v2895 = vsel %vm1102, %v2216, %v2854
        %v2896 = vsel %vm1102, %v2264, %v2856
        %vm2897 = vcmask 130048
        %v2898 = vsel %vm2897, %v2893, %v2866
        %v2899 = vsel %vm2897, %v2894, %v2868
        %v2900 = vsel %vm2897, %v2895, %v2870
        %v2901 = vsel %vm2897, %v2896, %v2872
        %vm2902 = vcmask 195584
        %v2903 = vsel %vm2902, %v2898, %v2882
        %v2904 = vsel %vm2902, %v2899, %v2884
        %v2905 = vsel %vm2902, %v2900, %v2886
        %v2906 = vsel %vm2902, %v2901, %v2888
        %v2907 = vpack.c.bf16 %v2904, %v2903
        %v2908 = vpack.c.bf16 %v2906, %v2905
        %v2909 = vld [vmem:[%s718] sm:$0xf]
        %v2910 = vld [vmem:[%s718 + $0x4] sm:$0xf]
        %v2911 = vld [vmem:[%s718 + $0x8] sm:$0xf]
        %v2912 = vld [vmem:[%s718 + $0xc] sm:$0xf]
        %v2913 = vld [vmem:[%s726] sm:$0x1]
        %v2915 = vlaneseq
        %v2916 = vshrl.u32 %v2915, 7
        %v2917 = vsub.s32 0, %v2916
        %v2918 = vrot.slane %v2913, %v2917
        %v2924 = vunpack.c.l.b16 %v2909
        %v2925 = vunpack.c.l.b16 %v2910
        %v2926 = vunpack.c.l.b16 %v2911
        %v2927 = vunpack.c.l.b16 %v2912
        %v2928 = vpack.c.b16 %v2925, %v2924
        %v2929 = vpack.c.b16 %v2927, %v2926
        %v2933 = vsel %vm889, %v2907, 0
        %v2936 = vsel %vm889, %v2908, 0
        %2938 = vmatprep.subr.bf16.mxu0 0
        %2939 = vmatpush1.bf16.msra.mxu0 %v2928
        %2940 = vmatprep.subr.bf16.mxu0 0
        %2941 = vmatpush1.bf16.msra.mxu0 %v2929
        %2942 = vmatprep.subr.bf16.mxu0 0
        %2943 = vmatpush1.bf16.msra.mxu0 0
        %2944 = vmatprep.subr.bf16.mxu0 0
        %2945 = vmatpush1.bf16.msra.mxu0 0
        %2946 = vmatprep.subr.bf16.mxu0 0
        %2947 = vmatpush1.bf16.msra.mxu0 0
        %2948 = vmatprep.subr.bf16.mxu0 0
        %2949 = vmatpush1.bf16.msra.mxu0 0
        %2950 = vmatprep.subr.bf16.mxu0 0
        %2951 = vmatpush1.bf16.msra.mxu0 0
        %2952 = vmatprep.subr.bf16.mxu0 0
        %2953 = vmatpush1.bf16.msra.mxu0 0
        %2954 = vmatprep.subr.bf16.mxu0 0
        %2955 = vmatpush1.bf16.msra.mxu0 0
        %2956 = vmatprep.subr.bf16.mxu0 0
        %2957 = vmatpush1.bf16.msra.mxu0 0
        %2958 = vmatprep.subr.bf16.mxu0 0
        %2959 = vmatpush1.bf16.msra.mxu0 0
        %2960 = vmatprep.subr.bf16.mxu0 0
        %2961 = vmatpush1.bf16.msra.mxu0 0
        %2962 = vmatprep.subr.bf16.mxu0 0
        %2963 = vmatpush1.bf16.msra.mxu0 0
        %2964 = vmatprep.subr.bf16.mxu0 0
        %2965 = vmatpush1.bf16.msra.mxu0 0
        %2966 = vmatprep.subr.bf16.mxu0 0
        %2967 = vmatpush1.bf16.msra.mxu0 0
        %2968 = vmatprep.subr.bf16.mxu0 0
        %2969 = vmatpush1.bf16.msra.mxu0 0
        %2970 = vmatprep.mubr.bf16.mxu0 0
        %2971 = vmatmul.mubr.bf16.gmra.mrb[0].mxu0 %v2933
        %v2972 = vpop.f32.mrb[0].mxu0
        %v2973 = vadd.f32 %v2918, %v2972
        %v2974 = vpop.f32.mrb[0].mxu0
        %v2975 = vpop.f32.mrb[0].mxu0
        %v2976 = vadd.f32 %v2918, %v2975
        %v2977 = vpop.f32.mrb[0].mxu0
        %2978 = vmatprep.mubr.bf16.mxu0 0
        %2979 = vmatmul.mubr.bf16.gmra.mrb[0].mxu0 %v2936
        %v2980 = vpop.f32.mrb[0].mxu0
        %v2981 = vadd.f32 %v2918, %v2980
        %v2982 = vpop.f32.mrb[0].mxu0
        %v2983 = vpop.f32.mrb[0].mxu0
        %v2984 = vadd.f32 %v2918, %v2983
        %v2985 = vpop.f32.mrb[0].mxu0
        %2986 = vdwg.mxu0
        %v2987 = vadd.f32 %v877, %v2973
        %v2988 = vadd.f32 %v878, %v2976
        %v2989 = vadd.f32 %v879, %v2981
        %v2990 = vadd.f32 %v880, %v2984
        %v2991 = vld [vmem:[%s734] sm:$0x1]
        %v2992 = vld [vmem:[%s742] sm:$0x1]
        %v2993 = vsel %vm889, %v2987, 0.0
        %2994 = vadd.xlane.f32.xlu0 %v2993
        %v2995 = vpop.xlane.xlu0 %2994
        %v2996 = vsel %vm889, %v2988, 0.0
        %2997 = vadd.xlane.f32.xlu0 %v2996
        %v2998 = vpop.xlane.xlu0 %2997
        %v2999 = vsel %vm889, %v2989, 0.0
        %3000 = vadd.xlane.f32.xlu0 %v2999
        %v3001 = vpop.xlane.xlu0 %3000
        %v3002 = vsel %vm889, %v2990, 0.0
        %3003 = vadd.xlane.f32.xlu0 %v3002
        %v3004 = vpop.xlane.xlu0 %3003
        %v3005 = vmul.f32 %v2995, %v902
        %v3006 = vmul.f32 %v2998, %v902
        %v3007 = vmul.f32 %v3001, %v902
        %v3008 = vmul.f32 %v3004, %v902
        %v3009 = vsub.f32 %v2987, %v3005
        %v3010 = vsub.f32 %v2988, %v3006
        %v3011 = vsub.f32 %v2989, %v3007
        %v3012 = vsub.f32 %v2990, %v3008
        %v3013 = vmul.f32 %v3009, %v3009
        %v3014 = vmul.f32 %v3010, %v3010
        %v3015 = vmul.f32 %v3011, %v3011
        %v3016 = vmul.f32 %v3012, %v3012
        %v3017 = vsel %vm889, %v3013, 0.0
        %3018 = vadd.xlane.f32.xlu0 %v3017
        %v3019 = vpop.xlane.xlu0 %3018
        %v3020 = vsel %vm889, %v3014, 0.0
        %3021 = vadd.xlane.f32.xlu0 %v3020
        %v3022 = vpop.xlane.xlu0 %3021
        %v3023 = vsel %vm889, %v3015, 0.0
        %3024 = vadd.xlane.f32.xlu0 %v3023
        %v3025 = vpop.xlane.xlu0 %3024
        %v3026 = vsel %vm889, %v3016, 0.0
        %3027 = vadd.xlane.f32.xlu0 %v3026
        %v3028 = vpop.xlane.xlu0 %3027
        %v3029 = vmul.f32 %v3019, %v902
        %v3030 = vmul.f32 %v3022, %v902
        %v3031 = vmul.f32 %v3025, %v902
        %v3032 = vmul.f32 %v3028, %v902
        %v3033 = vadd.f32 %v3029, 1e-05
        %v3034 = vadd.f32 %v3030, 1e-05
        %v3035 = vadd.f32 %v3031, 1e-05
        %v3036 = vadd.f32 %v3032, 1e-05
        %v3037 = vrsqrt.pop %v3033
        %v3038 = vrsqrt.pop %v3034
        %v3039 = vrsqrt.pop %v3035
        %v3040 = vrsqrt.pop %v3036
        %v3041 = vmul.f32 %v3009, %v3037
        %v3042 = vmul.f32 %v3010, %v3038
        %v3043 = vmul.f32 %v3011, %v3039
        %v3044 = vmul.f32 %v3012, %v3040
        %v3046 = vlaneseq
        %v3047 = vshrl.u32 %v3046, 7
        %v3048 = vsub.s32 0, %v3047
        %v3049 = vrot.slane %v2991, %v3048
        %v3051 = vmul.f32 %v3041, %v3049
        %v3052 = vmul.f32 %v3042, %v3049
        %v3053 = vmul.f32 %v3043, %v3049
        %v3054 = vmul.f32 %v3044, %v3049
        %v3056 = vlaneseq
        %v3057 = vshrl.u32 %v3056, 7
        %v3058 = vsub.s32 0, %v3057
        %v3059 = vrot.slane %v2992, %v3058
        %v3061 = vadd.f32 %v3051, %v3059
        %v3062 = vadd.f32 %v3052, %v3059
        %v3063 = vadd.f32 %v3053, %v3059
        %v3064 = vadd.f32 %v3054, %v3059
        %v3065 = vpack.c.bf16 %v3062, %v3061
        %v3066 = vpack.c.bf16 %v3064, %v3063
        %v3067 = vld [vmem:[%s751] sm:$0xf]
        %v3068 = vld [vmem:[%s751 + $0x4] sm:$0xf]
        %v3069 = vld [vmem:[%s751 + $0x8] sm:$0xf]
        %v3070 = vld [vmem:[%s751 + $0xc] sm:$0xf]
        %v3071 = vld [vmem:[%s759] sm:$0x1]
        %v3073 = vlaneseq
        %v3074 = vshrl.u32 %v3073, 7
        %v3075 = vsub.s32 0, %v3074
        %v3076 = vrot.slane %v3071, %v3075
        %v3082 = vunpack.c.l.b16 %v3067
        %v3083 = vunpack.c.l.b16 %v3068
        %v3084 = vunpack.c.l.b16 %v3069
        %v3085 = vunpack.c.l.b16 %v3070
        %v3086 = vpack.c.b16 %v3083, %v3082
        %v3087 = vpack.c.b16 %v3085, %v3084
        %v3091 = vsel %vm889, %v3065, 0
        %v3094 = vsel %vm889, %v3066, 0
        %3096 = vmatprep.subr.bf16.mxu0 0
        %3097 = vmatpush1.bf16.msra.mxu0 %v3086
        %3098 = vmatprep.subr.bf16.mxu0 0
        %3099 = vmatpush1.bf16.msra.mxu0 %v3087
        %3100 = vmatprep.subr.bf16.mxu0 0
        %3101 = vmatpush1.bf16.msra.mxu0 0
        %3102 = vmatprep.subr.bf16.mxu0 0
        %3103 = vmatpush1.bf16.msra.mxu0 0
        %3104 = vmatprep.subr.bf16.mxu0 0
        %3105 = vmatpush1.bf16.msra.mxu0 0
        %3106 = vmatprep.subr.bf16.mxu0 0
        %3107 = vmatpush1.bf16.msra.mxu0 0
        %3108 = vmatprep.subr.bf16.mxu0 0
        %3109 = vmatpush1.bf16.msra.mxu0 0
        %3110 = vmatprep.subr.bf16.mxu0 0
        %3111 = vmatpush1.bf16.msra.mxu0 0
        %3112 = vmatprep.subr.bf16.mxu0 0
        %3113 = vmatpush1.bf16.msra.mxu0 0
        %3114 = vmatprep.subr.bf16.mxu0 0
        %3115 = vmatpush1.bf16.msra.mxu0 0
        %3116 = vmatprep.subr.bf16.mxu0 0
        %3117 = vmatpush1.bf16.msra.mxu0 0
        %3118 = vmatprep.subr.bf16.mxu0 0
        %3119 = vmatpush1.bf16.msra.mxu0 0
        %3120 = vmatprep.subr.bf16.mxu0 0
        %3121 = vmatpush1.bf16.msra.mxu0 0
        %3122 = vmatprep.subr.bf16.mxu0 0
        %3123 = vmatpush1.bf16.msra.mxu0 0
        %3124 = vmatprep.subr.bf16.mxu0 0
        %3125 = vmatpush1.bf16.msra.mxu0 0
        %3126 = vmatprep.subr.bf16.mxu0 0
        %3127 = vmatpush1.bf16.msra.mxu0 0
        %3128 = vmatprep.mubr.bf16.mxu0 0
        %3129 = vmatmul.mubr.bf16.gmra.mrb[0].mxu0 %v3091
        %v3130 = vpop.f32.mrb[0].mxu0
        %v3131 = vadd.f32 %v3076, %v3130
        %v3132 = vpop.f32.mrb[0].mxu0
        %v3133 = vpop.f32.mrb[0].mxu0
        %v3134 = vadd.f32 %v3076, %v3133
        %v3135 = vpop.f32.mrb[0].mxu0
        %3136 = vmatprep.mubr.bf16.mxu0 0
        %3137 = vmatmul.mubr.bf16.gmra.mrb[0].mxu0 %v3094
        %v3138 = vpop.f32.mrb[0].mxu0
        %v3139 = vadd.f32 %v3076, %v3138
        %v3140 = vpop.f32.mrb[0].mxu0
        %v3141 = vpop.f32.mrb[0].mxu0
        %v3142 = vadd.f32 %v3076, %v3141
        %v3143 = vpop.f32.mrb[0].mxu0
        %3144 = vdwg.mxu0
        %v3145 = vmul.f32 %v3131, 0.5
        %v3146 = vmul.f32 %v3134, 0.5
        %v3147 = vmul.f32 %v3139, 0.5
        %v3148 = vmul.f32 %v3142, 0.5
        %v3149 = vmul.f32 %v3131, 0.044715
        %v3150 = vmul.f32 %v3134, 0.044715
        %v3151 = vmul.f32 %v3139, 0.044715
        %v3152 = vmul.f32 %v3142, 0.044715
        %v3153 = vmul.f32 %v3149, %v3131
        %v3154 = vmul.f32 %v3150, %v3134
        %v3155 = vmul.f32 %v3151, %v3139
        %v3156 = vmul.f32 %v3152, %v3142
        %v3157 = vmul.f32 %v3153, %v3131
        %v3158 = vmul.f32 %v3154, %v3134
        %v3159 = vmul.f32 %v3155, %v3139
        %v3160 = vmul.f32 %v3156, %v3142
        %v3161 = vadd.f32 %v3131, %v3157
        %v3162 = vadd.f32 %v3134, %v3158
        %v3163 = vadd.f32 %v3139, %v3159
        %v3164 = vadd.f32 %v3142, %v3160
        %v3165 = vmul.f32 %v3161, 0.7978846
        %v3166 = vmul.f32 %v3162, 0.7978846
        %v3167 = vmul.f32 %v3163, 0.7978846
        %v3168 = vmul.f32 %v3164, 0.7978846
        %v3169 = vtanh.pop %v3165
        %v3170 = vtanh.pop %v3166
        %v3171 = vtanh.pop %v3167
        %v3172 = vtanh.pop %v3168
        %v3173 = vadd.f32 %v3169, 1.0
        %v3174 = vadd.f32 %v3170, 1.0
        %v3175 = vadd.f32 %v3171, 1.0
        %v3176 = vadd.f32 %v3172, 1.0
        %v3177 = vmul.f32 %v3145, %v3173
        %v3178 = vmul.f32 %v3146, %v3174
        %v3179 = vmul.f32 %v3147, %v3175
        %v3180 = vmul.f32 %v3148, %v3176
        %v3181 = vpack.c.bf16 %v3178, %v3177
        %v3182 = vpack.c.bf16 %v3180, %v3179
        %v3183 = vld [vmem:[%s768] sm:$0xf]
        %v3184 = vld [vmem:[%s768 + $0x4] sm:$0xf]
        %v3185 = vld [vmem:[%s768 + $0x8] sm:$0xf]
        %v3186 = vld [vmem:[%s768 + $0xc] sm:$0xf]
        %v3187 = vld [vmem:[%s768 + $0x10] sm:$0xf]
        %v3188 = vld [vmem:[%s768 + $0x14] sm:$0xf]
        %v3189 = vld [vmem:[%s768 + $0x18] sm:$0xf]
        %v3190 = vld [vmem:[%s768 + $0x1c] sm:$0xf]
        %v3191 = vld [vmem:[%s768 + $0x20] sm:$0xf]
        %v3192 = vld [vmem:[%s768 + $0x24] sm:$0xf]
        %v3193 = vld [vmem:[%s768 + $0x28] sm:$0xf]
        %v3194 = vld [vmem:[%s768 + $0x2c] sm:$0xf]
        %v3195 = vld [vmem:[%s768 + $0x30] sm:$0xf]
        %v3196 = vld [vmem:[%s768 + $0x34] sm:$0xf]
        %v3197 = vld [vmem:[%s768 + $0x38] sm:$0xf]
        %v3198 = vld [vmem:[%s768 + $0x3c] sm:$0xf]
        %v3199 = vld [vmem:[%s776] sm:$0x1]
        %v3201 = vlaneseq
        %v3202 = vshrl.u32 %v3201, 7
        %v3203 = vsub.s32 0, %v3202
        %v3204 = vrot.slane %v3199, %v3203
        %v3222 = vunpack.c.l.b16 %v3183
        %v3223 = vunpack.c.l.b16 %v3184
        %v3224 = vunpack.c.l.b16 %v3185
        %v3225 = vunpack.c.l.b16 %v3186
        %v3226 = vunpack.c.l.b16 %v3187
        %v3227 = vunpack.c.l.b16 %v3188
        %v3228 = vunpack.c.l.b16 %v3189
        %v3229 = vunpack.c.l.b16 %v3190
        %v3230 = vunpack.c.l.b16 %v3191
        %v3231 = vunpack.c.l.b16 %v3192
        %v3232 = vunpack.c.l.b16 %v3193
        %v3233 = vunpack.c.l.b16 %v3194
        %v3234 = vunpack.c.l.b16 %v3195
        %v3235 = vunpack.c.l.b16 %v3196
        %v3236 = vunpack.c.l.b16 %v3197
        %v3237 = vunpack.c.l.b16 %v3198
        %v3238 = vpack.c.b16 %v3223, %v3222
        %v3239 = vpack.c.b16 %v3225, %v3224
        %v3240 = vpack.c.b16 %v3227, %v3226
        %v3241 = vpack.c.b16 %v3229, %v3228
        %v3242 = vpack.c.b16 %v3231, %v3230
        %v3243 = vpack.c.b16 %v3233, %v3232
        %v3244 = vpack.c.b16 %v3235, %v3234
        %v3245 = vpack.c.b16 %v3237, %v3236
        %3254 = vmatprep.subr.bf16.mxu0 0
        %3255 = vmatpush1.bf16.msra.mxu0 %v3238
        %3256 = vmatprep.subr.bf16.mxu0 0
        %3257 = vmatpush1.bf16.msra.mxu0 %v3239
        %3258 = vmatprep.subr.bf16.mxu0 0
        %3259 = vmatpush1.bf16.msra.mxu0 %v3240
        %3260 = vmatprep.subr.bf16.mxu0 0
        %3261 = vmatpush1.bf16.msra.mxu0 %v3241
        %3262 = vmatprep.subr.bf16.mxu0 0
        %3263 = vmatpush1.bf16.msra.mxu0 %v3242
        %3264 = vmatprep.subr.bf16.mxu0 0
        %3265 = vmatpush1.bf16.msra.mxu0 %v3243
        %3266 = vmatprep.subr.bf16.mxu0 0
        %3267 = vmatpush1.bf16.msra.mxu0 %v3244
        %3268 = vmatprep.subr.bf16.mxu0 0
        %3269 = vmatpush1.bf16.msra.mxu0 %v3245
        %3270 = vmatprep.subr.bf16.mxu0 0
        %3271 = vmatpush1.bf16.msra.mxu0 0
        %3272 = vmatprep.subr.bf16.mxu0 0
        %3273 = vmatpush1.bf16.msra.mxu0 0
        %3274 = vmatprep.subr.bf16.mxu0 0
        %3275 = vmatpush1.bf16.msra.mxu0 0
        %3276 = vmatprep.subr.bf16.mxu0 0
        %3277 = vmatpush1.bf16.msra.mxu0 0
        %3278 = vmatprep.subr.bf16.mxu0 0
        %3279 = vmatpush1.bf16.msra.mxu0 0
        %3280 = vmatprep.subr.bf16.mxu0 0
        %3281 = vmatpush1.bf16.msra.mxu0 0
        %3282 = vmatprep.subr.bf16.mxu0 0
        %3283 = vmatpush1.bf16.msra.mxu0 0
        %3284 = vmatprep.subr.bf16.mxu0 0
        %3285 = vmatpush1.bf16.msra.mxu0 0
        %3286 = vmatprep.mubr.bf16.mxu0 0
        %3287 = vmatmul.mubr.bf16.gmra.mrb[0].mxu0 %v3181
        %v3288 = vpop.f32.mrb[0].mxu0
        %v3289 = vadd.f32 %v3204, %v3288
        %v3290 = vpop.f32.mrb[0].mxu0
        %v3291 = vpop.f32.mrb[0].mxu0
        %v3292 = vadd.f32 %v3204, %v3291
        %v3293 = vpop.f32.mrb[0].mxu0
        %3294 = vmatprep.mubr.bf16.mxu0 0
        %3295 = vmatmul.mubr.bf16.gmra.mrb[0].mxu0 %v3182
        %v3296 = vpop.f32.mrb[0].mxu0
        %v3297 = vadd.f32 %v3204, %v3296
        %v3298 = vpop.f32.mrb[0].mxu0
        %v3299 = vpop.f32.mrb[0].mxu0
        %v3300 = vadd.f32 %v3204, %v3299
        %v3301 = vpop.f32.mrb[0].mxu0
        %3302 = vdwg.mxu0
        %v3303 = vadd.f32 %v2987, %v3289
        %v3304 = vadd.f32 %v2988, %v3292
        %v3305 = vadd.f32 %v2989, %v3297
        %v3306 = vadd.f32 %v2990, %v3300
        %3307 = vst.msk [vmem:[#allocation23] sm:$0xff] %vm889, %v3303
        %3308 = vst.msk [vmem:[#allocation23 + $0x8] sm:$0xff] %vm889, %v3304
        %3309 = vst.msk [vmem:[#allocation23 + $0x10] sm:$0xff] %vm889, %v3305
        %3310 = vst.msk [vmem:[#allocation23 + $0x18] sm:$0xff] %vm889, %v3306
        // Predicated region
        $region129: #{tpu_custom_call.1} parent=71 // pred_check
          %p3311 = pneg %p412
        $region130: #{tpu_custom_call.1} parent=71 // pred_check_branch
          %3313 = sbr.rel (%p3311) target = $region132
        $region131: #{tpu_custom_call.1} parent=71 // pred_region
          %s3314 = smul.u32 4, %s48
          %s3316 = ssub.s32 512, 512
          %3317 = vsyncadd [#allocation4], %s3316
          %s3318 = smul.addr %s3314, 128
          %s3319 = scalar_lea.hbm %s13, %s3318
          %s3320 = sshll.u32 [#allocation23], 4
          %s3321 = int_to_ptr.vmem [resolvable:$true] %s3320
          %3326 = dma.vmem_to_hbm [thread:$0]  %s3321, 512, %s3319, [#allocation4], 128, 128, 8
        $region132: #{tpu_custom_call.1} parent=71 // pred_fallthru
          _
        // Predicated region
        $region133: #{tpu_custom_call.1} parent=71 // pred_check
          %p3327 = pneg %p412
        $region134: #{tpu_custom_call.1} parent=71 // pred_check_branch
          %3329 = sbr.rel (%p3327) target = $region136
        $region135: #{tpu_custom_call.1} parent=71 // pred_region
          %3330 = dma.done [#allocation4], 512
        $region136: #{tpu_custom_call.1} parent=71 // pred_fallthru
          _
      $region72: #{tpu_custom_call.1} parent=5 // pred_fallthru
        _
      %p3331 = scmp.le.s32.totalorder 2, %s39
      // Predicated region
      $region137: #{tpu_custom_call.1} parent=5 // pred_check
        %p3332 = pneg %p3331
      $region138: #{tpu_custom_call.1} parent=5 // pred_check_branch
        %3334 = sbr.rel (%p3332) target = $region140
      $region139: #{tpu_custom_call.1} parent=5 // pred_region
        %s3335 = ssub.s32 %s39, 2
      $region140: #{tpu_custom_call.1} parent=5 // pred_fallthru
        _
    $region6: #{tpu_custom_call.1} parent=1 // loop_footer
      %s43 = sadd.s32 1, %s39
    $region7: #{tpu_custom_call.1} parent=1 // loop_footer_branch
      %38 = sbr.rel target = $region3
    $region8: #{tpu_custom_call.1} parent=1 // loop_exit
      _
    %3336 = vsyncpa [#allocation3], 1
    %s3337 = scalar_lea.sflag [#allocation3], 1
    %3338 = vsyncpa %s3337, 1
    %3339 = vsyncpa [#allocation6], 1
    %s3340 = scalar_lea.sflag [#allocation6], 1
    %3341 = vsyncpa %s3340, 1
    %3342 = vsyncpa [#allocation9], 1
    %s3343 = scalar_lea.sflag [#allocation9], 1
    %3344 = vsyncpa %s3343, 1
    %3345 = vsyncpa [#allocation12], 1
    %s3346 = scalar_lea.sflag [#allocation12], 1
    %3347 = vsyncpa %s3346, 1
    %3348 = vsyncpa [#allocation15], 1
    %s3349 = scalar_lea.sflag [#allocation15], 1
    %3350 = vsyncpa %s3349, 1
    %3351 = vsyncpa [#allocation18], 1
    %s3352 = scalar_lea.sflag [#allocation18], 1
    %3353 = vsyncpa %s3352, 1
    %3354 = vsyncpa [#allocation21], 1
    %s3355 = scalar_lea.sflag [#allocation21], 1
    %3356 = vsyncpa %s3355, 1
    %3357 = vsyncpa [#allocation4], 1
    %s3358 = scalar_lea.sflag [#allocation4], 1
    %3359 = vsyncpa %s3358, 1

</llo_original>
